<compile_context>
chip_gen: v7x
topology: tpu7x:2x2x1
jax: 0.10.0
libtpu: 0.0.40
codegen_flags: <defaults>
</compile_context>

<pallas_src>
import jax
import jax.numpy as jnp
from jax.experimental import pallas as pl
from jax.experimental.pallas import tpu as pltpu

# ---------------------------------------------------------------------------
# Model configuration (small-scale, consistent with the module's forward)
# ---------------------------------------------------------------------------
NUM_CLASSES = 10                    # "imagenette"
IN_C, IN_H, IN_W = 4, 16, 16
OH = OW = (IN_H - 3) // 2 + 1       # stem 3x3, stride 2, valid -> 7
C_STEM = 16
C_B1, C_B5_1, C_B5 = 16, 12, 16
C_B3_1, C_B3, C_POOL = 16, 24, 8
C_OUT = C_B1 + C_B5 + C_B3 + C_POOL     # 64, concat order [b1 | b5 | b3 | pool]
NCP = 128                               # lane-padded number of classes

L_X = IN_W * IN_C                   # 64
L_H = OW * C_STEM                   # 112
L_B1 = OW * C_B1                    # 112
L_B5IN = OW * C_B5_1                # 84
L_B3IN = OW * C_B3_1                # 112
L_BP = OW * C_POOL                  # 56
L_B5 = OW * C_B5                    # 112
L_B3 = OW * C_B3                    # 168
COL1 = (0, 128, 256, 384)           # lane-aligned column groups of fused 1x1
W1_COLS = 512


# ---------------------------------------------------------------------------
# The single fused Inception kernel (one grid step = one image)
# ---------------------------------------------------------------------------
def _inception_kernel(x_ref, stem_w_ref, stem_sh_ref, w1_ref, sh1_ref,
                      w5_ref, sh5_ref, w3a_ref, sh3a_ref, w3b_ref, sh3b_ref,
                      shp_ref, g1_ref, g5_ref, g3_ref, gp_ref, fcb_ref,
                      o_ref, pad5_ref, pad3a_ref, pad3b_ref, padp_ref):
    f32 = jnp.float32
    bf16 = jnp.bfloat16

    # ---- stem BasicConv2d: 3x3 stride-2 valid conv as 3 row-tap matmuls ----
    x_even = x_ref[0]                               # input rows 0,2,...,14
    x_odd = x_ref[1]                                # input rows 1,3,...,15
    h = jnp.dot(x_even[0:OH, :], stem_w_ref[0], preferred_element_type=f32)
    h = h + jnp.dot(x_odd[0:OH, :], stem_w_ref[1], preferred_element_type=f32)
    h = h + jnp.dot(x_even[1:OH + 1, :], stem_w_ref[2],
                    preferred_element_type=f32)
    h = jnp.maximum(h + stem_sh_ref[...], 0.0)      # (7, 7*16) f32
    h_bf = h.astype(bf16)

    # ---- InceptionA: all four branch 1x1's fused into one matmul ----
    z = jnp.dot(h_bf, w1_ref[...], preferred_element_type=f32) + sh1_ref[...]
    b1 = jnp.maximum(z[:, COL1[0]:COL1[0] + L_B1], 0.0)        # branch1x1
    b5in = jnp.maximum(z[:, COL1[1]:COL1[1] + L_B5IN], 0.0)    # branch5x5 in
    b3in = jnp.maximum(z[:, COL1[2]:COL1[2] + L_B3IN], 0.0)    # branch3x3dbl in
    bpre = z[:, COL1[3]:COL1[3] + L_BP]   # pool branch, scale only (shift later)

    # ---- branch5x5: 5x5 conv, pad 2 (zero pad via scratch, 5 row taps) ----
    pad5_ref[...] = jnp.zeros_like(pad5_ref)
    pad5_ref[2:2 + OH, 2 * C_B5_1:2 * C_B5_1 + L_B5IN] = b5in
    a5 = jnp.dot(pad5_ref[0:OH, :].astype(bf16), w5_ref[0],
                 preferred_element_type=f32)
    for di in range(1, 5):
        a5 = a5 + jnp.dot(pad5_ref[di:di + OH, :].astype(bf16), w5_ref[di],
                          preferred_element_type=f32)
    b5 = jnp.maximum(a5 + sh5_ref[...], 0.0)                   # (7, 7*16)

    # ---- branch3x3dbl: two 3x3 convs, pad 1 each ----
    pad3a_ref[...] = jnp.zeros_like(pad3a_ref)
    pad3a_ref[1:1 + OH, C_B3_1:C_B3_1 + L_B3IN] = b3in
    a3 = jnp.dot(pad3a_ref[0:OH, :].astype(bf16), w3a_ref[0],
                 preferred_element_type=f32)
    for di in range(1, 3):
        a3 = a3 + jnp.dot(pad3a_ref[di:di + OH, :].astype(bf16), w3a_ref[di],
                          preferred_element_type=f32)
    b3m = jnp.maximum(a3 + sh3a_ref[...], 0.0)                 # (7, 7*24)

    pad3b_ref[...] = jnp.zeros_like(pad3b_ref)
    pad3b_ref[1:1 + OH, C_B3:C_B3 + L_B3] = b3m
    a3 = jnp.dot(pad3b_ref[0:OH, :].astype(bf16), w3b_ref[0],
                 preferred_element_type=f32)
    for di in range(1, 3):
        a3 = a3 + jnp.dot(pad3b_ref[di:di + OH, :].astype(bf16), w3b_ref[di],
                          preferred_element_type=f32)
    b3 = jnp.maximum(a3 + sh3b_ref[...], 0.0)                  # (7, 7*24)

    # ---- pool branch: avg_pool3x3(s1, p1, count_include_pad) applied AFTER
    #      the scale-only 1x1 (exact by linearity), then BN shift + ReLU ----
    padp_ref[...] = jnp.zeros_like(padp_ref)
    padp_ref[1:1 + OH, C_POOL:C_POOL + L_BP] = bpre
    ap = jnp.zeros((OH, L_BP), f32)
    for di in range(3):
        for dj in range(3):
            ap = ap + padp_ref[di:di + OH, dj * C_POOL:dj * C_POOL + L_BP]
    bp = jnp.maximum(ap * (1.0 / 9.0) + shp_ref[...], 0.0)     # (7, 7*8)

    # ---- global average pool folded into fc (per concat channel group) ----
    acc = jnp.dot(b1, g1_ref[...], preferred_element_type=f32)
    acc = acc + jnp.dot(b5, g5_ref[...], preferred_element_type=f32)
    acc = acc + jnp.dot(b3, g3_ref[...], preferred_element_type=f32)
    acc = acc + jnp.dot(bp, gp_ref[...], preferred_element_type=f32)
    logits = jnp.sum(acc, axis=0, keepdims=True) + fcb_ref[...]    # (1, 128)
    o_ref[...] = jnp.broadcast_to(logits, o_ref.shape)


# ---------------------------------------------------------------------------
# Parameter prep (runs ONCE): BN fold, band-matrix packing, bf16 cast
# ---------------------------------------------------------------------------
def _fold_bn(p, eps=1e-3):
    w, gamma, beta, mean, var = p
    inv = gamma / jnp.sqrt(var + eps)
    return w * inv[:, None, None, None], beta - mean * inv


def _band_weight(wf, di, w_in, ow, stride):
    """Row-tap band matrix (w_in*Cin, ow*Cout): full horizontal convolution
    (incl. stride) of vertical tap `di`, for the (row, w*c) layout."""
    cout, cin, _, kw_n = wf.shape
    band = jnp.zeros((w_in, cin, ow, cout), jnp.float32)
    ow_idx = jnp.arange(ow)
    for kw in range(kw_n):
        blk = jnp.broadcast_to(wf[:, :, di, kw].T, (ow, cin, cout))
        band = band.at[stride * ow_idx + kw, :, ow_idx, :].set(blk)
    return band.reshape(w_in * cin, ow * cout)


def _tile_shift(shift, ow):
    return jnp.tile(shift, ow)[None, :]


def prepare_params(params):
    prep = {}

    # stem (3x3, stride 2, valid)
    wf, sh = _fold_bn(params["stem"])
    prep["stem_w"] = jnp.stack(
        [_band_weight(wf, di, IN_W, OW, 2) for di in range(3)]
    ).astype(jnp.bfloat16)
    prep["stem_sh"] = _tile_shift(sh, OW)

    # fused 1x1's: b1x1 | b5x5_1 | b3x3dbl_1 | bpool (scale only), lane-aligned
    w1 = jnp.zeros((L_H, W1_COLS), jnp.float32)
    sh1 = jnp.zeros((1, W1_COLS), jnp.float32)
    fused = [("b1x1", COL1[0], True), ("b5x5_1", COL1[1], True),
             ("b3x3dbl_1", COL1[2], True), ("bpool", COL1[3], False)]
    for name, off, with_shift in fused:
        wf, sh = _fold_bn(params[name])
        band = _band_weight(wf, 0, OW, OW, 1)
        w1 = w1.at[:, off:off + band.shape[1]].set(band)
        if with_shift:
            sh1 = sh1.at[:, off:off + band.shape[1]].set(_tile_shift(sh, OW))
        else:
            prep["shp"] = _tile_shift(sh, OW)       # applied after avg-pool
    prep["w1"] = w1.astype(jnp.bfloat16)
    prep["sh1"] = sh1

    # branch5x5 second conv (5x5, pad 2)
    wf, sh = _fold_bn(params["b5x5_2"])
    prep["w5"] = jnp.stack(
        [_band_weight(wf, di, OW + 4, OW, 1) for di in range(5)]
    ).astype(jnp.bfloat16)
    prep["sh5"] = _tile_shift(sh, OW)

    # branch3x3dbl second / third convs (3x3, pad 1)
    wf, sh = _fold_bn(params["b3x3dbl_2"])
    prep["w3a"] = jnp.stack(
        [_band_weight(wf, di, OW + 2, OW, 1) for di in range(3)]
    ).astype(jnp.bfloat16)
    prep["sh3a"] = _tile_shift(sh, OW)
    wf, sh = _fold_bn(params["b3x3dbl_3"])
    prep["w3b"] = jnp.stack(
        [_band_weight(wf, di, OW + 2, OW, 1) for di in range(3)]
    ).astype(jnp.bfloat16)
    prep["sh3b"] = _tile_shift(sh, OW)

    # global-average-pool folded into the fc weight, per concat channel group
    fc_w, fc_b = params["fc_w"], params["fc_b"]

    def gmat(c0, c1):
        g = jnp.tile(fc_w[c0:c1, :], (OW, 1)) / float(OH * OW)
        return jnp.pad(g, ((0, 0), (0, NCP - NUM_CLASSES)))

    prep["g1"] = gmat(0, C_B1)
    prep["g5"] = gmat(C_B1, C_B1 + C_B5)
    prep["g3"] = gmat(C_B1 + C_B5, C_B1 + C_B5 + C_B3)
    prep["gp"] = gmat(C_B1 + C_B5 + C_B3, C_OUT)
    prep["fcb"] = jnp.pad(fc_b, (0, NCP - NUM_CLASSES))[None, :]
    return prep


# ---------------------------------------------------------------------------
# Forward pass: one pallas_call, gridded over batch
# ---------------------------------------------------------------------------
def inception_forward(prep, x_nchw):
    n, c, h, w = x_nchw.shape
    assert (c, h, w) == (IN_C, IN_H, IN_W), x_nchw.shape

    # NCHW -> NHWC -> (N, even/odd rows, H//2, W*C): the stride-2 stem then
    # only needs contiguous row slices inside the kernel (no strided loads).
    x = x_nchw.transpose(0, 2, 3, 1)
    x = x.reshape(n, IN_H // 2, 2, L_X).transpose(0, 2, 1, 3)
    x = x.astype(jnp.bfloat16)

    weights = (prep["stem_w"], prep["stem_sh"], prep["w1"], prep["sh1"],
               prep["w5"], prep["sh5"], prep["w3a"], prep["sh3a"],
               prep["w3b"], prep["sh3b"], prep["shp"],
               prep["g1"], prep["g5"], prep["g3"], prep["gp"], prep["fcb"])

    def full_spec(shape):
        zeros = (0,) * len(shape)
        return pl.BlockSpec(shape, lambda b: zeros)

    in_specs = [pl.BlockSpec((None, 2, IN_H // 2, L_X),
                             lambda b: (b, 0, 0, 0))]
    in_specs += [full_spec(wt.shape) for wt in weights]

    out = pl.pallas_call(
        _inception_kernel,
        out_shape=jax.ShapeDtypeStruct((n, 8, NCP), jnp.float32),
        grid=(n,),
        in_specs=in_specs,
        out_specs=pl.BlockSpec((None, 8, NCP), lambda b: (b, 0, 0)),
        scratch_shapes=[
            pltpu.VMEM((OW + 4, (OW + 4) * C_B5_1), jnp.float32),  # 5x5 pad
            pltpu.VMEM((OW + 2, (OW + 2) * C_B3_1), jnp.float32),  # 3x3a pad
            pltpu.VMEM((OW + 2, (OW + 2) * C_B3), jnp.float32),    # 3x3b pad
            pltpu.VMEM((OW + 2, (OW + 2) * C_POOL), jnp.float32),  # pool pad
        ],
        compiler_params=pltpu.CompilerParams(
            dimension_semantics=("parallel",)),
    )(x, *weights)
    return out[:, 0, :NUM_CLASSES]


# ---------------------------------------------------------------------------
# Parameter construction (deterministic, mirrors the PyTorch layer shapes)
# ---------------------------------------------------------------------------
def _make_basic_conv(key, cin, cout, kh, kw):
    k1, k2, k3, k4, k5 = jax.random.split(key, 5)
    w = jax.random.normal(k1, (cout, cin, kh, kw), jnp.float32) * 0.1
    gamma = jax.random.uniform(k2, (cout,), jnp.float32, 0.5, 1.5)
    beta = jax.random.normal(k3, (cout,), jnp.float32) * 0.1
    mean = jax.random.normal(k4, (cout,), jnp.float32) * 0.1
    var = jax.random.uniform(k5, (cout,), jnp.float32, 0.5, 1.5)
    return (w, gamma, beta, mean, var)


def make_params(key, cin=IN_C, num_classes=NUM_CLASSES):
    ks = jax.random.split(key, 10)
    params = {}
    params["stem"] = _make_basic_conv(ks[0], cin, C_STEM, 3, 3)
    params["b1x1"] = _make_basic_conv(ks[1], C_STEM, C_B1, 1, 1)
    params["b5x5_1"] = _make_basic_conv(ks[2], C_STEM, C_B5_1, 1, 1)
    params["b5x5_2"] = _make_basic_conv(ks[3], C_B5_1, C_B5, 5, 5)
    params["b3x3dbl_1"] = _make_basic_conv(ks[4], C_STEM, C_B3_1, 1, 1)
    params["b3x3dbl_2"] = _make_basic_conv(ks[5], C_B3_1, C_B3, 3, 3)
    params["b3x3dbl_3"] = _make_basic_conv(ks[6], C_B3, C_B3, 3, 3)
    params["bpool"] = _make_basic_conv(ks[7], C_STEM, C_POOL, 1, 1)
    params["fc_w"] = jax.random.normal(ks[8], (C_OUT, num_classes),
                                       jnp.float32) * 0.1
    params["fc_b"] = jax.random.normal(ks[9], (num_classes,), jnp.float32) * 0.1
    return params


# ---------------------------------------------------------------------------
# Pure-JAX float32 reference (for parity checking only)
# ---------------------------------------------------------------------------
def _conv_bn_relu_ref(x_nhwc, p, stride, padding, eps=1e-3):
    wf, shift = _fold_bn(p, eps)
    y = jax.lax.conv_general_dilated(
        x_nhwc, wf.transpose(2, 3, 1, 0), (stride, stride),
        [(padding, padding), (padding, padding)],
        dimension_numbers=("NHWC", "HWIO", "NHWC"))
    return jnp.maximum(y + shift, 0.0)


def _avgpool3_ref(x_nhwc):
    s = jax.lax.reduce_window(x_nhwc, 0.0, jax.lax.add, (1, 3, 3, 1),
                              (1, 1, 1, 1),
                              [(0, 0), (1, 1), (1, 1), (0, 0)])
    return s / 9.0


def inception_reference(params, x_nchw):
    x = x_nchw.transpose(0, 2, 3, 1)
    h = _conv_bn_relu_ref(x, params["stem"], 2, 0)
    b1 = _conv_bn_relu_ref(h, params["b1x1"], 1, 0)
    b5 = _conv_bn_relu_ref(h, params["b5x5_1"], 1, 0)
    b5 = _conv_bn_relu_ref(b5, params["b5x5_2"], 1, 2)
    b3 = _conv_bn_relu_ref(h, params["b3x3dbl_1"], 1, 0)
    b3 = _conv_bn_relu_ref(b3, params["b3x3dbl_2"], 1, 1)
    b3 = _conv_bn_relu_ref(b3, params["b3x3dbl_3"], 1, 1)
    bp = _conv_bn_relu_ref(_avgpool3_ref(h), params["bpool"], 1, 0)
    feat = jnp.concatenate([b1, b5, b3, bp], axis=3)
    pooled = feat.mean(axis=(1, 2))
    return pooled @ params["fc_w"] + params["fc_b"]


# ---------------------------------------------------------------------------
# Main
# ---------------------------------------------------------------------------
if __name__ == "__main__":
    key = jax.random.PRNGKey(0)
    k_param, k_input = jax.random.split(key)

    N = 2
    x = jax.random.normal(k_input, (N, IN_C, IN_H, IN_W), jnp.float32)  # NCHW

    params = make_params(k_param)
    prep = prepare_params(params)        # BN fold / band pack / bf16 cast: once

    fwd = jax.jit(inception_forward)
    logits = fwd(prep, x)
    jax.block_until_ready(logits)

    assert logits.shape == (N, NUM_CLASSES), logits.shape
    assert bool(jnp.all(jnp.isfinite(logits)))

    # parity vs. pure-JAX f32 reference (bf16 MXU path -> loose tolerance)
    ref = jax.jit(inception_reference)(params, x)
    max_err = float(jnp.max(jnp.abs(logits - ref)))
    assert max_err < 0.1, f"max |err| vs reference = {max_err}"

    print("KERNEL_OK")
</pallas_src>

<mosaic_0001>
module attributes {stable_mosaic.version = 11 : i64} {
  func.func @_inception_kernel(%arg0: i32, %arg1: memref<1x2x8x64xbf16, #tpu.memory_space<vmem>>, %arg2: memref<3x64x112xbf16, #tpu.memory_space<vmem>>, %arg3: memref<1x112xf32, #tpu.memory_space<vmem>>, %arg4: memref<112x512xbf16, #tpu.memory_space<vmem>>, %arg5: memref<1x512xf32, #tpu.memory_space<vmem>>, %arg6: memref<5x132x112xbf16, #tpu.memory_space<vmem>>, %arg7: memref<1x112xf32, #tpu.memory_space<vmem>>, %arg8: memref<3x144x168xbf16, #tpu.memory_space<vmem>>, %arg9: memref<1x168xf32, #tpu.memory_space<vmem>>, %arg10: memref<3x216x168xbf16, #tpu.memory_space<vmem>>, %arg11: memref<1x168xf32, #tpu.memory_space<vmem>>, %arg12: memref<1x56xf32, #tpu.memory_space<vmem>>, %arg13: memref<112x128xf32, #tpu.memory_space<vmem>>, %arg14: memref<112x128xf32, #tpu.memory_space<vmem>>, %arg15: memref<168x128xf32, #tpu.memory_space<vmem>>, %arg16: memref<56x128xf32, #tpu.memory_space<vmem>>, %arg17: memref<1x128xf32, #tpu.memory_space<vmem>>, %arg18: memref<1x8x128xf32, #tpu.memory_space<vmem>>, %arg19: memref<11x132xf32, #tpu.memory_space<vmem>>, %arg20: memref<9x144xf32, #tpu.memory_space<vmem>>, %arg21: memref<9x216xf32, #tpu.memory_space<vmem>>, %arg22: memref<9x72xf32, #tpu.memory_space<vmem>>) attributes {dimension_semantics = [#tpu.dimension_semantics<parallel>], iteration_bounds = array<i64: 2>, scalar_prefetch = 0 : i64, scratch_operands = 4 : i64, tpu.core_type = #tpu.core_type<tc>, window_params = [{transform_indices = @transform_0, window_bounds = array<i64: 1, 2, 8, 64>}, {pipeline_mode = #tpu.pipeline_mode<synchronous>, transform_indices = @transform_1, window_bounds = array<i64: 3, 64, 112>}, {pipeline_mode = #tpu.pipeline_mode<synchronous>, transform_indices = @transform_2, window_bounds = array<i64: 1, 112>}, {pipeline_mode = #tpu.pipeline_mode<synchronous>, transform_indices = @transform_3, window_bounds = array<i64: 112, 512>}, {pipeline_mode = #tpu.pipeline_mode<synchronous>, transform_indices = @transform_4, window_bounds = array<i64: 1, 512>}, {pipeline_mode = #tpu.pipeline_mode<synchronous>, transform_indices = @transform_5, window_bounds = array<i64: 5, 132, 112>}, {pipeline_mode = #tpu.pipeline_mode<synchronous>, transform_indices = @transform_6, window_bounds = array<i64: 1, 112>}, {pipeline_mode = #tpu.pipeline_mode<synchronous>, transform_indices = @transform_7, window_bounds = array<i64: 3, 144, 168>}, {pipeline_mode = #tpu.pipeline_mode<synchronous>, transform_indices = @transform_8, window_bounds = array<i64: 1, 168>}, {pipeline_mode = #tpu.pipeline_mode<synchronous>, transform_indices = @transform_9, window_bounds = array<i64: 3, 216, 168>}, {pipeline_mode = #tpu.pipeline_mode<synchronous>, transform_indices = @transform_10, window_bounds = array<i64: 1, 168>}, {pipeline_mode = #tpu.pipeline_mode<synchronous>, transform_indices = @transform_11, window_bounds = array<i64: 1, 56>}, {pipeline_mode = #tpu.pipeline_mode<synchronous>, transform_indices = @transform_12, window_bounds = array<i64: 112, 128>}, {pipeline_mode = #tpu.pipeline_mode<synchronous>, transform_indices = @transform_13, window_bounds = array<i64: 112, 128>}, {pipeline_mode = #tpu.pipeline_mode<synchronous>, transform_indices = @transform_14, window_bounds = array<i64: 168, 128>}, {pipeline_mode = #tpu.pipeline_mode<synchronous>, transform_indices = @transform_15, window_bounds = array<i64: 56, 128>}, {pipeline_mode = #tpu.pipeline_mode<synchronous>, transform_indices = @transform_16, window_bounds = array<i64: 1, 128>}, {transform_indices = @transform_17, window_bounds = array<i64: 1, 8, 128>}]} {
    %c0 = arith.constant 0 : index
    %c0_0 = arith.constant 0 : index
    %c0_1 = arith.constant 0 : index
    %c0_2 = arith.constant 0 : index
    %0 = vector.load %arg1[%c0, %c0_0, %c0_1, %c0_2] : memref<1x2x8x64xbf16, #tpu.memory_space<vmem>>, vector<1x1x8x64xbf16>
    %1 = vector.shape_cast %0 : vector<1x1x8x64xbf16> to vector<8x64xbf16>
    %c0_3 = arith.constant 0 : index
    %c1 = arith.constant 1 : index
    %c0_4 = arith.constant 0 : index
    %c0_5 = arith.constant 0 : index
    %2 = vector.load %arg1[%c0_3, %c1, %c0_4, %c0_5] : memref<1x2x8x64xbf16, #tpu.memory_space<vmem>>, vector<1x1x8x64xbf16>
    %3 = vector.shape_cast %2 : vector<1x1x8x64xbf16> to vector<8x64xbf16>
    %4 = vector.extract_strided_slice %1 {offsets = [0, 0], sizes = [7, 64], strides = [1, 1]} : vector<8x64xbf16> to vector<7x64xbf16>
    %c0_6 = arith.constant 0 : index
    %c0_7 = arith.constant 0 : index
    %c0_8 = arith.constant 0 : index
    %5 = vector.load %arg2[%c0_6, %c0_7, %c0_8] : memref<3x64x112xbf16, #tpu.memory_space<vmem>>, vector<1x64x112xbf16>
    %6 = vector.shape_cast %5 : vector<1x64x112xbf16> to vector<64x112xbf16>
    %cst = arith.constant dense<0.000000e+00> : vector<7x112xf32>
    %7 = tpu.matmul %4, %6, %cst {dimension_numbers = #tpu.dot_dimension_numbers<[1], [0], [0], [1], [0, 0, 1, 1], [], []>} : vector<7x64xbf16>, vector<64x112xbf16>, vector<7x112xf32> -> vector<7x112xf32>
    %8 = vector.extract_strided_slice %3 {offsets = [0, 0], sizes = [7, 64], strides = [1, 1]} : vector<8x64xbf16> to vector<7x64xbf16>
    %c1_9 = arith.constant 1 : index
    %c0_10 = arith.constant 0 : index
    %c0_11 = arith.constant 0 : index
    %9 = vector.load %arg2[%c1_9, %c0_10, %c0_11] : memref<3x64x112xbf16, #tpu.memory_space<vmem>>, vector<1x64x112xbf16>
    %10 = vector.shape_cast %9 : vector<1x64x112xbf16> to vector<64x112xbf16>
    %cst_12 = arith.constant dense<0.000000e+00> : vector<7x112xf32>
    %11 = tpu.matmul %8, %10, %cst_12 {dimension_numbers = #tpu.dot_dimension_numbers<[1], [0], [0], [1], [0, 0, 1, 1], [], []>} : vector<7x64xbf16>, vector<64x112xbf16>, vector<7x112xf32> -> vector<7x112xf32>
    %12 = arith.addf %7, %11 : vector<7x112xf32>
    %13 = vector.extract_strided_slice %1 {offsets = [1, 0], sizes = [7, 64], strides = [1, 1]} : vector<8x64xbf16> to vector<7x64xbf16>
    %c2 = arith.constant 2 : index
    %c0_13 = arith.constant 0 : index
    %c0_14 = arith.constant 0 : index
    %14 = vector.load %arg2[%c2, %c0_13, %c0_14] : memref<3x64x112xbf16, #tpu.memory_space<vmem>>, vector<1x64x112xbf16>
    %15 = vector.shape_cast %14 : vector<1x64x112xbf16> to vector<64x112xbf16>
    %cst_15 = arith.constant dense<0.000000e+00> : vector<7x112xf32>
    %16 = tpu.matmul %13, %15, %cst_15 {dimension_numbers = #tpu.dot_dimension_numbers<[1], [0], [0], [1], [0, 0, 1, 1], [], []>} : vector<7x64xbf16>, vector<64x112xbf16>, vector<7x112xf32> -> vector<7x112xf32>
    %17 = arith.addf %12, %16 : vector<7x112xf32>
    %c0_16 = arith.constant 0 : index
    %c0_17 = arith.constant 0 : index
    %18 = vector.load %arg3[%c0_16, %c0_17] : memref<1x112xf32, #tpu.memory_space<vmem>>, vector<1x112xf32>
    %19 = vector.broadcast %18 : vector<1x112xf32> to vector<7x112xf32>
    %20 = arith.addf %17, %19 : vector<7x112xf32>
    %cst_18 = arith.constant 0.000000e+00 : f32
    %21 = vector.broadcast %cst_18 : f32 to vector<7x112xf32>
    %22 = arith.maximumf %20, %21 : vector<7x112xf32>
    %23 = arith.truncf %22 : vector<7x112xf32> to vector<7x112xbf16>
    %c0_19 = arith.constant 0 : index
    %c0_20 = arith.constant 0 : index
    %24 = vector.load %arg4[%c0_19, %c0_20] : memref<112x512xbf16, #tpu.memory_space<vmem>>, vector<112x512xbf16>
    %cst_21 = arith.constant dense<0.000000e+00> : vector<7x512xf32>
    %25 = tpu.matmul %23, %24, %cst_21 {dimension_numbers = #tpu.dot_dimension_numbers<[1], [0], [0], [1], [0, 0, 1, 1], [], []>} : vector<7x112xbf16>, vector<112x512xbf16>, vector<7x512xf32> -> vector<7x512xf32>
    %c0_22 = arith.constant 0 : index
    %c0_23 = arith.constant 0 : index
    %26 = vector.load %arg5[%c0_22, %c0_23] : memref<1x512xf32, #tpu.memory_space<vmem>>, vector<1x512xf32>
    %27 = vector.broadcast %26 : vector<1x512xf32> to vector<7x512xf32>
    %28 = arith.addf %25, %27 : vector<7x512xf32>
    %29 = vector.extract_strided_slice %28 {offsets = [0, 0], sizes = [7, 112], strides = [1, 1]} : vector<7x512xf32> to vector<7x112xf32>
    %cst_24 = arith.constant 0.000000e+00 : f32
    %30 = vector.broadcast %cst_24 : f32 to vector<7x112xf32>
    %31 = arith.maximumf %29, %30 : vector<7x112xf32>
    %32 = vector.extract_strided_slice %28 {offsets = [0, 128], sizes = [7, 84], strides = [1, 1]} : vector<7x512xf32> to vector<7x84xf32>
    %cst_25 = arith.constant 0.000000e+00 : f32
    %33 = vector.broadcast %cst_25 : f32 to vector<7x84xf32>
    %34 = arith.maximumf %32, %33 : vector<7x84xf32>
    %35 = vector.extract_strided_slice %28 {offsets = [0, 256], sizes = [7, 112], strides = [1, 1]} : vector<7x512xf32> to vector<7x112xf32>
    %cst_26 = arith.constant 0.000000e+00 : f32
    %36 = vector.broadcast %cst_26 : f32 to vector<7x112xf32>
    %37 = arith.maximumf %35, %36 : vector<7x112xf32>
    %38 = vector.extract_strided_slice %28 {offsets = [0, 384], sizes = [7, 56], strides = [1, 1]} : vector<7x512xf32> to vector<7x56xf32>
    %cst_27 = arith.constant 0.000000e+00 : f32
    %39 = vector.broadcast %cst_27 : f32 to vector<11x132xf32>
    %c0_28 = arith.constant 0 : index
    %c0_29 = arith.constant 0 : index
    %40 = vector.load %arg19[%c0_28, %c0_29] : memref<11x132xf32, #tpu.memory_space<vmem>>, vector<11x132xf32>
    tpu.vector_store %arg19[%c0_28, %c0_29], %39 {strides = array<i32>} : memref<11x132xf32, #tpu.memory_space<vmem>>, vector<11x132xf32>,
    %c2_30 = arith.constant 2 : index
    %c24 = arith.constant 24 : index
    %41 = vector.load %arg19[%c2_30, %c24] : memref<11x132xf32, #tpu.memory_space<vmem>>, vector<7x84xf32>
    tpu.vector_store %arg19[%c2_30, %c24], %34 {strides = array<i32>} : memref<11x132xf32, #tpu.memory_space<vmem>>, vector<7x84xf32>,
    %c0_31 = arith.constant 0 : index
    %c0_32 = arith.constant 0 : index
    %42 = vector.load %arg19[%c0_31, %c0_32] : memref<11x132xf32, #tpu.memory_space<vmem>>, vector<7x132xf32>
    %43 = arith.truncf %42 : vector<7x132xf32> to vector<7x132xbf16>
    %c0_33 = arith.constant 0 : index
    %c0_34 = arith.constant 0 : index
    %c0_35 = arith.constant 0 : index
    %44 = vector.load %arg6[%c0_33, %c0_34, %c0_35] : memref<5x132x112xbf16, #tpu.memory_space<vmem>>, vector<1x132x112xbf16>
    %45 = vector.shape_cast %44 : vector<1x132x112xbf16> to vector<132x112xbf16>
    %cst_36 = arith.constant dense<0.000000e+00> : vector<7x112xf32>
    %46 = tpu.matmul %43, %45, %cst_36 {dimension_numbers = #tpu.dot_dimension_numbers<[1], [0], [0], [1], [0, 0, 1, 1], [], []>} : vector<7x132xbf16>, vector<132x112xbf16>, vector<7x112xf32> -> vector<7x112xf32>
    %c1_37 = arith.constant 1 : index
    %c0_38 = arith.constant 0 : index
    %47 = vector.load %arg19[%c1_37, %c0_38] : memref<11x132xf32, #tpu.memory_space<vmem>>, vector<7x132xf32>
    %48 = arith.truncf %47 : vector<7x132xf32> to vector<7x132xbf16>
    %c1_39 = arith.constant 1 : index
    %c0_40 = arith.constant 0 : index
    %c0_41 = arith.constant 0 : index
    %49 = vector.load %arg6[%c1_39, %c0_40, %c0_41] : memref<5x132x112xbf16, #tpu.memory_space<vmem>>, vector<1x132x112xbf16>
    %50 = vector.shape_cast %49 : vector<1x132x112xbf16> to vector<132x112xbf16>
    %cst_42 = arith.constant dense<0.000000e+00> : vector<7x112xf32>
    %51 = tpu.matmul %48, %50, %cst_42 {dimension_numbers = #tpu.dot_dimension_numbers<[1], [0], [0], [1], [0, 0, 1, 1], [], []>} : vector<7x132xbf16>, vector<132x112xbf16>, vector<7x112xf32> -> vector<7x112xf32>
    %52 = arith.addf %46, %51 : vector<7x112xf32>
    %c2_43 = arith.constant 2 : index
    %c0_44 = arith.constant 0 : index
    %53 = vector.load %arg19[%c2_43, %c0_44] : memref<11x132xf32, #tpu.memory_space<vmem>>, vector<7x132xf32>
    %54 = arith.truncf %53 : vector<7x132xf32> to vector<7x132xbf16>
    %c2_45 = arith.constant 2 : index
    %c0_46 = arith.constant 0 : index
    %c0_47 = arith.constant 0 : index
    %55 = vector.load %arg6[%c2_45, %c0_46, %c0_47] : memref<5x132x112xbf16, #tpu.memory_space<vmem>>, vector<1x132x112xbf16>
    %56 = vector.shape_cast %55 : vector<1x132x112xbf16> to vector<132x112xbf16>
    %cst_48 = arith.constant dense<0.000000e+00> : vector<7x112xf32>
    %57 = tpu.matmul %54, %56, %cst_48 {dimension_numbers = #tpu.dot_dimension_numbers<[1], [0], [0], [1], [0, 0, 1, 1], [], []>} : vector<7x132xbf16>, vector<132x112xbf16>, vector<7x112xf32> -> vector<7x112xf32>
    %58 = arith.addf %52, %57 : vector<7x112xf32>
    %c3 = arith.constant 3 : index
    %c0_49 = arith.constant 0 : index
    %59 = vector.load %arg19[%c3, %c0_49] : memref<11x132xf32, #tpu.memory_space<vmem>>, vector<7x132xf32>
    %60 = arith.truncf %59 : vector<7x132xf32> to vector<7x132xbf16>
    %c3_50 = arith.constant 3 : index
    %c0_51 = arith.constant 0 : index
    %c0_52 = arith.constant 0 : index
    %61 = vector.load %arg6[%c3_50, %c0_51, %c0_52] : memref<5x132x112xbf16, #tpu.memory_space<vmem>>, vector<1x132x112xbf16>
    %62 = vector.shape_cast %61 : vector<1x132x112xbf16> to vector<132x112xbf16>
    %cst_53 = arith.constant dense<0.000000e+00> : vector<7x112xf32>
    %63 = tpu.matmul %60, %62, %cst_53 {dimension_numbers = #tpu.dot_dimension_numbers<[1], [0], [0], [1], [0, 0, 1, 1], [], []>} : vector<7x132xbf16>, vector<132x112xbf16>, vector<7x112xf32> -> vector<7x112xf32>
    %64 = arith.addf %58, %63 : vector<7x112xf32>
    %c4 = arith.constant 4 : index
    %c0_54 = arith.constant 0 : index
    %65 = vector.load %arg19[%c4, %c0_54] : memref<11x132xf32, #tpu.memory_space<vmem>>, vector<7x132xf32>
    %66 = arith.truncf %65 : vector<7x132xf32> to vector<7x132xbf16>
    %c4_55 = arith.constant 4 : index
    %c0_56 = arith.constant 0 : index
    %c0_57 = arith.constant 0 : index
    %67 = vector.load %arg6[%c4_55, %c0_56, %c0_57] : memref<5x132x112xbf16, #tpu.memory_space<vmem>>, vector<1x132x112xbf16>
    %68 = vector.shape_cast %67 : vector<1x132x112xbf16> to vector<132x112xbf16>
    %cst_58 = arith.constant dense<0.000000e+00> : vector<7x112xf32>
    %69 = tpu.matmul %66, %68, %cst_58 {dimension_numbers = #tpu.dot_dimension_numbers<[1], [0], [0], [1], [0, 0, 1, 1], [], []>} : vector<7x132xbf16>, vector<132x112xbf16>, vector<7x112xf32> -> vector<7x112xf32>
    %70 = arith.addf %64, %69 : vector<7x112xf32>
    %c0_59 = arith.constant 0 : index
    %c0_60 = arith.constant 0 : index
    %71 = vector.load %arg7[%c0_59, %c0_60] : memref<1x112xf32, #tpu.memory_space<vmem>>, vector<1x112xf32>
    %72 = vector.broadcast %71 : vector<1x112xf32> to vector<7x112xf32>
    %73 = arith.addf %70, %72 : vector<7x112xf32>
    %cst_61 = arith.constant 0.000000e+00 : f32
    %74 = vector.broadcast %cst_61 : f32 to vector<7x112xf32>
    %75 = arith.maximumf %73, %74 : vector<7x112xf32>
    %cst_62 = arith.constant 0.000000e+00 : f32
    %76 = vector.broadcast %cst_62 : f32 to vector<9x144xf32>
    %c0_63 = arith.constant 0 : index
    %c0_64 = arith.constant 0 : index
    %77 = vector.load %arg20[%c0_63, %c0_64] : memref<9x144xf32, #tpu.memory_space<vmem>>, vector<9x144xf32>
    tpu.vector_store %arg20[%c0_63, %c0_64], %76 {strides = array<i32>} : memref<9x144xf32, #tpu.memory_space<vmem>>, vector<9x144xf32>,
    %c1_65 = arith.constant 1 : index
    %c16 = arith.constant 16 : index
    %78 = vector.load %arg20[%c1_65, %c16] : memref<9x144xf32, #tpu.memory_space<vmem>>, vector<7x112xf32>
    tpu.vector_store %arg20[%c1_65, %c16], %37 {strides = array<i32>} : memref<9x144xf32, #tpu.memory_space<vmem>>, vector<7x112xf32>,
    %c0_66 = arith.constant 0 : index
    %c0_67 = arith.constant 0 : index
    %79 = vector.load %arg20[%c0_66, %c0_67] : memref<9x144xf32, #tpu.memory_space<vmem>>, vector<7x144xf32>
    %80 = arith.truncf %79 : vector<7x144xf32> to vector<7x144xbf16>
    %c0_68 = arith.constant 0 : index
    %c0_69 = arith.constant 0 : index
    %c0_70 = arith.constant 0 : index
    %81 = vector.load %arg8[%c0_68, %c0_69, %c0_70] : memref<3x144x168xbf16, #tpu.memory_space<vmem>>, vector<1x144x168xbf16>
    %82 = vector.shape_cast %81 : vector<1x144x168xbf16> to vector<144x168xbf16>
    %cst_71 = arith.constant dense<0.000000e+00> : vector<7x168xf32>
    %83 = tpu.matmul %80, %82, %cst_71 {dimension_numbers = #tpu.dot_dimension_numbers<[1], [0], [0], [1], [0, 0, 1, 1], [], []>} : vector<7x144xbf16>, vector<144x168xbf16>, vector<7x168xf32> -> vector<7x168xf32>
    %c1_72 = arith.constant 1 : index
    %c0_73 = arith.constant 0 : index
    %84 = vector.load %arg20[%c1_72, %c0_73] : memref<9x144xf32, #tpu.memory_space<vmem>>, vector<7x144xf32>
    %85 = arith.truncf %84 : vector<7x144xf32> to vector<7x144xbf16>
    %c1_74 = arith.constant 1 : index
    %c0_75 = arith.constant 0 : index
    %c0_76 = arith.constant 0 : index
    %86 = vector.load %arg8[%c1_74, %c0_75, %c0_76] : memref<3x144x168xbf16, #tpu.memory_space<vmem>>, vector<1x144x168xbf16>
    %87 = vector.shape_cast %86 : vector<1x144x168xbf16> to vector<144x168xbf16>
    %cst_77 = arith.constant dense<0.000000e+00> : vector<7x168xf32>
    %88 = tpu.matmul %85, %87, %cst_77 {dimension_numbers = #tpu.dot_dimension_numbers<[1], [0], [0], [1], [0, 0, 1, 1], [], []>} : vector<7x144xbf16>, vector<144x168xbf16>, vector<7x168xf32> -> vector<7x168xf32>
    %89 = arith.addf %83, %88 : vector<7x168xf32>
    %c2_78 = arith.constant 2 : index
    %c0_79 = arith.constant 0 : index
    %90 = vector.load %arg20[%c2_78, %c0_79] : memref<9x144xf32, #tpu.memory_space<vmem>>, vector<7x144xf32>
    %91 = arith.truncf %90 : vector<7x144xf32> to vector<7x144xbf16>
    %c2_80 = arith.constant 2 : index
    %c0_81 = arith.constant 0 : index
    %c0_82 = arith.constant 0 : index
    %92 = vector.load %arg8[%c2_80, %c0_81, %c0_82] : memref<3x144x168xbf16, #tpu.memory_space<vmem>>, vector<1x144x168xbf16>
    %93 = vector.shape_cast %92 : vector<1x144x168xbf16> to vector<144x168xbf16>
    %cst_83 = arith.constant dense<0.000000e+00> : vector<7x168xf32>
    %94 = tpu.matmul %91, %93, %cst_83 {dimension_numbers = #tpu.dot_dimension_numbers<[1], [0], [0], [1], [0, 0, 1, 1], [], []>} : vector<7x144xbf16>, vector<144x168xbf16>, vector<7x168xf32> -> vector<7x168xf32>
    %95 = arith.addf %89, %94 : vector<7x168xf32>
    %c0_84 = arith.constant 0 : index
    %c0_85 = arith.constant 0 : index
    %96 = vector.load %arg9[%c0_84, %c0_85] : memref<1x168xf32, #tpu.memory_space<vmem>>, vector<1x168xf32>
    %97 = vector.broadcast %96 : vector<1x168xf32> to vector<7x168xf32>
    %98 = arith.addf %95, %97 : vector<7x168xf32>
    %cst_86 = arith.constant 0.000000e+00 : f32
    %99 = vector.broadcast %cst_86 : f32 to vector<7x168xf32>
    %100 = arith.maximumf %98, %99 : vector<7x168xf32>
    %cst_87 = arith.constant 0.000000e+00 : f32
    %101 = vector.broadcast %cst_87 : f32 to vector<9x216xf32>
    %c0_88 = arith.constant 0 : index
    %c0_89 = arith.constant 0 : index
    %102 = vector.load %arg21[%c0_88, %c0_89] : memref<9x216xf32, #tpu.memory_space<vmem>>, vector<9x216xf32>
    tpu.vector_store %arg21[%c0_88, %c0_89], %101 {strides = array<i32>} : memref<9x216xf32, #tpu.memory_space<vmem>>, vector<9x216xf32>,
    %c1_90 = arith.constant 1 : index
    %c24_91 = arith.constant 24 : index
    %103 = vector.load %arg21[%c1_90, %c24_91] : memref<9x216xf32, #tpu.memory_space<vmem>>, vector<7x168xf32>
    tpu.vector_store %arg21[%c1_90, %c24_91], %100 {strides = array<i32>} : memref<9x216xf32, #tpu.memory_space<vmem>>, vector<7x168xf32>,
    %c0_92 = arith.constant 0 : index
    %c0_93 = arith.constant 0 : index
    %104 = vector.load %arg21[%c0_92, %c0_93] : memref<9x216xf32, #tpu.memory_space<vmem>>, vector<7x216xf32>
    %105 = arith.truncf %104 : vector<7x216xf32> to vector<7x216xbf16>
    %c0_94 = arith.constant 0 : index
    %c0_95 = arith.constant 0 : index
    %c0_96 = arith.constant 0 : index
    %106 = vector.load %arg10[%c0_94, %c0_95, %c0_96] : memref<3x216x168xbf16, #tpu.memory_space<vmem>>, vector<1x216x168xbf16>
    %107 = vector.shape_cast %106 : vector<1x216x168xbf16> to vector<216x168xbf16>
    %cst_97 = arith.constant dense<0.000000e+00> : vector<7x168xf32>
    %108 = tpu.matmul %105, %107, %cst_97 {dimension_numbers = #tpu.dot_dimension_numbers<[1], [0], [0], [1], [0, 0, 1, 1], [], []>} : vector<7x216xbf16>, vector<216x168xbf16>, vector<7x168xf32> -> vector<7x168xf32>
    %c1_98 = arith.constant 1 : index
    %c0_99 = arith.constant 0 : index
    %109 = vector.load %arg21[%c1_98, %c0_99] : memref<9x216xf32, #tpu.memory_space<vmem>>, vector<7x216xf32>
    %110 = arith.truncf %109 : vector<7x216xf32> to vector<7x216xbf16>
    %c1_100 = arith.constant 1 : index
    %c0_101 = arith.constant 0 : index
    %c0_102 = arith.constant 0 : index
    %111 = vector.load %arg10[%c1_100, %c0_101, %c0_102] : memref<3x216x168xbf16, #tpu.memory_space<vmem>>, vector<1x216x168xbf16>
    %112 = vector.shape_cast %111 : vector<1x216x168xbf16> to vector<216x168xbf16>
    %cst_103 = arith.constant dense<0.000000e+00> : vector<7x168xf32>
    %113 = tpu.matmul %110, %112, %cst_103 {dimension_numbers = #tpu.dot_dimension_numbers<[1], [0], [0], [1], [0, 0, 1, 1], [], []>} : vector<7x216xbf16>, vector<216x168xbf16>, vector<7x168xf32> -> vector<7x168xf32>
    %114 = arith.addf %108, %113 : vector<7x168xf32>
    %c2_104 = arith.constant 2 : index
    %c0_105 = arith.constant 0 : index
    %115 = vector.load %arg21[%c2_104, %c0_105] : memref<9x216xf32, #tpu.memory_space<vmem>>, vector<7x216xf32>
    %116 = arith.truncf %115 : vector<7x216xf32> to vector<7x216xbf16>
    %c2_106 = arith.constant 2 : index
    %c0_107 = arith.constant 0 : index
    %c0_108 = arith.constant 0 : index
    %117 = vector.load %arg10[%c2_106, %c0_107, %c0_108] : memref<3x216x168xbf16, #tpu.memory_space<vmem>>, vector<1x216x168xbf16>
    %118 = vector.shape_cast %117 : vector<1x216x168xbf16> to vector<216x168xbf16>
    %cst_109 = arith.constant dense<0.000000e+00> : vector<7x168xf32>
    %119 = tpu.matmul %116, %118, %cst_109 {dimension_numbers = #tpu.dot_dimension_numbers<[1], [0], [0], [1], [0, 0, 1, 1], [], []>} : vector<7x216xbf16>, vector<216x168xbf16>, vector<7x168xf32> -> vector<7x168xf32>
    %120 = arith.addf %114, %119 : vector<7x168xf32>
    %c0_110 = arith.constant 0 : index
    %c0_111 = arith.constant 0 : index
    %121 = vector.load %arg11[%c0_110, %c0_111] : memref<1x168xf32, #tpu.memory_space<vmem>>, vector<1x168xf32>
    %122 = vector.broadcast %121 : vector<1x168xf32> to vector<7x168xf32>
    %123 = arith.addf %120, %122 : vector<7x168xf32>
    %cst_112 = arith.constant 0.000000e+00 : f32
    %124 = vector.broadcast %cst_112 : f32 to vector<7x168xf32>
    %125 = arith.maximumf %123, %124 : vector<7x168xf32>
    %cst_113 = arith.constant 0.000000e+00 : f32
    %126 = vector.broadcast %cst_113 : f32 to vector<9x72xf32>
    %c0_114 = arith.constant 0 : index
    %c0_115 = arith.constant 0 : index
    %127 = vector.load %arg22[%c0_114, %c0_115] : memref<9x72xf32, #tpu.memory_space<vmem>>, vector<9x72xf32>
    tpu.vector_store %arg22[%c0_114, %c0_115], %126 {strides = array<i32>} : memref<9x72xf32, #tpu.memory_space<vmem>>, vector<9x72xf32>,
    %c1_116 = arith.constant 1 : index
    %c8 = arith.constant 8 : index
    %128 = vector.load %arg22[%c1_116, %c8] : memref<9x72xf32, #tpu.memory_space<vmem>>, vector<7x56xf32>
    tpu.vector_store %arg22[%c1_116, %c8], %38 {strides = array<i32>} : memref<9x72xf32, #tpu.memory_space<vmem>>, vector<7x56xf32>,
    %cst_117 = arith.constant 0.000000e+00 : f32
    %129 = vector.broadcast %cst_117 : f32 to vector<7x56xf32>
    %c0_118 = arith.constant 0 : index
    %c0_119 = arith.constant 0 : index
    %130 = vector.load %arg22[%c0_118, %c0_119] : memref<9x72xf32, #tpu.memory_space<vmem>>, vector<7x56xf32>
    %131 = arith.addf %129, %130 : vector<7x56xf32>
    %c0_120 = arith.constant 0 : index
    %c8_121 = arith.constant 8 : index
    %132 = vector.load %arg22[%c0_120, %c8_121] : memref<9x72xf32, #tpu.memory_space<vmem>>, vector<7x56xf32>
    %133 = arith.addf %131, %132 : vector<7x56xf32>
    %c0_122 = arith.constant 0 : index
    %c16_123 = arith.constant 16 : index
    %134 = vector.load %arg22[%c0_122, %c16_123] : memref<9x72xf32, #tpu.memory_space<vmem>>, vector<7x56xf32>
    %135 = arith.addf %133, %134 : vector<7x56xf32>
    %c1_124 = arith.constant 1 : index
    %c0_125 = arith.constant 0 : index
    %136 = vector.load %arg22[%c1_124, %c0_125] : memref<9x72xf32, #tpu.memory_space<vmem>>, vector<7x56xf32>
    %137 = arith.addf %135, %136 : vector<7x56xf32>
    %c1_126 = arith.constant 1 : index
    %c8_127 = arith.constant 8 : index
    %138 = vector.load %arg22[%c1_126, %c8_127] : memref<9x72xf32, #tpu.memory_space<vmem>>, vector<7x56xf32>
    %139 = arith.addf %137, %138 : vector<7x56xf32>
    %c1_128 = arith.constant 1 : index
    %c16_129 = arith.constant 16 : index
    %140 = vector.load %arg22[%c1_128, %c16_129] : memref<9x72xf32, #tpu.memory_space<vmem>>, vector<7x56xf32>
    %141 = arith.addf %139, %140 : vector<7x56xf32>
    %c2_130 = arith.constant 2 : index
    %c0_131 = arith.constant 0 : index
    %142 = vector.load %arg22[%c2_130, %c0_131] : memref<9x72xf32, #tpu.memory_space<vmem>>, vector<7x56xf32>
    %143 = arith.addf %141, %142 : vector<7x56xf32>
    %c2_132 = arith.constant 2 : index
    %c8_133 = arith.constant 8 : index
    %144 = vector.load %arg22[%c2_132, %c8_133] : memref<9x72xf32, #tpu.memory_space<vmem>>, vector<7x56xf32>
    %145 = arith.addf %143, %144 : vector<7x56xf32>
    %c2_134 = arith.constant 2 : index
    %c16_135 = arith.constant 16 : index
    %146 = vector.load %arg22[%c2_134, %c16_135] : memref<9x72xf32, #tpu.memory_space<vmem>>, vector<7x56xf32>
    %147 = arith.addf %145, %146 : vector<7x56xf32>
    %cst_136 = arith.constant 0.111111112 : f32
    %148 = vector.broadcast %cst_136 : f32 to vector<7x56xf32>
    %149 = arith.mulf %147, %148 : vector<7x56xf32>
    %c0_137 = arith.constant 0 : index
    %c0_138 = arith.constant 0 : index
    %150 = vector.load %arg12[%c0_137, %c0_138] : memref<1x56xf32, #tpu.memory_space<vmem>>, vector<1x56xf32>
    %151 = vector.broadcast %150 : vector<1x56xf32> to vector<7x56xf32>
    %152 = arith.addf %149, %151 : vector<7x56xf32>
    %cst_139 = arith.constant 0.000000e+00 : f32
    %153 = vector.broadcast %cst_139 : f32 to vector<7x56xf32>
    %154 = arith.maximumf %152, %153 : vector<7x56xf32>
    %c0_140 = arith.constant 0 : index
    %c0_141 = arith.constant 0 : index
    %155 = vector.load %arg13[%c0_140, %c0_141] : memref<112x128xf32, #tpu.memory_space<vmem>>, vector<112x128xf32>
    %cst_142 = arith.constant dense<0.000000e+00> : vector<7x128xf32>
    %156 = tpu.matmul %31, %155, %cst_142 {dimension_numbers = #tpu.dot_dimension_numbers<[1], [0], [0], [1], [0, 0, 1, 1], [], []>} : vector<7x112xf32>, vector<112x128xf32>, vector<7x128xf32> -> vector<7x128xf32>
    %c0_143 = arith.constant 0 : index
    %c0_144 = arith.constant 0 : index
    %157 = vector.load %arg14[%c0_143, %c0_144] : memref<112x128xf32, #tpu.memory_space<vmem>>, vector<112x128xf32>
    %cst_145 = arith.constant dense<0.000000e+00> : vector<7x128xf32>
    %158 = tpu.matmul %75, %157, %cst_145 {dimension_numbers = #tpu.dot_dimension_numbers<[1], [0], [0], [1], [0, 0, 1, 1], [], []>} : vector<7x112xf32>, vector<112x128xf32>, vector<7x128xf32> -> vector<7x128xf32>
    %159 = arith.addf %156, %158 : vector<7x128xf32>
    %c0_146 = arith.constant 0 : index
    %c0_147 = arith.constant 0 : index
    %160 = vector.load %arg15[%c0_146, %c0_147] : memref<168x128xf32, #tpu.memory_space<vmem>>, vector<168x128xf32>
    %cst_148 = arith.constant dense<0.000000e+00> : vector<7x128xf32>
    %161 = tpu.matmul %125, %160, %cst_148 {dimension_numbers = #tpu.dot_dimension_numbers<[1], [0], [0], [1], [0, 0, 1, 1], [], []>} : vector<7x168xf32>, vector<168x128xf32>, vector<7x128xf32> -> vector<7x128xf32>
    %162 = arith.addf %159, %161 : vector<7x128xf32>
    %c0_149 = arith.constant 0 : index
    %c0_150 = arith.constant 0 : index
    %163 = vector.load %arg16[%c0_149, %c0_150] : memref<56x128xf32, #tpu.memory_space<vmem>>, vector<56x128xf32>
    %cst_151 = arith.constant dense<0.000000e+00> : vector<7x128xf32>
    %164 = tpu.matmul %154, %163, %cst_151 {dimension_numbers = #tpu.dot_dimension_numbers<[1], [0], [0], [1], [0, 0, 1, 1], [], []>} : vector<7x56xf32>, vector<56x128xf32>, vector<7x128xf32> -> vector<7x128xf32>
    %165 = arith.addf %162, %164 : vector<7x128xf32>
    %cst_152 = arith.constant dense<0.000000e+00> : vector<128xf32>
    %166 = vector.multi_reduction <add>, %165, %cst_152 [0] : vector<7x128xf32> to vector<128xf32>
    %167 = vector.shape_cast %166 : vector<128xf32> to vector<1x128xf32>
    %c0_153 = arith.constant 0 : index
    %c0_154 = arith.constant 0 : index
    %168 = vector.load %arg17[%c0_153, %c0_154] : memref<1x128xf32, #tpu.memory_space<vmem>>, vector<1x128xf32>
    %169 = arith.addf %167, %168 : vector<1x128xf32>
    %170 = vector.shape_cast %169 : vector<1x128xf32> to vector<1x128xf32>
    %171 = vector.broadcast %170 : vector<1x128xf32> to vector<8x128xf32>
    %c0_155 = arith.constant 0 : index
    %c0_156 = arith.constant 0 : index
    %c0_157 = arith.constant 0 : index
    %172 = vector.load %arg18[%c0_155, %c0_156, %c0_157] : memref<1x8x128xf32, #tpu.memory_space<vmem>>, vector<1x8x128xf32>
    %173 = vector.shape_cast %172 : vector<1x8x128xf32> to vector<8x128xf32>
    %174 = vector.shape_cast %171 : vector<8x128xf32> to vector<1x8x128xf32>
    tpu.vector_store %arg18[%c0_155, %c0_156, %c0_157], %174 {strides = array<i32>} : memref<1x8x128xf32, #tpu.memory_space<vmem>>, vector<1x8x128xf32>,
    return
  }
  func.func @transform_0(%arg0: i32) -> (i32, i32, i32, i32) {
    %c0_i32 = arith.constant 0 : i32
    %c0_i32_0 = arith.constant 0 : i32
    %c0_i32_1 = arith.constant 0 : i32
    %c0_i32_2 = arith.constant 0 : i32
    return %arg0, %c0_i32, %c0_i32_0, %c0_i32_1 : i32, i32, i32, i32
  }
  func.func @transform_1(%arg0: i32) -> (i32, i32, i32) {
    %c0_i32 = arith.constant 0 : i32
    %c0_i32_0 = arith.constant 0 : i32
    %c0_i32_1 = arith.constant 0 : i32
    %c0_i32_2 = arith.constant 0 : i32
    return %c0_i32, %c0_i32_0, %c0_i32_1 : i32, i32, i32
  }
  func.func @transform_2(%arg0: i32) -> (i32, i32) {
    %c0_i32 = arith.constant 0 : i32
    %c0_i32_0 = arith.constant 0 : i32
    %c0_i32_1 = arith.constant 0 : i32
    return %c0_i32, %c0_i32_0 : i32, i32
  }
  func.func @transform_3(%arg0: i32) -> (i32, i32) {
    %c0_i32 = arith.constant 0 : i32
    %c0_i32_0 = arith.constant 0 : i32
    %c0_i32_1 = arith.constant 0 : i32
    return %c0_i32, %c0_i32_0 : i32, i32
  }
  func.func @transform_4(%arg0: i32) -> (i32, i32) {
    %c0_i32 = arith.constant 0 : i32
    %c0_i32_0 = arith.constant 0 : i32
    %c0_i32_1 = arith.constant 0 : i32
    return %c0_i32, %c0_i32_0 : i32, i32
  }
  func.func @transform_5(%arg0: i32) -> (i32, i32, i32) {
    %c0_i32 = arith.constant 0 : i32
    %c0_i32_0 = arith.constant 0 : i32
    %c0_i32_1 = arith.constant 0 : i32
    %c0_i32_2 = arith.constant 0 : i32
    return %c0_i32, %c0_i32_0, %c0_i32_1 : i32, i32, i32
  }
  func.func @transform_6(%arg0: i32) -> (i32, i32) {
    %c0_i32 = arith.constant 0 : i32
    %c0_i32_0 = arith.constant 0 : i32
    %c0_i32_1 = arith.constant 0 : i32
    return %c0_i32, %c0_i32_0 : i32, i32
  }
  func.func @transform_7(%arg0: i32) -> (i32, i32, i32) {
    %c0_i32 = arith.constant 0 : i32
    %c0_i32_0 = arith.constant 0 : i32
    %c0_i32_1 = arith.constant 0 : i32
    %c0_i32_2 = arith.constant 0 : i32
    return %c0_i32, %c0_i32_0, %c0_i32_1 : i32, i32, i32
  }
  func.func @transform_8(%arg0: i32) -> (i32, i32) {
    %c0_i32 = arith.constant 0 : i32
    %c0_i32_0 = arith.constant 0 : i32
    %c0_i32_1 = arith.constant 0 : i32
    return %c0_i32, %c0_i32_0 : i32, i32
  }
  func.func @transform_9(%arg0: i32) -> (i32, i32, i32) {
    %c0_i32 = arith.constant 0 : i32
    %c0_i32_0 = arith.constant 0 : i32
    %c0_i32_1 = arith.constant 0 : i32
    %c0_i32_2 = arith.constant 0 : i32
    return %c0_i32, %c0_i32_0, %c0_i32_1 : i32, i32, i32
  }
  func.func @transform_10(%arg0: i32) -> (i32, i32) {
    %c0_i32 = arith.constant 0 : i32
    %c0_i32_0 = arith.constant 0 : i32
    %c0_i32_1 = arith.constant 0 : i32
    return %c0_i32, %c0_i32_0 : i32, i32
  }
  func.func @transform_11(%arg0: i32) -> (i32, i32) {
    %c0_i32 = arith.constant 0 : i32
    %c0_i32_0 = arith.constant 0 : i32
    %c0_i32_1 = arith.constant 0 : i32
    return %c0_i32, %c0_i32_0 : i32, i32
  }
  func.func @transform_12(%arg0: i32) -> (i32, i32) {
    %c0_i32 = arith.constant 0 : i32
    %c0_i32_0 = arith.constant 0 : i32
    %c0_i32_1 = arith.constant 0 : i32
    return %c0_i32, %c0_i32_0 : i32, i32
  }
  func.func @transform_13(%arg0: i32) -> (i32, i32) {
    %c0_i32 = arith.constant 0 : i32
    %c0_i32_0 = arith.constant 0 : i32
    %c0_i32_1 = arith.constant 0 : i32
    return %c0_i32, %c0_i32_0 : i32, i32
  }
  func.func @transform_14(%arg0: i32) -> (i32, i32) {
    %c0_i32 = arith.constant 0 : i32
    %c0_i32_0 = arith.constant 0 : i32
    %c0_i32_1 = arith.constant 0 : i32
    return %c0_i32, %c0_i32_0 : i32, i32
  }
  func.func @transform_15(%arg0: i32) -> (i32, i32) {
    %c0_i32 = arith.constant 0 : i32
    %c0_i32_0 = arith.constant 0 : i32
    %c0_i32_1 = arith.constant 0 : i32
    return %c0_i32, %c0_i32_0 : i32, i32
  }
  func.func @transform_16(%arg0: i32) -> (i32, i32) {
    %c0_i32 = arith.constant 0 : i32
    %c0_i32_0 = arith.constant 0 : i32
    %c0_i32_1 = arith.constant 0 : i32
    return %c0_i32, %c0_i32_0 : i32, i32
  }
  func.func @transform_17(%arg0: i32) -> (i32, i32, i32) {
    %c0_i32 = arith.constant 0 : i32
    %c0_i32_0 = arith.constant 0 : i32
    %c0_i32_1 = arith.constant 0 : i32
    return %arg0, %c0_i32, %c0_i32_0 : i32, i32, i32
  }
}

</mosaic_0001>

<llo_original>
// kernel: inception_forward.1
$region0: #{inception_forward.1}
  #allocation0 [shape = 'u32[]', space=smem, size = 0x4, offset = 0x4, fixed_abs, tag = 'smem constant byte address 0x4 - core index']
  #allocation1 [shape = 'u32[144,128]{1,0:T(1,128)}', space=vmem, size = 0x12000, scoped, tag = 'internal scratch']
  #allocation2 [shape = 'f32[11,132]{1,0:T(8,128)}', space=vmem, size = 0x4000, scoped, tag = 'scratch operand']
  #allocation3 [shape = 'f32[9,144]{1,0:T(8,128)}', space=vmem, size = 0x4000, scoped, tag = 'scratch operand']
  #allocation4 [shape = 'f32[9,216]{1,0:T(8,128)}', space=vmem, size = 0x4000, scoped, tag = 'scratch operand']
  #allocation5 [shape = 'f32[9,72]{1,0:T(8,128)}', space=vmem, size = 0x2000, scoped, tag = 'scratch operand']
  %s0 = inlined_call_operand.vmem [shape: bf16[2,2,8,64], index: 0, kind: input, shape index: {}]
  %s1 = inlined_call_operand.vmem [shape: bf16[3,64,112], index: 1, kind: input, shape index: {}]
  %s2 = inlined_call_operand.vmem [shape: f32[1,112], index: 2, kind: input, shape index: {}]
  %s3 = inlined_call_operand.vmem [shape: bf16[112,512], index: 3, kind: input, shape index: {}]
  %s4 = inlined_call_operand.vmem [shape: f32[1,512], index: 4, kind: input, shape index: {}]
  %s5 = inlined_call_operand.vmem [shape: bf16[5,132,112], index: 5, kind: input, shape index: {}]
  %s6 = inlined_call_operand.vmem [shape: f32[1,112], index: 6, kind: input, shape index: {}]
  %s7 = inlined_call_operand.vmem [shape: bf16[3,144,168], index: 7, kind: input, shape index: {}]
  %s8 = inlined_call_operand.vmem [shape: f32[1,168], index: 8, kind: input, shape index: {}]
  %s9 = inlined_call_operand.vmem [shape: bf16[3,216,168], index: 9, kind: input, shape index: {}]
  %s10 = inlined_call_operand.vmem [shape: f32[1,168], index: 10, kind: input, shape index: {}]
  %s11 = inlined_call_operand.vmem [shape: f32[1,56], index: 11, kind: input, shape index: {}]
  %s12 = inlined_call_operand.vmem [shape: f32[112,128], index: 12, kind: input, shape index: {}]
  %s13 = inlined_call_operand.vmem [shape: f32[112,128], index: 13, kind: input, shape index: {}]
  %s14 = inlined_call_operand.vmem [shape: f32[168,128], index: 14, kind: input, shape index: {}]
  %s15 = inlined_call_operand.hbm [shape: f32[56,128], index: 15, kind: input, shape index: {}]
  %s16 = inlined_call_operand.vmem [shape: f32[1,128], index: 16, kind: input, shape index: {}]
  %s17 = inlined_call_operand.vmem [shape: f32[2,8,128], index: 17, kind: output, shape index: {}]
  %s18 = sld [smem:[#allocation0]]
  $region105: #{inception_forward.1} parent=0
    _
  %s20 = ssub.s32 1, %s18
  %s21 = scalar_select 0, %s20, %s18
  $region1: #{inception_forward.1} parent=0
    #allocation6 [shape = 'u8[28672]{0}', space=vmem, size = 0x7000, scoped, tag = 'input window, operand 15, single buffered']
    #allocation7 [shape = 's32[2]{0}', space=sflag, size = 0x8, scoped, tag = 'scoped memory for inception_forward.1']
    %22 = vsyncpa [#allocation7], 0
    loop: start=0, step=1, limit=4
    $region2: #{inception_forward.1} parent=1 // loop_pre_header
      _
    $region3: #{inception_forward.1} parent=1 // loop_header
      %s24 = sphi 0, %s28
      %p25 = scmp.ge.s32.totalorder %s24, 4
      %s34 = sphi 0, %s36
      %s37 = sphi 0, %s34
      %s38 = sphi 0, %s37
      %s54 = sphi 0, %s38
      %s58 = sphi 0, %s58
      %s60 = sphi 0, %s58
      %s61 = sphi 0, %s60
      %s75 = sphi 0, %s61
      %s79 = sphi 0, %s79
      %s81 = sphi 0, %s79
      %s82 = sphi 0, %s81
      %s96 = sphi 0, %s82
      %s100 = sphi 0, %s100
      %s102 = sphi 0, %s100
      %s103 = sphi 0, %s102
      %s117 = sphi 0, %s103
      %s121 = sphi 0, %s121
      %s123 = sphi 0, %s121
      %s124 = sphi 0, %s123
      %s138 = sphi 0, %s124
      %s142 = sphi 0, %s142
      %s144 = sphi 0, %s142
      %s145 = sphi 0, %s144
      %s159 = sphi 0, %s145
      %s163 = sphi 0, %s163
      %s165 = sphi 0, %s163
      %s166 = sphi 0, %s165
      %s180 = sphi 0, %s166
      %s184 = sphi 0, %s184
      %s186 = sphi 0, %s184
      %s187 = sphi 0, %s186
      %s201 = sphi 0, %s187
      %s205 = sphi 0, %s205
      %s207 = sphi 0, %s205
      %s208 = sphi 0, %s207
      %s222 = sphi 0, %s208
      %s226 = sphi 0, %s226
      %s228 = sphi 0, %s226
      %s229 = sphi 0, %s228
      %s243 = sphi 0, %s229
      %s247 = sphi 0, %s247
      %s249 = sphi 0, %s247
      %s250 = sphi 0, %s249
      %s264 = sphi 0, %s250
      %s268 = sphi 0, %s268
      %s270 = sphi 0, %s268
      %s271 = sphi 0, %s270
      %s285 = sphi 0, %s271
      %s289 = sphi 0, %s289
      %s291 = sphi 0, %s289
      %s292 = sphi 0, %s291
      %s306 = sphi 0, %s292
      %s310 = sphi 0, %s310
      %s312 = sphi 0, %s310
      %s313 = sphi 0, %s312
      %s327 = sphi 0, %s313
      %s331 = sphi 0, %s331
      %s333 = sphi 0, %s331
      %s334 = sphi 0, %s333
      %s348 = sphi 0, %s334
      %s352 = sphi 0, %s352
      %s354 = sphi 0, %s352
      %s355 = sphi 0, %s354
      %s369 = sphi 0, %s355
      %s373 = sphi 0, %s373
      %s375 = sphi 0, %s373
      %s376 = sphi 0, %s375
      %s390 = sphi 0, %s376
      %s396 = sphi 0, %s398
      %s399 = sphi 0, %s396
      %s400 = sphi 0, %s399
      %s416 = sphi 0, %s400
    $region4: #{inception_forward.1} parent=1 // loop_header_branch
      %27 = sbr.rel (%p25) target = $region8
    $region5: #{inception_forward.1} parent=1 // loop_body
      %s29 = ssub.s32 %s24, 1
      %s30 = ssub.s32 %s24, 2
      %s31 = sadd.s32 %s24, 1
      %s32 = ssub.s32 %s24, %s31
      %p33 = scmp.eq.s32.totalorder %s32, 0
      %s35 = sadd.s32 %s34, 1
      %s36 = scalar_select %p33, %s34, %s35
      %p39 = pneg %p33
      %p40 = scmp.eq.s32.totalorder %s24, 1
      %p41 = por %p39, %p40
      %p42 = scmp.ne.s32.totalorder %s34, %s37
      %p43 = scmp.eq.s32.totalorder %s24, 0
      %p44 = por %p42, %p43
      %p45 = scmp.ne.s32.totalorder %s34, %s37
      %p46 = scmp.eq.s32.totalorder %s29, 1
      %p47 = por %p45, %p46
      %p48 = scmp.ne.s32.totalorder %s37, %s38
      %p49 = scmp.eq.s32.totalorder %s29, 0
      %p50 = por %p48, %p49
      %p51 = scmp.ne.s32.totalorder %s37, %s38
      %p52 = scmp.eq.s32.totalorder %s30, 1
      %p53 = por %p51, %p52
      %p55 = scmp.ne.s32.totalorder %s38, %s54
      %p56 = scmp.eq.s32.totalorder %s30, 0
      %p57 = por %p55, %p56
      %s59 = sadd.s32 %s58, 1
      %p62 = scmp.eq.s32.totalorder %s24, 1
      %p63 = scmp.ne.s32.totalorder %s58, %s60
      %p64 = scmp.eq.s32.totalorder %s24, 0
      %p65 = por %p63, %p64
      %p66 = scmp.ne.s32.totalorder %s58, %s60
      %p67 = scmp.eq.s32.totalorder %s29, 1
      %p68 = por %p66, %p67
      %p69 = scmp.ne.s32.totalorder %s60, %s61
      %p70 = scmp.eq.s32.totalorder %s29, 0
      %p71 = por %p69, %p70
      %p72 = scmp.ne.s32.totalorder %s60, %s61
      %p73 = scmp.eq.s32.totalorder %s30, 1
      %p74 = por %p72, %p73
      %p76 = scmp.ne.s32.totalorder %s61, %s75
      %p77 = scmp.eq.s32.totalorder %s30, 0
      %p78 = por %p76, %p77
      %s80 = sadd.s32 %s79, 1
      %p83 = scmp.eq.s32.totalorder %s24, 1
      %p84 = scmp.ne.s32.totalorder %s79, %s81
      %p85 = scmp.eq.s32.totalorder %s24, 0
      %p86 = por %p84, %p85
      %p87 = scmp.ne.s32.totalorder %s79, %s81
      %p88 = scmp.eq.s32.totalorder %s29, 1
      %p89 = por %p87, %p88
      %p90 = scmp.ne.s32.totalorder %s81, %s82
      %p91 = scmp.eq.s32.totalorder %s29, 0
      %p92 = por %p90, %p91
      %p93 = scmp.ne.s32.totalorder %s81, %s82
      %p94 = scmp.eq.s32.totalorder %s30, 1
      %p95 = por %p93, %p94
      %p97 = scmp.ne.s32.totalorder %s82, %s96
      %p98 = scmp.eq.s32.totalorder %s30, 0
      %p99 = por %p97, %p98
      %s101 = sadd.s32 %s100, 1
      %p104 = scmp.eq.s32.totalorder %s24, 1
      %p105 = scmp.ne.s32.totalorder %s100, %s102
      %p106 = scmp.eq.s32.totalorder %s24, 0
      %p107 = por %p105, %p106
      %p108 = scmp.ne.s32.totalorder %s100, %s102
      %p109 = scmp.eq.s32.totalorder %s29, 1
      %p110 = por %p108, %p109
      %p111 = scmp.ne.s32.totalorder %s102, %s103
      %p112 = scmp.eq.s32.totalorder %s29, 0
      %p113 = por %p111, %p112
      %p114 = scmp.ne.s32.totalorder %s102, %s103
      %p115 = scmp.eq.s32.totalorder %s30, 1
      %p116 = por %p114, %p115
      %p118 = scmp.ne.s32.totalorder %s103, %s117
      %p119 = scmp.eq.s32.totalorder %s30, 0
      %p120 = por %p118, %p119
      %s122 = sadd.s32 %s121, 1
      %p125 = scmp.eq.s32.totalorder %s24, 1
      %p126 = scmp.ne.s32.totalorder %s121, %s123
      %p127 = scmp.eq.s32.totalorder %s24, 0
      %p128 = por %p126, %p127
      %p129 = scmp.ne.s32.totalorder %s121, %s123
      %p130 = scmp.eq.s32.totalorder %s29, 1
      %p131 = por %p129, %p130
      %p132 = scmp.ne.s32.totalorder %s123, %s124
      %p133 = scmp.eq.s32.totalorder %s29, 0
      %p134 = por %p132, %p133
      %p135 = scmp.ne.s32.totalorder %s123, %s124
      %p136 = scmp.eq.s32.totalorder %s30, 1
      %p137 = por %p135, %p136
      %p139 = scmp.ne.s32.totalorder %s124, %s138
      %p140 = scmp.eq.s32.totalorder %s30, 0
      %p141 = por %p139, %p140
      %s143 = sadd.s32 %s142, 1
      %p146 = scmp.eq.s32.totalorder %s24, 1
      %p147 = scmp.ne.s32.totalorder %s142, %s144
      %p148 = scmp.eq.s32.totalorder %s24, 0
      %p149 = por %p147, %p148
      %p150 = scmp.ne.s32.totalorder %s142, %s144
      %p151 = scmp.eq.s32.totalorder %s29, 1
      %p152 = por %p150, %p151
      %p153 = scmp.ne.s32.totalorder %s144, %s145
      %p154 = scmp.eq.s32.totalorder %s29, 0
      %p155 = por %p153, %p154
      %p156 = scmp.ne.s32.totalorder %s144, %s145
      %p157 = scmp.eq.s32.totalorder %s30, 1
      %p158 = por %p156, %p157
      %p160 = scmp.ne.s32.totalorder %s145, %s159
      %p161 = scmp.eq.s32.totalorder %s30, 0
      %p162 = por %p160, %p161
      %s164 = sadd.s32 %s163, 1
      %p167 = scmp.eq.s32.totalorder %s24, 1
      %p168 = scmp.ne.s32.totalorder %s163, %s165
      %p169 = scmp.eq.s32.totalorder %s24, 0
      %p170 = por %p168, %p169
      %p171 = scmp.ne.s32.totalorder %s163, %s165
      %p172 = scmp.eq.s32.totalorder %s29, 1
      %p173 = por %p171, %p172
      %p174 = scmp.ne.s32.totalorder %s165, %s166
      %p175 = scmp.eq.s32.totalorder %s29, 0
      %p176 = por %p174, %p175
      %p177 = scmp.ne.s32.totalorder %s165, %s166
      %p178 = scmp.eq.s32.totalorder %s30, 1
      %p179 = por %p177, %p178
      %p181 = scmp.ne.s32.totalorder %s166, %s180
      %p182 = scmp.eq.s32.totalorder %s30, 0
      %p183 = por %p181, %p182
      %s185 = sadd.s32 %s184, 1
      %p188 = scmp.eq.s32.totalorder %s24, 1
      %p189 = scmp.ne.s32.totalorder %s184, %s186
      %p190 = scmp.eq.s32.totalorder %s24, 0
      %p191 = por %p189, %p190
      %p192 = scmp.ne.s32.totalorder %s184, %s186
      %p193 = scmp.eq.s32.totalorder %s29, 1
      %p194 = por %p192, %p193
      %p195 = scmp.ne.s32.totalorder %s186, %s187
      %p196 = scmp.eq.s32.totalorder %s29, 0
      %p197 = por %p195, %p196
      %p198 = scmp.ne.s32.totalorder %s186, %s187
      %p199 = scmp.eq.s32.totalorder %s30, 1
      %p200 = por %p198, %p199
      %p202 = scmp.ne.s32.totalorder %s187, %s201
      %p203 = scmp.eq.s32.totalorder %s30, 0
      %p204 = por %p202, %p203
      %s206 = sadd.s32 %s205, 1
      %p209 = scmp.eq.s32.totalorder %s24, 1
      %p210 = scmp.ne.s32.totalorder %s205, %s207
      %p211 = scmp.eq.s32.totalorder %s24, 0
      %p212 = por %p210, %p211
      %p213 = scmp.ne.s32.totalorder %s205, %s207
      %p214 = scmp.eq.s32.totalorder %s29, 1
      %p215 = por %p213, %p214
      %p216 = scmp.ne.s32.totalorder %s207, %s208
      %p217 = scmp.eq.s32.totalorder %s29, 0
      %p218 = por %p216, %p217
      %p219 = scmp.ne.s32.totalorder %s207, %s208
      %p220 = scmp.eq.s32.totalorder %s30, 1
      %p221 = por %p219, %p220
      %p223 = scmp.ne.s32.totalorder %s208, %s222
      %p224 = scmp.eq.s32.totalorder %s30, 0
      %p225 = por %p223, %p224
      %s227 = sadd.s32 %s226, 1
      %p230 = scmp.eq.s32.totalorder %s24, 1
      %p231 = scmp.ne.s32.totalorder %s226, %s228
      %p232 = scmp.eq.s32.totalorder %s24, 0
      %p233 = por %p231, %p232
      %p234 = scmp.ne.s32.totalorder %s226, %s228
      %p235 = scmp.eq.s32.totalorder %s29, 1
      %p236 = por %p234, %p235
      %p237 = scmp.ne.s32.totalorder %s228, %s229
      %p238 = scmp.eq.s32.totalorder %s29, 0
      %p239 = por %p237, %p238
      %p240 = scmp.ne.s32.totalorder %s228, %s229
      %p241 = scmp.eq.s32.totalorder %s30, 1
      %p242 = por %p240, %p241
      %p244 = scmp.ne.s32.totalorder %s229, %s243
      %p245 = scmp.eq.s32.totalorder %s30, 0
      %p246 = por %p244, %p245
      %s248 = sadd.s32 %s247, 1
      %p251 = scmp.eq.s32.totalorder %s24, 1
      %p252 = scmp.ne.s32.totalorder %s247, %s249
      %p253 = scmp.eq.s32.totalorder %s24, 0
      %p254 = por %p252, %p253
      %p255 = scmp.ne.s32.totalorder %s247, %s249
      %p256 = scmp.eq.s32.totalorder %s29, 1
      %p257 = por %p255, %p256
      %p258 = scmp.ne.s32.totalorder %s249, %s250
      %p259 = scmp.eq.s32.totalorder %s29, 0
      %p260 = por %p258, %p259
      %p261 = scmp.ne.s32.totalorder %s249, %s250
      %p262 = scmp.eq.s32.totalorder %s30, 1
      %p263 = por %p261, %p262
      %p265 = scmp.ne.s32.totalorder %s250, %s264
      %p266 = scmp.eq.s32.totalorder %s30, 0
      %p267 = por %p265, %p266
      %s269 = sadd.s32 %s268, 1
      %p272 = scmp.eq.s32.totalorder %s24, 1
      %p273 = scmp.ne.s32.totalorder %s268, %s270
      %p274 = scmp.eq.s32.totalorder %s24, 0
      %p275 = por %p273, %p274
      %p276 = scmp.ne.s32.totalorder %s268, %s270
      %p277 = scmp.eq.s32.totalorder %s29, 1
      %p278 = por %p276, %p277
      %p279 = scmp.ne.s32.totalorder %s270, %s271
      %p280 = scmp.eq.s32.totalorder %s29, 0
      %p281 = por %p279, %p280
      %p282 = scmp.ne.s32.totalorder %s270, %s271
      %p283 = scmp.eq.s32.totalorder %s30, 1
      %p284 = por %p282, %p283
      %p286 = scmp.ne.s32.totalorder %s271, %s285
      %p287 = scmp.eq.s32.totalorder %s30, 0
      %p288 = por %p286, %p287
      %s290 = sadd.s32 %s289, 1
      %p293 = scmp.eq.s32.totalorder %s24, 1
      %p294 = scmp.ne.s32.totalorder %s289, %s291
      %p295 = scmp.eq.s32.totalorder %s24, 0
      %p296 = por %p294, %p295
      %p297 = scmp.ne.s32.totalorder %s289, %s291
      %p298 = scmp.eq.s32.totalorder %s29, 1
      %p299 = por %p297, %p298
      %p300 = scmp.ne.s32.totalorder %s291, %s292
      %p301 = scmp.eq.s32.totalorder %s29, 0
      %p302 = por %p300, %p301
      %p303 = scmp.ne.s32.totalorder %s291, %s292
      %p304 = scmp.eq.s32.totalorder %s30, 1
      %p305 = por %p303, %p304
      %p307 = scmp.ne.s32.totalorder %s292, %s306
      %p308 = scmp.eq.s32.totalorder %s30, 0
      %p309 = por %p307, %p308
      %s311 = sadd.s32 %s310, 1
      %p314 = scmp.eq.s32.totalorder %s24, 1
      %p315 = scmp.ne.s32.totalorder %s310, %s312
      %p316 = scmp.eq.s32.totalorder %s24, 0
      %p317 = por %p315, %p316
      %p318 = scmp.ne.s32.totalorder %s310, %s312
      %p319 = scmp.eq.s32.totalorder %s29, 1
      %p320 = por %p318, %p319
      %p321 = scmp.ne.s32.totalorder %s312, %s313
      %p322 = scmp.eq.s32.totalorder %s29, 0
      %p323 = por %p321, %p322
      %p324 = scmp.ne.s32.totalorder %s312, %s313
      %p325 = scmp.eq.s32.totalorder %s30, 1
      %p326 = por %p324, %p325
      %p328 = scmp.ne.s32.totalorder %s313, %s327
      %p329 = scmp.eq.s32.totalorder %s30, 0
      %p330 = por %p328, %p329
      %s332 = sadd.s32 %s331, 1
      %p335 = scmp.eq.s32.totalorder %s24, 1
      %p336 = scmp.ne.s32.totalorder %s331, %s333
      %p337 = scmp.eq.s32.totalorder %s24, 0
      %p338 = por %p336, %p337
      %p339 = scmp.ne.s32.totalorder %s331, %s333
      %p340 = scmp.eq.s32.totalorder %s29, 1
      %p341 = por %p339, %p340
      %p342 = scmp.ne.s32.totalorder %s333, %s334
      %p343 = scmp.eq.s32.totalorder %s29, 0
      %p344 = por %p342, %p343
      %p345 = scmp.ne.s32.totalorder %s333, %s334
      %p346 = scmp.eq.s32.totalorder %s30, 1
      %p347 = por %p345, %p346
      %p349 = scmp.ne.s32.totalorder %s334, %s348
      %p350 = scmp.eq.s32.totalorder %s30, 0
      %p351 = por %p349, %p350
      %s353 = sadd.s32 %s352, 1
      %p356 = scmp.eq.s32.totalorder %s24, 1
      %p357 = scmp.ne.s32.totalorder %s352, %s354
      %p358 = scmp.eq.s32.totalorder %s24, 0
      %p359 = por %p357, %p358
      %p360 = scmp.ne.s32.totalorder %s352, %s354
      %p361 = scmp.eq.s32.totalorder %s29, 1
      %p362 = por %p360, %p361
      %p363 = scmp.ne.s32.totalorder %s354, %s355
      %p364 = scmp.eq.s32.totalorder %s29, 0
      %p365 = por %p363, %p364
      %p366 = scmp.ne.s32.totalorder %s354, %s355
      %p367 = scmp.eq.s32.totalorder %s30, 1
      %p368 = por %p366, %p367
      %p370 = scmp.ne.s32.totalorder %s355, %s369
      %p371 = scmp.eq.s32.totalorder %s30, 0
      %p372 = por %p370, %p371
      %s374 = sadd.s32 %s373, 1
      %p377 = scmp.eq.s32.totalorder %s24, 1
      %p378 = scmp.ne.s32.totalorder %s373, %s375
      %p379 = scmp.eq.s32.totalorder %s24, 0
      %p380 = por %p378, %p379
      %p381 = scmp.ne.s32.totalorder %s373, %s375
      %p382 = scmp.eq.s32.totalorder %s29, 1
      %p383 = por %p381, %p382
      %p384 = scmp.ne.s32.totalorder %s375, %s376
      %p385 = scmp.eq.s32.totalorder %s29, 0
      %p386 = por %p384, %p385
      %p387 = scmp.ne.s32.totalorder %s375, %s376
      %p388 = scmp.eq.s32.totalorder %s30, 1
      %p389 = por %p387, %p388
      %p391 = scmp.ne.s32.totalorder %s376, %s390
      %p392 = scmp.eq.s32.totalorder %s30, 0
      %p393 = por %p391, %p392
      %s394 = ssub.s32 %s24, %s31
      %p395 = scmp.eq.s32.totalorder %s394, 0
      %s397 = sadd.s32 %s396, 1
      %s398 = scalar_select %p395, %s396, %s397
      %p401 = pneg %p395
      %p402 = scmp.eq.s32.totalorder %s24, 1
      %p403 = por %p401, %p402
      %p404 = scmp.ne.s32.totalorder %s396, %s399
      %p405 = scmp.eq.s32.totalorder %s24, 0
      %p406 = por %p404, %p405
      %p407 = scmp.ne.s32.totalorder %s396, %s399
      %p408 = scmp.eq.s32.totalorder %s29, 1
      %p409 = por %p407, %p408
      %p410 = scmp.ne.s32.totalorder %s399, %s400
      %p411 = scmp.eq.s32.totalorder %s29, 0
      %p412 = por %p410, %p411
      %p413 = scmp.ne.s32.totalorder %s399, %s400
      %p414 = scmp.eq.s32.totalorder %s30, 1
      %p415 = por %p413, %p414
      %p417 = scmp.ne.s32.totalorder %s400, %s416
      %p418 = scmp.eq.s32.totalorder %s30, 0
      %p419 = por %p417, %p418
      %p420 = scmp.le.s32.totalorder 1, %s24
      %p421 = scmp.lt.s32.totalorder %s24, 3
      %p422 = pnand %p420, %p421
      %p423 = pneg %p422
      // Predicated region
      $region9: #{inception_forward.1} parent=5 // pred_check
        _
      $region10: #{inception_forward.1} parent=5 // pred_check_branch
        %425 = sbr.rel (%p422) target = $region12
      $region11: #{inception_forward.1} parent=5 // pred_region
        %s426 = ssub.s32 %s24, 1
        // Predicated region
        $region13: #{inception_forward.1} parent=11 // pred_check
          %p427 = pneg %p71
        $region14: #{inception_forward.1} parent=11 // pred_check_branch
          %429 = sbr.rel (%p427) target = $region16
        $region15: #{inception_forward.1} parent=11 // pred_region
          _
        $region16: #{inception_forward.1} parent=11 // pred_fallthru
          _
        // Predicated region
        $region17: #{inception_forward.1} parent=11 // pred_check
          %p430 = pneg %p92
        $region18: #{inception_forward.1} parent=11 // pred_check_branch
          %432 = sbr.rel (%p430) target = $region20
        $region19: #{inception_forward.1} parent=11 // pred_region
          _
        $region20: #{inception_forward.1} parent=11 // pred_fallthru
          _
        // Predicated region
        $region21: #{inception_forward.1} parent=11 // pred_check
          %p433 = pneg %p113
        $region22: #{inception_forward.1} parent=11 // pred_check_branch
          %435 = sbr.rel (%p433) target = $region24
        $region23: #{inception_forward.1} parent=11 // pred_region
          _
        $region24: #{inception_forward.1} parent=11 // pred_fallthru
          _
        // Predicated region
        $region25: #{inception_forward.1} parent=11 // pred_check
          %p436 = pneg %p134
        $region26: #{inception_forward.1} parent=11 // pred_check_branch
          %438 = sbr.rel (%p436) target = $region28
        $region27: #{inception_forward.1} parent=11 // pred_region
          _
        $region28: #{inception_forward.1} parent=11 // pred_fallthru
          _
        // Predicated region
        $region29: #{inception_forward.1} parent=11 // pred_check
          %p439 = pneg %p155
        $region30: #{inception_forward.1} parent=11 // pred_check_branch
          %441 = sbr.rel (%p439) target = $region32
        $region31: #{inception_forward.1} parent=11 // pred_region
          _
        $region32: #{inception_forward.1} parent=11 // pred_fallthru
          _
        // Predicated region
        $region33: #{inception_forward.1} parent=11 // pred_check
          %p442 = pneg %p176
        $region34: #{inception_forward.1} parent=11 // pred_check_branch
          %444 = sbr.rel (%p442) target = $region36
        $region35: #{inception_forward.1} parent=11 // pred_region
          _
        $region36: #{inception_forward.1} parent=11 // pred_fallthru
          _
        // Predicated region
        $region37: #{inception_forward.1} parent=11 // pred_check
          %p445 = pneg %p197
        $region38: #{inception_forward.1} parent=11 // pred_check_branch
          %447 = sbr.rel (%p445) target = $region40
        $region39: #{inception_forward.1} parent=11 // pred_region
          _
        $region40: #{inception_forward.1} parent=11 // pred_fallthru
          _
        // Predicated region
        $region41: #{inception_forward.1} parent=11 // pred_check
          %p448 = pneg %p218
        $region42: #{inception_forward.1} parent=11 // pred_check_branch
          %450 = sbr.rel (%p448) target = $region44
        $region43: #{inception_forward.1} parent=11 // pred_region
          _
        $region44: #{inception_forward.1} parent=11 // pred_fallthru
          _
        // Predicated region
        $region45: #{inception_forward.1} parent=11 // pred_check
          %p451 = pneg %p239
        $region46: #{inception_forward.1} parent=11 // pred_check_branch
          %453 = sbr.rel (%p451) target = $region48
        $region47: #{inception_forward.1} parent=11 // pred_region
          _
        $region48: #{inception_forward.1} parent=11 // pred_fallthru
          _
        // Predicated region
        $region49: #{inception_forward.1} parent=11 // pred_check
          %p454 = pneg %p260
        $region50: #{inception_forward.1} parent=11 // pred_check_branch
          %456 = sbr.rel (%p454) target = $region52
        $region51: #{inception_forward.1} parent=11 // pred_region
          _
        $region52: #{inception_forward.1} parent=11 // pred_fallthru
          _
        // Predicated region
        $region53: #{inception_forward.1} parent=11 // pred_check
          %p457 = pneg %p281
        $region54: #{inception_forward.1} parent=11 // pred_check_branch
          %459 = sbr.rel (%p457) target = $region56
        $region55: #{inception_forward.1} parent=11 // pred_region
          _
        $region56: #{inception_forward.1} parent=11 // pred_fallthru
          _
        // Predicated region
        $region57: #{inception_forward.1} parent=11 // pred_check
          %p460 = pneg %p302
        $region58: #{inception_forward.1} parent=11 // pred_check_branch
          %462 = sbr.rel (%p460) target = $region60
        $region59: #{inception_forward.1} parent=11 // pred_region
          _
        $region60: #{inception_forward.1} parent=11 // pred_fallthru
          _
        // Predicated region
        $region61: #{inception_forward.1} parent=11 // pred_check
          %p463 = pneg %p323
        $region62: #{inception_forward.1} parent=11 // pred_check_branch
          %465 = sbr.rel (%p463) target = $region64
        $region63: #{inception_forward.1} parent=11 // pred_region
          _
        $region64: #{inception_forward.1} parent=11 // pred_fallthru
          _
        // Predicated region
        $region65: #{inception_forward.1} parent=11 // pred_check
          %p466 = pneg %p344
        $region66: #{inception_forward.1} parent=11 // pred_check_branch
          %468 = sbr.rel (%p466) target = $region68
        $region67: #{inception_forward.1} parent=11 // pred_region
          _
        $region68: #{inception_forward.1} parent=11 // pred_fallthru
          _
        // Predicated region
        $region69: #{inception_forward.1} parent=11 // pred_check
          %p469 = pneg %p365
        $region70: #{inception_forward.1} parent=11 // pred_check_branch
          %471 = sbr.rel (%p469) target = $region72
        $region71: #{inception_forward.1} parent=11 // pred_region
          %s473 = ssub.s32 896, 896
          %474 = vsyncadd [#allocation7], %s473
          %s475 = sshll.u32 [#allocation6], 4
          %s476 = int_to_ptr.vmem [resolvable:$true] %s475
          %481 = dma.hbm_to_vmem [thread:$0]  %s15, 896, %s476, [#allocation7], 128, 128, 8
        $region72: #{inception_forward.1} parent=11 // pred_fallthru
          _
        // Predicated region
        $region73: #{inception_forward.1} parent=11 // pred_check
          %p482 = pneg %p386
        $region74: #{inception_forward.1} parent=11 // pred_check_branch
          %484 = sbr.rel (%p482) target = $region76
        $region75: #{inception_forward.1} parent=11 // pred_region
          _
        $region76: #{inception_forward.1} parent=11 // pred_fallthru
          _
      $region12: #{inception_forward.1} parent=5 // pred_fallthru
        _
      %p485 = scmp.lt.s32.totalorder %s24, 2
      // Predicated region
      $region77: #{inception_forward.1} parent=5 // pred_check
        %p486 = pneg %p485
      $region78: #{inception_forward.1} parent=5 // pred_check_branch
        %488 = sbr.rel (%p486) target = $region80
      $region79: #{inception_forward.1} parent=5 // pred_region
        // Predicated region
        $region81: #{inception_forward.1} parent=79 // pred_check
          %p489 = pneg %p44
        $region82: #{inception_forward.1} parent=79 // pred_check_branch
          %491 = sbr.rel (%p489) target = $region84
        $region83: #{inception_forward.1} parent=79 // pred_region
          %p492 = scmp.lt.s32.totalorder %s24, 1
          %s493 = scalar_select %p492, %s24, 1
          %s494 = smul.addr %s493, 2
          %s495 = smul.addr %s494, 4
          %s496 = scalar_lea.vmem %s0, %s495
        $region84: #{inception_forward.1} parent=79 // pred_fallthru
          _
      $region80: #{inception_forward.1} parent=5 // pred_fallthru
        _
      %p497 = scmp.le.s32.totalorder 1, %s24
      %p498 = scmp.lt.s32.totalorder %s24, 3
      %p499 = pnand %p497, %p498
      %p500 = pneg %p499
      // Predicated region
      $region85: #{inception_forward.1} parent=5 // pred_check
        _
      $region86: #{inception_forward.1} parent=5 // pred_check_branch
        %502 = sbr.rel (%p499) target = $region88
      $region87: #{inception_forward.1} parent=5 // pred_region
        %s503 = ssub.s32 %s24, 1
        // Predicated region
        $region89: #{inception_forward.1} parent=87 // pred_check
          %p504 = pneg %p365
        $region90: #{inception_forward.1} parent=87 // pred_check_branch
          %506 = sbr.rel (%p504) target = $region92
        $region91: #{inception_forward.1} parent=87 // pred_region
          %507 = dma.done [#allocation7], 896
        $region92: #{inception_forward.1} parent=87 // pred_fallthru
          _
        %p508 = scmp.lt.s32.totalorder %s29, 1
        %s509 = scalar_select %p508, %s29, 1
        %s510 = smul.addr %s509, 2
        %s511 = smul.addr %s510, 4
        %s512 = scalar_lea.vmem %s0, %s511
        %p513 = pneg %p50
        %p514 = pneg %p47
        %p515 = pneg %p71
        %p516 = pneg %p68
        %p517 = pneg %p92
        %p518 = pneg %p89
        %p519 = pneg %p113
        %p520 = pneg %p110
        %p521 = pneg %p134
        %p522 = pneg %p131
        %p523 = pneg %p155
        %p524 = pneg %p152
        %p525 = pneg %p176
        %p526 = pneg %p173
        %p527 = pneg %p197
        %p528 = pneg %p194
        %p529 = pneg %p218
        %p530 = pneg %p215
        %p531 = pneg %p239
        %p532 = pneg %p236
        %p533 = pneg %p260
        %p534 = pneg %p257
        %p535 = pneg %p281
        %p536 = pneg %p278
        %p537 = pneg %p302
        %p538 = pneg %p299
        %p539 = pneg %p323
        %p540 = pneg %p320
        %p541 = pneg %p344
        %p542 = pneg %p341
        %p543 = pneg %p365
        %p544 = pneg %p362
        %p545 = pneg %p386
        %p546 = pneg %p383
        %p547 = pneg %p412
        %p548 = pneg %p409
        %p549 = scmp.lt.s32.totalorder %s29, 1
        %s550 = scalar_select %p549, %s29, 1
        %s551 = smul.addr %s550, 8
        %s552 = scalar_lea.vmem %s17, %s551
        %p553 = scmp.lt.s32.totalorder %s29, 1
        %s554 = scalar_select %p553, %s29, 1
        %s555 = smul.addr %s554, 2
        %s556 = smul.addr %s555, 4
        %s557 = scalar_lea.vmem %s0, %s556
        %p558 = scmp.lt.s32.totalorder %s29, 1
        %s559 = scalar_select %p558, %s29, 1
        %s560 = smul.addr %s559, 8
        %s561 = scalar_lea.vmem %s17, %s560
        %v563 = vld [vmem:[%s557] sm:$0xf]
        %s564 = scalar_lea.vmem %s557, 4
        %v565 = vld [vmem:[%s564] sm:$0xf]
        %v566 = vld [vmem:[%s1] sm:$0xf]
        %v567 = vld [vmem:[%s1 + $0x4] sm:$0xf]
        %v568 = vld [vmem:[%s1 + $0x8] sm:$0xf]
        %v569 = vld [vmem:[%s1 + $0xc] sm:$0xf]
        %v570 = vld [vmem:[%s1 + $0x10] sm:$0xf]
        %v571 = vld [vmem:[%s1 + $0x14] sm:$0xf]
        %v572 = vld [vmem:[%s1 + $0x18] sm:$0xf]
        %v573 = vld [vmem:[%s1 + $0x1c] sm:$0xf]
        %s574 = scalar_lea.vmem %s1, 32
        %v575 = vld [vmem:[%s574] sm:$0xf]
        %v576 = vld [vmem:[%s574 + $0x4] sm:$0xf]
        %v577 = vld [vmem:[%s574 + $0x8] sm:$0xf]
        %v578 = vld [vmem:[%s574 + $0xc] sm:$0xf]
        %v579 = vld [vmem:[%s574 + $0x10] sm:$0xf]
        %v580 = vld [vmem:[%s574 + $0x14] sm:$0xf]
        %v581 = vld [vmem:[%s574 + $0x18] sm:$0xf]
        %v582 = vld [vmem:[%s574 + $0x1c] sm:$0xf]
        %v591 = vunpack.c.l.b16 %v575
        %v592 = vunpack.c.l.b16 %v576
        %v593 = vunpack.c.l.b16 %v577
        %v594 = vunpack.c.l.b16 %v578
        %v595 = vunpack.c.l.b16 %v579
        %v596 = vunpack.c.l.b16 %v580
        %v597 = vunpack.c.l.b16 %v581
        %v598 = vunpack.c.l.b16 %v582
        %v599 = vpack.c.b16 %v592, %v591
        %v600 = vpack.c.b16 %v594, %v593
        %v601 = vpack.c.b16 %v596, %v595
        %v602 = vpack.c.b16 %v598, %v597
        %vm607 = vcmask 523264
        %v609 = vsel %vm607, %v565, 0
        %611 = vmatprep.subr.bf16.mxu0 0
        %612 = vmatpush1.bf16.msra.mxu0 %v599
        %613 = vmatprep.subr.bf16.mxu0 0
        %614 = vmatpush1.bf16.msra.mxu0 %v600
        %615 = vmatprep.subr.bf16.mxu0 0
        %616 = vmatpush1.bf16.msra.mxu0 %v601
        %617 = vmatprep.subr.bf16.mxu0 0
        %618 = vmatpush1.bf16.msra.mxu0 %v602
        %619 = vmatprep.subr.bf16.mxu0 0
        %620 = vmatpush1.bf16.msra.mxu0 0
        %621 = vmatprep.subr.bf16.mxu0 0
        %622 = vmatpush1.bf16.msra.mxu0 0
        %623 = vmatprep.subr.bf16.mxu0 0
        %624 = vmatpush1.bf16.msra.mxu0 0
        %625 = vmatprep.subr.bf16.mxu0 0
        %626 = vmatpush1.bf16.msra.mxu0 0
        %627 = vmatprep.subr.bf16.mxu0 0
        %628 = vmatpush1.bf16.msra.mxu0 0
        %629 = vmatprep.subr.bf16.mxu0 0
        %630 = vmatpush1.bf16.msra.mxu0 0
        %631 = vmatprep.subr.bf16.mxu0 0
        %632 = vmatpush1.bf16.msra.mxu0 0
        %633 = vmatprep.subr.bf16.mxu0 0
        %634 = vmatpush1.bf16.msra.mxu0 0
        %635 = vmatprep.subr.bf16.mxu0 0
        %636 = vmatpush1.bf16.msra.mxu0 0
        %637 = vmatprep.subr.bf16.mxu0 0
        %638 = vmatpush1.bf16.msra.mxu0 0
        %639 = vmatprep.subr.bf16.mxu0 0
        %640 = vmatpush1.bf16.msra.mxu0 0
        %641 = vmatprep.subr.bf16.mxu0 0
        %642 = vmatpush1.bf16.msra.mxu0 0
        %643 = vmatprep.mubr.bf16.mxu0 0
        %644 = vmatmul.mubr.bf16.gmra.mrb[0].mxu0 %v609
        %v645 = vpop.f32.mrb[0].mxu0
        %v646 = vadd.f32 0.0, %v645
        %v647 = vpop.f32.mrb[0].mxu0
        %v648 = vpop.f32.mrb[0].mxu0
        %v649 = vpop.f32.mrb[0].mxu0
        %650 = vdwg.mxu0
        %v659 = vunpack.c.l.b16 %v566
        %v660 = vunpack.c.l.b16 %v567
        %v661 = vunpack.c.l.b16 %v568
        %v662 = vunpack.c.l.b16 %v569
        %v663 = vunpack.c.l.b16 %v570
        %v664 = vunpack.c.l.b16 %v571
        %v665 = vunpack.c.l.b16 %v572
        %v666 = vunpack.c.l.b16 %v573
        %v667 = vpack.c.b16 %v660, %v659
        %v668 = vpack.c.b16 %v662, %v661
        %v669 = vpack.c.b16 %v664, %v663
        %v670 = vpack.c.b16 %v666, %v665
        %v676 = vsel %vm607, %v563, 0
        %678 = vmatprep.subr.bf16.mxu0 0
        %679 = vmatpush1.bf16.msra.mxu0 %v667
        %680 = vmatprep.subr.bf16.mxu0 0
        %681 = vmatpush1.bf16.msra.mxu0 %v668
        %682 = vmatprep.subr.bf16.mxu0 0
        %683 = vmatpush1.bf16.msra.mxu0 %v669
        %684 = vmatprep.subr.bf16.mxu0 0
        %685 = vmatpush1.bf16.msra.mxu0 %v670
        %686 = vmatprep.subr.bf16.mxu0 0
        %687 = vmatpush1.bf16.msra.mxu0 0
        %688 = vmatprep.subr.bf16.mxu0 0
        %689 = vmatpush1.bf16.msra.mxu0 0
        %690 = vmatprep.subr.bf16.mxu0 0
        %691 = vmatpush1.bf16.msra.mxu0 0
        %692 = vmatprep.subr.bf16.mxu0 0
        %693 = vmatpush1.bf16.msra.mxu0 0
        %694 = vmatprep.subr.bf16.mxu0 0
        %695 = vmatpush1.bf16.msra.mxu0 0
        %696 = vmatprep.subr.bf16.mxu0 0
        %697 = vmatpush1.bf16.msra.mxu0 0
        %698 = vmatprep.subr.bf16.mxu0 0
        %699 = vmatpush1.bf16.msra.mxu0 0
        %700 = vmatprep.subr.bf16.mxu0 0
        %701 = vmatpush1.bf16.msra.mxu0 0
        %702 = vmatprep.subr.bf16.mxu0 0
        %703 = vmatpush1.bf16.msra.mxu0 0
        %704 = vmatprep.subr.bf16.mxu0 0
        %705 = vmatpush1.bf16.msra.mxu0 0
        %706 = vmatprep.subr.bf16.mxu0 0
        %707 = vmatpush1.bf16.msra.mxu0 0
        %708 = vmatprep.subr.bf16.mxu0 0
        %709 = vmatpush1.bf16.msra.mxu0 0
        %710 = vmatprep.mubr.bf16.mxu0 0
        %711 = vmatmul.mubr.bf16.gmra.mrb[0].mxu0 %v676
        %v712 = vpop.f32.mrb[0].mxu0
        %v713 = vadd.f32 %v646, %v712
        %v714 = vpop.f32.mrb[0].mxu0
        %v715 = vpop.f32.mrb[0].mxu0
        %v716 = vpop.f32.mrb[0].mxu0
        %717 = vdwg.mxu0
        %s718 = scalar_lea.vmem %s1, 64
        %v719 = vld [vmem:[%s718] sm:$0xf]
        %v720 = vld [vmem:[%s718 + $0x4] sm:$0xf]
        %v721 = vld [vmem:[%s718 + $0x8] sm:$0xf]
        %v722 = vld [vmem:[%s718 + $0xc] sm:$0xf]
        %v723 = vld [vmem:[%s718 + $0x10] sm:$0xf]
        %v724 = vld [vmem:[%s718 + $0x14] sm:$0xf]
        %v725 = vld [vmem:[%s718 + $0x18] sm:$0xf]
        %v726 = vld [vmem:[%s718 + $0x1c] sm:$0xf]
        %v728 = vunpack.c.l.b16 %v563
        %v729 = vpack.c.b16 %v728, %v728
        %v731 = vshrl.u32 %v729, 16
        %v733 = vshll.u32 %v729, 16
        %v735 = vrot.slane %v733, 1
        %v736 = vor.u32 %v731, %v735
        %v745 = vunpack.c.l.b16 %v719
        %v746 = vunpack.c.l.b16 %v720
        %v747 = vunpack.c.l.b16 %v721
        %v748 = vunpack.c.l.b16 %v722
        %v749 = vunpack.c.l.b16 %v723
        %v750 = vunpack.c.l.b16 %v724
        %v751 = vunpack.c.l.b16 %v725
        %v752 = vunpack.c.l.b16 %v726
        %v753 = vpack.c.b16 %v746, %v745
        %v754 = vpack.c.b16 %v748, %v747
        %v755 = vpack.c.b16 %v750, %v749
        %v756 = vpack.c.b16 %v752, %v751
        %v762 = vsel %vm607, %v736, 0
        %764 = vmatprep.subr.bf16.mxu0 0
        %765 = vmatpush1.bf16.msra.mxu0 %v753
        %766 = vmatprep.subr.bf16.mxu0 0
        %767 = vmatpush1.bf16.msra.mxu0 %v754
        %768 = vmatprep.subr.bf16.mxu0 0
        %769 = vmatpush1.bf16.msra.mxu0 %v755
        %770 = vmatprep.subr.bf16.mxu0 0
        %771 = vmatpush1.bf16.msra.mxu0 %v756
        %772 = vmatprep.subr.bf16.mxu0 0
        %773 = vmatpush1.bf16.msra.mxu0 0
        %774 = vmatprep.subr.bf16.mxu0 0
        %775 = vmatpush1.bf16.msra.mxu0 0
        %776 = vmatprep.subr.bf16.mxu0 0
        %777 = vmatpush1.bf16.msra.mxu0 0
        %778 = vmatprep.subr.bf16.mxu0 0
        %779 = vmatpush1.bf16.msra.mxu0 0
        %780 = vmatprep.subr.bf16.mxu0 0
        %781 = vmatpush1.bf16.msra.mxu0 0
        %782 = vmatprep.subr.bf16.mxu0 0
        %783 = vmatpush1.bf16.msra.mxu0 0
        %784 = vmatprep.subr.bf16.mxu0 0
        %785 = vmatpush1.bf16.msra.mxu0 0
        %786 = vmatprep.subr.bf16.mxu0 0
        %787 = vmatpush1.bf16.msra.mxu0 0
        %788 = vmatprep.subr.bf16.mxu0 0
        %789 = vmatpush1.bf16.msra.mxu0 0
        %790 = vmatprep.subr.bf16.mxu0 0
        %791 = vmatpush1.bf16.msra.mxu0 0
        %792 = vmatprep.subr.bf16.mxu0 0
        %793 = vmatpush1.bf16.msra.mxu0 0
        %794 = vmatprep.subr.bf16.mxu0 0
        %795 = vmatpush1.bf16.msra.mxu0 0
        %796 = vmatprep.mubr.bf16.mxu0 0
        %797 = vmatmul.mubr.bf16.gmra.mrb[0].mxu0 %v762
        %v798 = vpop.f32.mrb[0].mxu0
        %v799 = vadd.f32 0.0, %v798
        %v800 = vpop.f32.mrb[0].mxu0
        %v801 = vpop.f32.mrb[0].mxu0
        %v802 = vpop.f32.mrb[0].mxu0
        %803 = vdwg.mxu0
        %v804 = vadd.f32 %v713, %v799
        %v805 = vld [vmem:[%s2] sm:$0x1]
        %v807 = vlaneseq
        %v808 = vshrl.u32 %v807, 7
        %v809 = vsub.s32 0, %v808
        %v810 = vrot.slane %v805, %v809
        %v812 = vadd.f32 %v804, %v810
        %v813 = vmax.f32 %v812, 0.0
        %v814 = vpack.c.bf16 %v813, %v813
        %v815 = vld [vmem:[%s3] sm:$0xff]
        %v816 = vld [vmem:[%s3 + $0x8] sm:$0xff]
        %v817 = vld [vmem:[%s3 + $0x10] sm:$0xff]
        %v818 = vld [vmem:[%s3 + $0x18] sm:$0xff]
        %v819 = vld [vmem:[%s3 + $0x20] sm:$0xff]
        %v820 = vld [vmem:[%s3 + $0x28] sm:$0xff]
        %v821 = vld [vmem:[%s3 + $0x30] sm:$0xff]
        %v822 = vld [vmem:[%s3 + $0x38] sm:$0xff]
        %v823 = vld [vmem:[%s3 + $0x40] sm:$0xff]
        %v824 = vld [vmem:[%s3 + $0x48] sm:$0xff]
        %v825 = vld [vmem:[%s3 + $0x50] sm:$0xff]
        %v826 = vld [vmem:[%s3 + $0x58] sm:$0xff]
        %v827 = vld [vmem:[%s3 + $0x60] sm:$0xff]
        %v828 = vld [vmem:[%s3 + $0x68] sm:$0xff]
        %v829 = vld [vmem:[%s3 + $0x70] sm:$0xff]
        %v830 = vld [vmem:[%s3 + $0x78] sm:$0xff]
        %v831 = vld [vmem:[%s3 + $0x80] sm:$0xff]
        %v832 = vld [vmem:[%s3 + $0x88] sm:$0xff]
        %v833 = vld [vmem:[%s3 + $0x90] sm:$0xff]
        %v834 = vld [vmem:[%s3 + $0x98] sm:$0xff]
        %v835 = vld [vmem:[%s3 + $0xa0] sm:$0xff]
        %v836 = vld [vmem:[%s3 + $0xa8] sm:$0xff]
        %v837 = vld [vmem:[%s3 + $0xb0] sm:$0xff]
        %v838 = vld [vmem:[%s3 + $0xb8] sm:$0xff]
        %v839 = vld [vmem:[%s3 + $0xc0] sm:$0xff]
        %v840 = vld [vmem:[%s3 + $0xc8] sm:$0xff]
        %v841 = vld [vmem:[%s3 + $0xd0] sm:$0xff]
        %v842 = vld [vmem:[%s3 + $0xd8] sm:$0xff]
        %v843 = vld [vmem:[%s4] sm:$0xf]
        %v845 = vlaneseq
        %v846 = vshrl.u32 %v845, 7
        %v847 = vsub.s32 0, %v846
        %v848 = vrot.slane %v843, %v847
        %v849 = vlaneseq
        %v850 = vshrl.u32 %v849, 7
        %v851 = vsub.s32 1, %v850
        %v852 = vrot.slane %v843, %v851
        %v853 = vlaneseq
        %v854 = vshrl.u32 %v853, 7
        %v855 = vsub.s32 2, %v854
        %v856 = vrot.slane %v843, %v855
        %v857 = vlaneseq
        %v858 = vshrl.u32 %v857, 7
        %v859 = vsub.s32 3, %v858
        %v860 = vrot.slane %v843, %v859
        %v893 = vunpack.c.l.b16 %v815
        %v894 = vunpack.c.h.b16 %v815
        %v895 = vunpack.c.l.b16 %v816
        %v896 = vunpack.c.h.b16 %v816
        %v897 = vunpack.c.l.b16 %v817
        %v898 = vunpack.c.h.b16 %v817
        %v899 = vunpack.c.l.b16 %v818
        %v900 = vunpack.c.h.b16 %v818
        %v901 = vunpack.c.l.b16 %v819
        %v902 = vunpack.c.h.b16 %v819
        %v903 = vunpack.c.l.b16 %v820
        %v904 = vunpack.c.h.b16 %v820
        %v905 = vunpack.c.l.b16 %v821
        %v906 = vunpack.c.h.b16 %v821
        %v907 = vunpack.c.l.b16 %v822
        %v908 = vunpack.c.h.b16 %v822
        %v909 = vunpack.c.l.b16 %v823
        %v910 = vunpack.c.h.b16 %v823
        %v911 = vunpack.c.l.b16 %v824
        %v912 = vunpack.c.h.b16 %v824
        %v913 = vunpack.c.l.b16 %v825
        %v914 = vunpack.c.h.b16 %v825
        %v915 = vunpack.c.l.b16 %v826
        %v916 = vunpack.c.h.b16 %v826
        %v917 = vunpack.c.l.b16 %v827
        %v918 = vunpack.c.h.b16 %v827
        %v919 = vunpack.c.l.b16 %v828
        %v920 = vunpack.c.h.b16 %v828
        %v921 = vunpack.c.l.b16 %v829
        %v922 = vunpack.c.h.b16 %v829
        %v923 = vunpack.c.l.b16 %v830
        %v924 = vunpack.c.h.b16 %v830
        %v925 = vunpack.c.l.b16 %v831
        %v926 = vunpack.c.h.b16 %v831
        %v927 = vunpack.c.l.b16 %v832
        %v928 = vunpack.c.h.b16 %v832
        %v929 = vunpack.c.l.b16 %v833
        %v930 = vunpack.c.h.b16 %v833
        %v931 = vunpack.c.l.b16 %v834
        %v932 = vunpack.c.h.b16 %v834
        %v933 = vunpack.c.l.b16 %v835
        %v934 = vunpack.c.h.b16 %v835
        %v935 = vunpack.c.l.b16 %v836
        %v936 = vunpack.c.h.b16 %v836
        %v937 = vunpack.c.l.b16 %v837
        %v938 = vunpack.c.h.b16 %v837
        %v939 = vunpack.c.l.b16 %v838
        %v940 = vunpack.c.h.b16 %v838
        %v941 = vunpack.c.l.b16 %v839
        %v942 = vunpack.c.h.b16 %v839
        %v943 = vunpack.c.l.b16 %v840
        %v944 = vunpack.c.h.b16 %v840
        %v945 = vunpack.c.l.b16 %v841
        %v946 = vunpack.c.h.b16 %v841
        %v947 = vunpack.c.l.b16 %v842
        %v948 = vunpack.c.h.b16 %v842
        %v949 = vpack.c.b16 %v897, %v893
        %v950 = vpack.c.b16 %v898, %v894
        %v951 = vpack.c.b16 %v899, %v895
        %v952 = vpack.c.b16 %v900, %v896
        %v953 = vpack.c.b16 %v905, %v901
        %v954 = vpack.c.b16 %v906, %v902
        %v955 = vpack.c.b16 %v907, %v903
        %v956 = vpack.c.b16 %v908, %v904
        %v957 = vpack.c.b16 %v913, %v909
        %v958 = vpack.c.b16 %v914, %v910
        %v959 = vpack.c.b16 %v915, %v911
        %v960 = vpack.c.b16 %v916, %v912
        %v961 = vpack.c.b16 %v921, %v917
        %v962 = vpack.c.b16 %v922, %v918
        %v963 = vpack.c.b16 %v923, %v919
        %v964 = vpack.c.b16 %v924, %v920
        %v965 = vpack.c.b16 %v929, %v925
        %v966 = vpack.c.b16 %v930, %v926
        %v967 = vpack.c.b16 %v931, %v927
        %v968 = vpack.c.b16 %v932, %v928
        %v969 = vpack.c.b16 %v937, %v933
        %v970 = vpack.c.b16 %v938, %v934
        %v971 = vpack.c.b16 %v939, %v935
        %v972 = vpack.c.b16 %v940, %v936
        %v973 = vpack.c.b16 %v945, %v941
        %v974 = vpack.c.b16 %v946, %v942
        %v975 = vpack.c.b16 %v947, %v943
        %v976 = vpack.c.b16 %v948, %v944
        %vm1005 = vcmask 916480
        %v1007 = vsel %vm1005, %v814, 0
        %1009 = vmatprep.subr.bf16.mxu0 %v950
        %1010 = vmatpush1.bf16.msra.mxu0 %v949
        %1011 = vmatprep.subr.bf16.mxu0 %v954
        %1012 = vmatpush1.bf16.msra.mxu0 %v953
        %1013 = vmatprep.subr.bf16.mxu0 %v958
        %1014 = vmatpush1.bf16.msra.mxu0 %v957
        %1015 = vmatprep.subr.bf16.mxu0 %v962
        %1016 = vmatpush1.bf16.msra.mxu0 %v961
        %1017 = vmatprep.subr.bf16.mxu0 %v966
        %1018 = vmatpush1.bf16.msra.mxu0 %v965
        %1019 = vmatprep.subr.bf16.mxu0 %v970
        %1020 = vmatpush1.bf16.msra.mxu0 %v969
        %1021 = vmatprep.subr.bf16.mxu0 %v974
        %1022 = vmatpush1.bf16.msra.mxu0 %v973
        %1023 = vmatprep.subr.bf16.mxu0 0
        %1024 = vmatpush1.bf16.msra.mxu0 0
        %1025 = vmatprep.subr.bf16.mxu0 0
        %1026 = vmatpush1.bf16.msra.mxu0 0
        %1027 = vmatprep.subr.bf16.mxu0 0
        %1028 = vmatpush1.bf16.msra.mxu0 0
        %1029 = vmatprep.subr.bf16.mxu0 0
        %1030 = vmatpush1.bf16.msra.mxu0 0
        %1031 = vmatprep.subr.bf16.mxu0 0
        %1032 = vmatpush1.bf16.msra.mxu0 0
        %1033 = vmatprep.subr.bf16.mxu0 0
        %1034 = vmatpush1.bf16.msra.mxu0 0
        %1035 = vmatprep.subr.bf16.mxu0 0
        %1036 = vmatpush1.bf16.msra.mxu0 0
        %1037 = vmatprep.subr.bf16.mxu0 0
        %1038 = vmatpush1.bf16.msra.mxu0 0
        %1039 = vmatprep.subr.bf16.mxu0 0
        %1040 = vmatpush1.bf16.msra.mxu0 0
        %1041 = vmatprep.mubr.bf16.mxu0 0
        %1042 = vmatmul.mubr.bf16.gmra.mrb[0].mxu0 %v1007
        %v1043 = vpop.f32.mrb[0].mxu0
        %v1044 = vadd.f32 %v848, %v1043
        %v1045 = vpop.f32.mrb[0].mxu0
        %v1046 = vadd.f32 %v852, %v1045
        %v1047 = vpop.f32.mrb[0].mxu0
        %v1048 = vpop.f32.mrb[0].mxu0
        %1049 = vdwg.mxu0
        %1050 = vmatprep.subr.bf16.mxu0 %v952
        %1051 = vmatpush1.bf16.msra.mxu0 %v951
        %1052 = vmatprep.subr.bf16.mxu0 %v956
        %1053 = vmatpush1.bf16.msra.mxu0 %v955
        %1054 = vmatprep.subr.bf16.mxu0 %v960
        %1055 = vmatpush1.bf16.msra.mxu0 %v959
        %1056 = vmatprep.subr.bf16.mxu0 %v964
        %1057 = vmatpush1.bf16.msra.mxu0 %v963
        %1058 = vmatprep.subr.bf16.mxu0 %v968
        %1059 = vmatpush1.bf16.msra.mxu0 %v967
        %1060 = vmatprep.subr.bf16.mxu0 %v972
        %1061 = vmatpush1.bf16.msra.mxu0 %v971
        %1062 = vmatprep.subr.bf16.mxu0 %v976
        %1063 = vmatpush1.bf16.msra.mxu0 %v975
        %1064 = vmatprep.subr.bf16.mxu0 0
        %1065 = vmatpush1.bf16.msra.mxu0 0
        %1066 = vmatprep.subr.bf16.mxu0 0
        %1067 = vmatpush1.bf16.msra.mxu0 0
        %1068 = vmatprep.subr.bf16.mxu0 0
        %1069 = vmatpush1.bf16.msra.mxu0 0
        %1070 = vmatprep.subr.bf16.mxu0 0
        %1071 = vmatpush1.bf16.msra.mxu0 0
        %1072 = vmatprep.subr.bf16.mxu0 0
        %1073 = vmatpush1.bf16.msra.mxu0 0
        %1074 = vmatprep.subr.bf16.mxu0 0
        %1075 = vmatpush1.bf16.msra.mxu0 0
        %1076 = vmatprep.subr.bf16.mxu0 0
        %1077 = vmatpush1.bf16.msra.mxu0 0
        %1078 = vmatprep.subr.bf16.mxu0 0
        %1079 = vmatpush1.bf16.msra.mxu0 0
        %1080 = vmatprep.subr.bf16.mxu0 0
        %1081 = vmatpush1.bf16.msra.mxu0 0
        %1082 = vmatprep.mubr.bf16.mxu0 0
        %1083 = vmatmul.mubr.bf16.gmra.mrb[0].mxu0 %v1007
        %v1084 = vpop.f32.mrb[0].mxu0
        %v1085 = vadd.f32 %v856, %v1084
        %v1086 = vpop.f32.mrb[0].mxu0
        %v1087 = vadd.f32 %v860, %v1086
        %v1088 = vpop.f32.mrb[0].mxu0
        %v1089 = vpop.f32.mrb[0].mxu0
        %1090 = vdwg.mxu0
        %v1091 = vmax.f32 %v1044, 0.0
        %v1092 = vmax.f32 %v1046, 0.0
        %v1093 = vmax.f32 %v1085, 0.0
        %1094 = vst [vmem:[#allocation2] sm:$0xff] 0.0
        %vm1095 = vcmask 31744
        %1096 = vst.msk [vmem:[#allocation2 + $0x8] sm:$0xff] %vm1095, 0.0
        %1097 = vst [vmem:[#allocation2 + $0x10] sm:$0x7] 0.0
        %vm1098 = vcmask 26624
        %1099 = vst.msk [vmem:[#allocation2 + $0x18] sm:$0x7] %vm1098, 0.0
        %v1101 = vrot.slane %v1092, 6
        %1102 = vrot.lane.b32.xlu0 %v1101, 24
        %v1103 = vpop.permute.xlu0 %1102
        %vm1105 = vcmask 883906
        %1106 = vst.msk [vmem:[#allocation2] sm:$0xfc] %vm1105, %v1103
        %vm1107 = vcmask 876736
        %1108 = vst.msk [vmem:[#allocation2 + $0x10] sm:$0x1] %vm1107, %v1103
        %v1109 = vld [vmem:[#allocation2] sm:$0x7f]
        %v1110 = vld [vmem:[#allocation2 + $0x8] sm:$0x7f]
        %v1111 = vpack.c.bf16 %v1109, %v1109
        %v1112 = vpack.c.bf16 %v1110, %v1110
        %v1113 = vld [vmem:[%s5] sm:$0xf]
        %v1114 = vld [vmem:[%s5 + $0x4] sm:$0xf]
        %v1115 = vld [vmem:[%s5 + $0x8] sm:$0xf]
        %v1116 = vld [vmem:[%s5 + $0xc] sm:$0xf]
        %v1117 = vld [vmem:[%s5 + $0x10] sm:$0xf]
        %v1118 = vld [vmem:[%s5 + $0x14] sm:$0xf]
        %v1119 = vld [vmem:[%s5 + $0x18] sm:$0xf]
        %v1120 = vld [vmem:[%s5 + $0x1c] sm:$0xf]
        %v1121 = vld [vmem:[%s5 + $0x20] sm:$0xf]
        %v1122 = vld [vmem:[%s5 + $0x24] sm:$0xf]
        %v1123 = vld [vmem:[%s5 + $0x28] sm:$0xf]
        %v1124 = vld [vmem:[%s5 + $0x2c] sm:$0xf]
        %v1125 = vld [vmem:[%s5 + $0x30] sm:$0xf]
        %v1126 = vld [vmem:[%s5 + $0x34] sm:$0xf]
        %v1127 = vld [vmem:[%s5 + $0x38] sm:$0xf]
        %v1128 = vld [vmem:[%s5 + $0x3c] sm:$0xf]
        %v1129 = vld [vmem:[%s5 + $0x40] sm:$0x3]
        %v1130 = vld [vmem:[#allocation2] sm:$0xfe]
        %v1131 = vld [vmem:[#allocation2 + $0x8] sm:$0xfe]
        %v1132 = vpack.c.bf16 %v1130, %v1130
        %v1133 = vpack.c.bf16 %v1131, %v1131
        %s1134 = scalar_lea.vmem %s5, 68
        %v1135 = vld [vmem:[%s1134] sm:$0xf]
        %v1136 = vld [vmem:[%s1134 + $0x4] sm:$0xf]
        %v1137 = vld [vmem:[%s1134 + $0x8] sm:$0xf]
        %v1138 = vld [vmem:[%s1134 + $0xc] sm:$0xf]
        %v1139 = vld [vmem:[%s1134 + $0x10] sm:$0xf]
        %v1140 = vld [vmem:[%s1134 + $0x14] sm:$0xf]
        %v1141 = vld [vmem:[%s1134 + $0x18] sm:$0xf]
        %v1142 = vld [vmem:[%s1134 + $0x1c] sm:$0xf]
        %v1143 = vld [vmem:[%s1134 + $0x20] sm:$0xf]
        %v1144 = vld [vmem:[%s1134 + $0x24] sm:$0xf]
        %v1145 = vld [vmem:[%s1134 + $0x28] sm:$0xf]
        %v1146 = vld [vmem:[%s1134 + $0x2c] sm:$0xf]
        %v1147 = vld [vmem:[%s1134 + $0x30] sm:$0xf]
        %v1148 = vld [vmem:[%s1134 + $0x34] sm:$0xf]
        %v1149 = vld [vmem:[%s1134 + $0x38] sm:$0xf]
        %v1150 = vld [vmem:[%s1134 + $0x3c] sm:$0xf]
        %v1151 = vld [vmem:[%s1134 + $0x40] sm:$0x3]
        %v1153 = vshrl.u32 %v1132, 16
        %v1155 = vshll.u32 %v1132, 16
        %v1157 = vrot.slane %v1155, 1
        %v1158 = vor.u32 %v1153, %v1157
        %v1160 = vshrl.u32 %v1133, 16
        %v1162 = vshll.u32 %v1133, 16
        %v1164 = vrot.slane %v1162, 1
        %v1165 = vor.u32 %v1160, %v1164
        %v1184 = vunpack.c.l.b16 %v1135
        %v1185 = vunpack.c.l.b16 %v1136
        %v1186 = vunpack.c.l.b16 %v1137
        %v1187 = vunpack.c.l.b16 %v1138
        %v1188 = vunpack.c.l.b16 %v1139
        %v1189 = vunpack.c.l.b16 %v1140
        %v1190 = vunpack.c.l.b16 %v1141
        %v1191 = vunpack.c.l.b16 %v1142
        %v1192 = vunpack.c.l.b16 %v1143
        %v1193 = vunpack.c.l.b16 %v1144
        %v1194 = vunpack.c.l.b16 %v1145
        %v1195 = vunpack.c.l.b16 %v1146
        %v1196 = vunpack.c.l.b16 %v1147
        %v1197 = vunpack.c.l.b16 %v1148
        %v1198 = vunpack.c.l.b16 %v1149
        %v1199 = vunpack.c.l.b16 %v1150
        %v1200 = vunpack.c.l.b16 %v1151
        %v1201 = vpack.c.b16 %v1185, %v1184
        %v1202 = vpack.c.b16 %v1187, %v1186
        %v1203 = vpack.c.b16 %v1189, %v1188
        %v1204 = vpack.c.b16 %v1191, %v1190
        %v1205 = vpack.c.b16 %v1193, %v1192
        %v1206 = vpack.c.b16 %v1195, %v1194
        %v1207 = vpack.c.b16 %v1197, %v1196
        %v1208 = vpack.c.b16 %v1199, %v1198
        %v1209 = vpack.c.b16 %v1200, %v1200
        %v1219 = vsel %vm1095, %v1165, 0
        %vm1221 = vcmask 1041408
        %v1223 = vsel %vm1221, %v1209, 0
        %1225 = vmatprep.subr.bf16.mxu0 0
        %1226 = vmatpush1.bf16.msra.mxu0 %v1201
        %1227 = vmatprep.subr.bf16.mxu0 0
        %1228 = vmatpush1.bf16.msra.mxu0 %v1202
        %1229 = vmatprep.subr.bf16.mxu0 0
        %1230 = vmatpush1.bf16.msra.mxu0 %v1203
        %1231 = vmatprep.subr.bf16.mxu0 0
        %1232 = vmatpush1.bf16.msra.mxu0 %v1204
        %1233 = vmatprep.subr.bf16.mxu0 0
        %1234 = vmatpush1.bf16.msra.mxu0 %v1205
        %1235 = vmatprep.subr.bf16.mxu0 0
        %1236 = vmatpush1.bf16.msra.mxu0 %v1206
        %1237 = vmatprep.subr.bf16.mxu0 0
        %1238 = vmatpush1.bf16.msra.mxu0 %v1207
        %1239 = vmatprep.subr.bf16.mxu0 0
        %1240 = vmatpush1.bf16.msra.mxu0 %v1208
        %1241 = vmatprep.subr.bf16.mxu0 0
        %1242 = vmatpush1.bf16.msra.mxu0 %v1223
        %1243 = vmatprep.subr.bf16.mxu0 0
        %1244 = vmatpush1.bf16.msra.mxu0 0
        %1245 = vmatprep.subr.bf16.mxu0 0
        %1246 = vmatpush1.bf16.msra.mxu0 0
        %1247 = vmatprep.subr.bf16.mxu0 0
        %1248 = vmatpush1.bf16.msra.mxu0 0
        %1249 = vmatprep.subr.bf16.mxu0 0
        %1250 = vmatpush1.bf16.msra.mxu0 0
        %1251 = vmatprep.subr.bf16.mxu0 0
        %1252 = vmatpush1.bf16.msra.mxu0 0
        %1253 = vmatprep.subr.bf16.mxu0 0
        %1254 = vmatpush1.bf16.msra.mxu0 0
        %1255 = vmatprep.subr.bf16.mxu0 0
        %1256 = vmatpush1.bf16.msra.mxu0 0
        %1257 = vmatprep.mubr.bf16.mxu0 %v1219
        %1258 = vmatmul.mubr.bf16.gmra.mrb[0].mxu0 %v1158
        %v1259 = vpop.f32.mrb[0].mxu0
        %v1260 = vadd.f32 0.0, %v1259
        %v1261 = vpop.f32.mrb[0].mxu0
        %v1262 = vpop.f32.mrb[0].mxu0
        %v1263 = vpop.f32.mrb[0].mxu0
        %1264 = vdwg.mxu0
        %v1282 = vunpack.c.l.b16 %v1113
        %v1283 = vunpack.c.l.b16 %v1114
        %v1284 = vunpack.c.l.b16 %v1115
        %v1285 = vunpack.c.l.b16 %v1116
        %v1286 = vunpack.c.l.b16 %v1117
        %v1287 = vunpack.c.l.b16 %v1118
        %v1288 = vunpack.c.l.b16 %v1119
        %v1289 = vunpack.c.l.b16 %v1120
        %v1290 = vunpack.c.l.b16 %v1121
        %v1291 = vunpack.c.l.b16 %v1122
        %v1292 = vunpack.c.l.b16 %v1123
        %v1293 = vunpack.c.l.b16 %v1124
        %v1294 = vunpack.c.l.b16 %v1125
        %v1295 = vunpack.c.l.b16 %v1126
        %v1296 = vunpack.c.l.b16 %v1127
        %v1297 = vunpack.c.l.b16 %v1128
        %v1298 = vunpack.c.l.b16 %v1129
        %v1299 = vpack.c.b16 %v1283, %v1282
        %v1300 = vpack.c.b16 %v1285, %v1284
        %v1301 = vpack.c.b16 %v1287, %v1286
        %v1302 = vpack.c.b16 %v1289, %v1288
        %v1303 = vpack.c.b16 %v1291, %v1290
        %v1304 = vpack.c.b16 %v1293, %v1292
        %v1305 = vpack.c.b16 %v1295, %v1294
        %v1306 = vpack.c.b16 %v1297, %v1296
        %v1307 = vpack.c.b16 %v1298, %v1298
        %v1317 = vsel %vm1095, %v1112, 0
        %v1320 = vsel %vm1221, %v1307, 0
        %1322 = vmatprep.subr.bf16.mxu0 0
        %1323 = vmatpush1.bf16.msra.mxu0 %v1299
        %1324 = vmatprep.subr.bf16.mxu0 0
        %1325 = vmatpush1.bf16.msra.mxu0 %v1300
        %1326 = vmatprep.subr.bf16.mxu0 0
        %1327 = vmatpush1.bf16.msra.mxu0 %v1301
        %1328 = vmatprep.subr.bf16.mxu0 0
        %1329 = vmatpush1.bf16.msra.mxu0 %v1302
        %1330 = vmatprep.subr.bf16.mxu0 0
        %1331 = vmatpush1.bf16.msra.mxu0 %v1303
        %1332 = vmatprep.subr.bf16.mxu0 0
        %1333 = vmatpush1.bf16.msra.mxu0 %v1304
        %1334 = vmatprep.subr.bf16.mxu0 0
        %1335 = vmatpush1.bf16.msra.mxu0 %v1305
        %1336 = vmatprep.subr.bf16.mxu0 0
        %1337 = vmatpush1.bf16.msra.mxu0 %v1306
        %1338 = vmatprep.subr.bf16.mxu0 0
        %1339 = vmatpush1.bf16.msra.mxu0 %v1320
        %1340 = vmatprep.subr.bf16.mxu0 0
        %1341 = vmatpush1.bf16.msra.mxu0 0
        %1342 = vmatprep.subr.bf16.mxu0 0
        %1343 = vmatpush1.bf16.msra.mxu0 0
        %1344 = vmatprep.subr.bf16.mxu0 0
        %1345 = vmatpush1.bf16.msra.mxu0 0
        %1346 = vmatprep.subr.bf16.mxu0 0
        %1347 = vmatpush1.bf16.msra.mxu0 0
        %1348 = vmatprep.subr.bf16.mxu0 0
        %1349 = vmatpush1.bf16.msra.mxu0 0
        %1350 = vmatprep.subr.bf16.mxu0 0
        %1351 = vmatpush1.bf16.msra.mxu0 0
        %1352 = vmatprep.subr.bf16.mxu0 0
        %1353 = vmatpush1.bf16.msra.mxu0 0
        %1354 = vmatprep.mubr.bf16.mxu0 %v1317
        %1355 = vmatmul.mubr.bf16.gmra.mrb[0].mxu0 %v1111
        %v1356 = vpop.f32.mrb[0].mxu0
        %v1357 = vadd.f32 %v1260, %v1356
        %v1358 = vpop.f32.mrb[0].mxu0
        %v1359 = vpop.f32.mrb[0].mxu0
        %v1360 = vpop.f32.mrb[0].mxu0
        %1361 = vdwg.mxu0
        %v1362 = vld [vmem:[#allocation2] sm:$0xfc]
        %v1363 = vld [vmem:[#allocation2 + $0x8] sm:$0xfc]
        %v1364 = vld [vmem:[#allocation2 + $0x10] sm:$0x1]
        %v1365 = vld [vmem:[#allocation2 + $0x18] sm:$0x1]
        %v1366 = vpack.c.bf16 %v1364, %v1362
        %v1367 = vpack.c.bf16 %v1365, %v1363
        %s1368 = scalar_lea.vmem %s5, 136
        %v1369 = vld [vmem:[%s1368] sm:$0xf]
        %v1370 = vld [vmem:[%s1368 + $0x4] sm:$0xf]
        %v1371 = vld [vmem:[%s1368 + $0x8] sm:$0xf]
        %v1372 = vld [vmem:[%s1368 + $0xc] sm:$0xf]
        %v1373 = vld [vmem:[%s1368 + $0x10] sm:$0xf]
        %v1374 = vld [vmem:[%s1368 + $0x14] sm:$0xf]
        %v1375 = vld [vmem:[%s1368 + $0x18] sm:$0xf]
        %v1376 = vld [vmem:[%s1368 + $0x1c] sm:$0xf]
        %v1377 = vld [vmem:[%s1368 + $0x20] sm:$0xf]
        %v1378 = vld [vmem:[%s1368 + $0x24] sm:$0xf]
        %v1379 = vld [vmem:[%s1368 + $0x28] sm:$0xf]
        %v1380 = vld [vmem:[%s1368 + $0x2c] sm:$0xf]
        %v1381 = vld [vmem:[%s1368 + $0x30] sm:$0xf]
        %v1382 = vld [vmem:[%s1368 + $0x34] sm:$0xf]
        %v1383 = vld [vmem:[%s1368 + $0x38] sm:$0xf]
        %v1384 = vld [vmem:[%s1368 + $0x3c] sm:$0xf]
        %v1385 = vld [vmem:[%s1368 + $0x40] sm:$0x3]
        %v1388 = vrot.slane %v1366, 1
        %v1389 = vrot.slane %v1367, 1
        %v1408 = vunpack.c.l.b16 %v1369
        %v1409 = vunpack.c.l.b16 %v1370
        %v1410 = vunpack.c.l.b16 %v1371
        %v1411 = vunpack.c.l.b16 %v1372
        %v1412 = vunpack.c.l.b16 %v1373
        %v1413 = vunpack.c.l.b16 %v1374
        %v1414 = vunpack.c.l.b16 %v1375
        %v1415 = vunpack.c.l.b16 %v1376
        %v1416 = vunpack.c.l.b16 %v1377
        %v1417 = vunpack.c.l.b16 %v1378
        %v1418 = vunpack.c.l.b16 %v1379
        %v1419 = vunpack.c.l.b16 %v1380
        %v1420 = vunpack.c.l.b16 %v1381
        %v1421 = vunpack.c.l.b16 %v1382
        %v1422 = vunpack.c.l.b16 %v1383
        %v1423 = vunpack.c.l.b16 %v1384
        %v1424 = vunpack.c.l.b16 %v1385
        %v1425 = vpack.c.b16 %v1409, %v1408
        %v1426 = vpack.c.b16 %v1411, %v1410
        %v1427 = vpack.c.b16 %v1413, %v1412
        %v1428 = vpack.c.b16 %v1415, %v1414
        %v1429 = vpack.c.b16 %v1417, %v1416
        %v1430 = vpack.c.b16 %v1419, %v1418
        %v1431 = vpack.c.b16 %v1421, %v1420
        %v1432 = vpack.c.b16 %v1423, %v1422
        %v1433 = vpack.c.b16 %v1424, %v1424
        %v1443 = vsel %vm1095, %v1389, 0
        %v1446 = vsel %vm1221, %v1433, 0
        %1448 = vmatprep.subr.bf16.mxu0 0
        %1449 = vmatpush1.bf16.msra.mxu0 %v1425
        %1450 = vmatprep.subr.bf16.mxu0 0
        %1451 = vmatpush1.bf16.msra.mxu0 %v1426
        %1452 = vmatprep.subr.bf16.mxu0 0
        %1453 = vmatpush1.bf16.msra.mxu0 %v1427
        %1454 = vmatprep.subr.bf16.mxu0 0
        %1455 = vmatpush1.bf16.msra.mxu0 %v1428
        %1456 = vmatprep.subr.bf16.mxu0 0
        %1457 = vmatpush1.bf16.msra.mxu0 %v1429
        %1458 = vmatprep.subr.bf16.mxu0 0
        %1459 = vmatpush1.bf16.msra.mxu0 %v1430
        %1460 = vmatprep.subr.bf16.mxu0 0
        %1461 = vmatpush1.bf16.msra.mxu0 %v1431
        %1462 = vmatprep.subr.bf16.mxu0 0
        %1463 = vmatpush1.bf16.msra.mxu0 %v1432
        %1464 = vmatprep.subr.bf16.mxu0 0
        %1465 = vmatpush1.bf16.msra.mxu0 %v1446
        %1466 = vmatprep.subr.bf16.mxu0 0
        %1467 = vmatpush1.bf16.msra.mxu0 0
        %1468 = vmatprep.subr.bf16.mxu0 0
        %1469 = vmatpush1.bf16.msra.mxu0 0
        %1470 = vmatprep.subr.bf16.mxu0 0
        %1471 = vmatpush1.bf16.msra.mxu0 0
        %1472 = vmatprep.subr.bf16.mxu0 0
        %1473 = vmatpush1.bf16.msra.mxu0 0
        %1474 = vmatprep.subr.bf16.mxu0 0
        %1475 = vmatpush1.bf16.msra.mxu0 0
        %1476 = vmatprep.subr.bf16.mxu0 0
        %1477 = vmatpush1.bf16.msra.mxu0 0
        %1478 = vmatprep.subr.bf16.mxu0 0
        %1479 = vmatpush1.bf16.msra.mxu0 0
        %1480 = vmatprep.mubr.bf16.mxu0 %v1443
        %1481 = vmatmul.mubr.bf16.gmra.mrb[0].mxu0 %v1388
        %v1482 = vpop.f32.mrb[0].mxu0
        %v1483 = vadd.f32 0.0, %v1482
        %v1484 = vpop.f32.mrb[0].mxu0
        %v1485 = vpop.f32.mrb[0].mxu0
        %v1486 = vpop.f32.mrb[0].mxu0
        %1487 = vdwg.mxu0
        %v1488 = vadd.f32 %v1357, %v1483
        %v1489 = vld [vmem:[#allocation2] sm:$0xf8]
        %v1490 = vld [vmem:[#allocation2 + $0x8] sm:$0xf8]
        %v1491 = vld [vmem:[#allocation2 + $0x10] sm:$0x3]
        %v1492 = vld [vmem:[#allocation2 + $0x18] sm:$0x3]
        %v1493 = vpack.c.bf16 %v1491, %v1489
        %v1494 = vpack.c.bf16 %v1492, %v1490
        %s1495 = scalar_lea.vmem %s5, 204
        %v1496 = vld [vmem:[%s1495] sm:$0xf]
        %v1497 = vld [vmem:[%s1495 + $0x4] sm:$0xf]
        %v1498 = vld [vmem:[%s1495 + $0x8] sm:$0xf]
        %v1499 = vld [vmem:[%s1495 + $0xc] sm:$0xf]
        %v1500 = vld [vmem:[%s1495 + $0x10] sm:$0xf]
        %v1501 = vld [vmem:[%s1495 + $0x14] sm:$0xf]
        %v1502 = vld [vmem:[%s1495 + $0x18] sm:$0xf]
        %v1503 = vld [vmem:[%s1495 + $0x1c] sm:$0xf]
        %v1504 = vld [vmem:[%s1495 + $0x20] sm:$0xf]
        %v1505 = vld [vmem:[%s1495 + $0x24] sm:$0xf]
        %v1506 = vld [vmem:[%s1495 + $0x28] sm:$0xf]
        %v1507 = vld [vmem:[%s1495 + $0x2c] sm:$0xf]
        %v1508 = vld [vmem:[%s1495 + $0x30] sm:$0xf]
        %v1509 = vld [vmem:[%s1495 + $0x34] sm:$0xf]
        %v1510 = vld [vmem:[%s1495 + $0x38] sm:$0xf]
        %v1511 = vld [vmem:[%s1495 + $0x3c] sm:$0xf]
        %v1512 = vld [vmem:[%s1495 + $0x40] sm:$0x3]
        %v1514 = vshrl.u32 %v1493, 16
        %v1516 = vrot.slane %v1514, 1
        %v1517 = vshll.u32 %v1493, 16
        %v1519 = vrot.slane %v1517, 2
        %v1520 = vor.u32 %v1516, %v1519
        %v1522 = vshrl.u32 %v1494, 16
        %v1524 = vrot.slane %v1522, 1
        %v1525 = vshll.u32 %v1494, 16
        %v1527 = vrot.slane %v1525, 2
        %v1528 = vor.u32 %v1524, %v1527
        %v1547 = vunpack.c.l.b16 %v1496
        %v1548 = vunpack.c.l.b16 %v1497
        %v1549 = vunpack.c.l.b16 %v1498
        %v1550 = vunpack.c.l.b16 %v1499
        %v1551 = vunpack.c.l.b16 %v1500
        %v1552 = vunpack.c.l.b16 %v1501
        %v1553 = vunpack.c.l.b16 %v1502
        %v1554 = vunpack.c.l.b16 %v1503
        %v1555 = vunpack.c.l.b16 %v1504
        %v1556 = vunpack.c.l.b16 %v1505
        %v1557 = vunpack.c.l.b16 %v1506
        %v1558 = vunpack.c.l.b16 %v1507
        %v1559 = vunpack.c.l.b16 %v1508
        %v1560 = vunpack.c.l.b16 %v1509
        %v1561 = vunpack.c.l.b16 %v1510
        %v1562 = vunpack.c.l.b16 %v1511
        %v1563 = vunpack.c.l.b16 %v1512
        %v1564 = vpack.c.b16 %v1548, %v1547
        %v1565 = vpack.c.b16 %v1550, %v1549
        %v1566 = vpack.c.b16 %v1552, %v1551
        %v1567 = vpack.c.b16 %v1554, %v1553
        %v1568 = vpack.c.b16 %v1556, %v1555
        %v1569 = vpack.c.b16 %v1558, %v1557
        %v1570 = vpack.c.b16 %v1560, %v1559
        %v1571 = vpack.c.b16 %v1562, %v1561
        %v1572 = vpack.c.b16 %v1563, %v1563
        %v1582 = vsel %vm1095, %v1528, 0
        %v1585 = vsel %vm1221, %v1572, 0
        %1587 = vmatprep.subr.bf16.mxu0 0
        %1588 = vmatpush1.bf16.msra.mxu0 %v1564
        %1589 = vmatprep.subr.bf16.mxu0 0
        %1590 = vmatpush1.bf16.msra.mxu0 %v1565
        %1591 = vmatprep.subr.bf16.mxu0 0
        %1592 = vmatpush1.bf16.msra.mxu0 %v1566
        %1593 = vmatprep.subr.bf16.mxu0 0
        %1594 = vmatpush1.bf16.msra.mxu0 %v1567
        %1595 = vmatprep.subr.bf16.mxu0 0
        %1596 = vmatpush1.bf16.msra.mxu0 %v1568
        %1597 = vmatprep.subr.bf16.mxu0 0
        %1598 = vmatpush1.bf16.msra.mxu0 %v1569
        %1599 = vmatprep.subr.bf16.mxu0 0
        %1600 = vmatpush1.bf16.msra.mxu0 %v1570
        %1601 = vmatprep.subr.bf16.mxu0 0
        %1602 = vmatpush1.bf16.msra.mxu0 %v1571
        %1603 = vmatprep.subr.bf16.mxu0 0
        %1604 = vmatpush1.bf16.msra.mxu0 %v1585
        %1605 = vmatprep.subr.bf16.mxu0 0
        %1606 = vmatpush1.bf16.msra.mxu0 0
        %1607 = vmatprep.subr.bf16.mxu0 0
        %1608 = vmatpush1.bf16.msra.mxu0 0
        %1609 = vmatprep.subr.bf16.mxu0 0
        %1610 = vmatpush1.bf16.msra.mxu0 0
        %1611 = vmatprep.subr.bf16.mxu0 0
        %1612 = vmatpush1.bf16.msra.mxu0 0
        %1613 = vmatprep.subr.bf16.mxu0 0
        %1614 = vmatpush1.bf16.msra.mxu0 0
        %1615 = vmatprep.subr.bf16.mxu0 0
        %1616 = vmatpush1.bf16.msra.mxu0 0
        %1617 = vmatprep.subr.bf16.mxu0 0
        %1618 = vmatpush1.bf16.msra.mxu0 0
        %1619 = vmatprep.mubr.bf16.mxu0 %v1582
        %1620 = vmatmul.mubr.bf16.gmra.mrb[0].mxu0 %v1520
        %v1621 = vpop.f32.mrb[0].mxu0
        %v1622 = vadd.f32 0.0, %v1621
        %v1623 = vpop.f32.mrb[0].mxu0
        %v1624 = vpop.f32.mrb[0].mxu0
        %v1625 = vpop.f32.mrb[0].mxu0
        %1626 = vdwg.mxu0
        %v1627 = vadd.f32 %v1488, %v1622
        %v1628 = vld [vmem:[#allocation2] sm:$0xf0]
        %v1629 = vld [vmem:[#allocation2 + $0x8] sm:$0xf0]
        %v1630 = vld [vmem:[#allocation2 + $0x10] sm:$0x7]
        %v1631 = vld [vmem:[#allocation2 + $0x18] sm:$0x7]
        %v1632 = vpack.c.bf16 %v1630, %v1628
        %v1633 = vpack.c.bf16 %v1631, %v1629
        %s1634 = scalar_lea.vmem %s5, 272
        %v1635 = vld [vmem:[%s1634] sm:$0xf]
        %v1636 = vld [vmem:[%s1634 + $0x4] sm:$0xf]
        %v1637 = vld [vmem:[%s1634 + $0x8] sm:$0xf]
        %v1638 = vld [vmem:[%s1634 + $0xc] sm:$0xf]
        %v1639 = vld [vmem:[%s1634 + $0x10] sm:$0xf]
        %v1640 = vld [vmem:[%s1634 + $0x14] sm:$0xf]
        %v1641 = vld [vmem:[%s1634 + $0x18] sm:$0xf]
        %v1642 = vld [vmem:[%s1634 + $0x1c] sm:$0xf]
        %v1643 = vld [vmem:[%s1634 + $0x20] sm:$0xf]
        %v1644 = vld [vmem:[%s1634 + $0x24] sm:$0xf]
        %v1645 = vld [vmem:[%s1634 + $0x28] sm:$0xf]
        %v1646 = vld [vmem:[%s1634 + $0x2c] sm:$0xf]
        %v1647 = vld [vmem:[%s1634 + $0x30] sm:$0xf]
        %v1648 = vld [vmem:[%s1634 + $0x34] sm:$0xf]
        %v1649 = vld [vmem:[%s1634 + $0x38] sm:$0xf]
        %v1650 = vld [vmem:[%s1634 + $0x3c] sm:$0xf]
        %v1651 = vld [vmem:[%s1634 + $0x40] sm:$0x3]
        %v1654 = vrot.slane %v1632, 2
        %v1655 = vrot.slane %v1633, 2
        %v1674 = vunpack.c.l.b16 %v1635
        %v1675 = vunpack.c.l.b16 %v1636
        %v1676 = vunpack.c.l.b16 %v1637
        %v1677 = vunpack.c.l.b16 %v1638
        %v1678 = vunpack.c.l.b16 %v1639
        %v1679 = vunpack.c.l.b16 %v1640
        %v1680 = vunpack.c.l.b16 %v1641
        %v1681 = vunpack.c.l.b16 %v1642
        %v1682 = vunpack.c.l.b16 %v1643
        %v1683 = vunpack.c.l.b16 %v1644
        %v1684 = vunpack.c.l.b16 %v1645
        %v1685 = vunpack.c.l.b16 %v1646
        %v1686 = vunpack.c.l.b16 %v1647
        %v1687 = vunpack.c.l.b16 %v1648
        %v1688 = vunpack.c.l.b16 %v1649
        %v1689 = vunpack.c.l.b16 %v1650
        %v1690 = vunpack.c.l.b16 %v1651
        %v1691 = vpack.c.b16 %v1675, %v1674
        %v1692 = vpack.c.b16 %v1677, %v1676
        %v1693 = vpack.c.b16 %v1679, %v1678
        %v1694 = vpack.c.b16 %v1681, %v1680
        %v1695 = vpack.c.b16 %v1683, %v1682
        %v1696 = vpack.c.b16 %v1685, %v1684
        %v1697 = vpack.c.b16 %v1687, %v1686
        %v1698 = vpack.c.b16 %v1689, %v1688
        %v1699 = vpack.c.b16 %v1690, %v1690
        %v1709 = vsel %vm1095, %v1655, 0
        %v1712 = vsel %vm1221, %v1699, 0
        %1714 = vmatprep.subr.bf16.mxu0 0
        %1715 = vmatpush1.bf16.msra.mxu0 %v1691
        %1716 = vmatprep.subr.bf16.mxu0 0
        %1717 = vmatpush1.bf16.msra.mxu0 %v1692
        %1718 = vmatprep.subr.bf16.mxu0 0
        %1719 = vmatpush1.bf16.msra.mxu0 %v1693
        %1720 = vmatprep.subr.bf16.mxu0 0
        %1721 = vmatpush1.bf16.msra.mxu0 %v1694
        %1722 = vmatprep.subr.bf16.mxu0 0
        %1723 = vmatpush1.bf16.msra.mxu0 %v1695
        %1724 = vmatprep.subr.bf16.mxu0 0
        %1725 = vmatpush1.bf16.msra.mxu0 %v1696
        %1726 = vmatprep.subr.bf16.mxu0 0
        %1727 = vmatpush1.bf16.msra.mxu0 %v1697
        %1728 = vmatprep.subr.bf16.mxu0 0
        %1729 = vmatpush1.bf16.msra.mxu0 %v1698
        %1730 = vmatprep.subr.bf16.mxu0 0
        %1731 = vmatpush1.bf16.msra.mxu0 %v1712
        %1732 = vmatprep.subr.bf16.mxu0 0
        %1733 = vmatpush1.bf16.msra.mxu0 0
        %1734 = vmatprep.subr.bf16.mxu0 0
        %1735 = vmatpush1.bf16.msra.mxu0 0
        %1736 = vmatprep.subr.bf16.mxu0 0
        %1737 = vmatpush1.bf16.msra.mxu0 0
        %1738 = vmatprep.subr.bf16.mxu0 0
        %1739 = vmatpush1.bf16.msra.mxu0 0
        %1740 = vmatprep.subr.bf16.mxu0 0
        %1741 = vmatpush1.bf16.msra.mxu0 0
        %1742 = vmatprep.subr.bf16.mxu0 0
        %1743 = vmatpush1.bf16.msra.mxu0 0
        %1744 = vmatprep.subr.bf16.mxu0 0
        %1745 = vmatpush1.bf16.msra.mxu0 0
        %1746 = vmatprep.mubr.bf16.mxu0 %v1709
        %1747 = vmatmul.mubr.bf16.gmra.mrb[0].mxu0 %v1654
        %v1748 = vpop.f32.mrb[0].mxu0
        %v1749 = vadd.f32 0.0, %v1748
        %v1750 = vpop.f32.mrb[0].mxu0
        %v1751 = vpop.f32.mrb[0].mxu0
        %v1752 = vpop.f32.mrb[0].mxu0
        %1753 = vdwg.mxu0
        %v1754 = vadd.f32 %v1627, %v1749
        %v1755 = vld [vmem:[%s6] sm:$0x1]
        %v1757 = vlaneseq
        %v1758 = vshrl.u32 %v1757, 7
        %v1759 = vsub.s32 0, %v1758
        %v1760 = vrot.slane %v1755, %v1759
        %v1762 = vadd.f32 %v1754, %v1760
        %v1763 = vmax.f32 %v1762, 0.0
        %1764 = vst [vmem:[#allocation3] sm:$0xff] 0.0
        %vm1765 = vcmask 130048
        %1766 = vst.msk [vmem:[#allocation3 + $0x8] sm:$0xff] %vm1765, 0.0
        %1767 = vst [vmem:[#allocation3 + $0x10] sm:$0x1] 0.0
        %vm1768 = vcmask 122880
        %1769 = vst.msk [vmem:[#allocation3 + $0x18] sm:$0x1] %vm1768, 0.0
        %v1771 = vrot.slane %v1093, 7
        %1772 = vrot.lane.b32.xlu0 %v1771, 16
        %v1773 = vpop.permute.xlu0 %1772
        %vm1775 = vcmask 1047681
        %1776 = vst.msk [vmem:[#allocation3] sm:$0xfe] %vm1775, %v1773
        %v1777 = vld [vmem:[#allocation3] sm:$0x7f]
        %v1778 = vld [vmem:[#allocation3 + $0x8] sm:$0x7f]
        %v1779 = vpack.c.bf16 %v1777, %v1777
        %v1780 = vpack.c.bf16 %v1778, %v1778
        %v1781 = vld [vmem:[%s7] sm:$0xff]
        %v1782 = vld [vmem:[%s7 + $0x8] sm:$0xff]
        %v1783 = vld [vmem:[%s7 + $0x10] sm:$0xff]
        %v1784 = vld [vmem:[%s7 + $0x18] sm:$0xff]
        %v1785 = vld [vmem:[%s7 + $0x20] sm:$0xff]
        %v1786 = vld [vmem:[%s7 + $0x28] sm:$0xff]
        %v1787 = vld [vmem:[%s7 + $0x30] sm:$0xff]
        %v1788 = vld [vmem:[%s7 + $0x38] sm:$0xff]
        %v1789 = vld [vmem:[%s7 + $0x40] sm:$0xff]
        %v1790 = vld [vmem:[%s7 + $0x48] sm:$0xff]
        %v1791 = vld [vmem:[%s7 + $0x50] sm:$0xff]
        %v1792 = vld [vmem:[%s7 + $0x58] sm:$0xff]
        %v1793 = vld [vmem:[%s7 + $0x60] sm:$0xff]
        %v1794 = vld [vmem:[%s7 + $0x68] sm:$0xff]
        %v1795 = vld [vmem:[%s7 + $0x70] sm:$0xff]
        %v1796 = vld [vmem:[%s7 + $0x78] sm:$0xff]
        %v1797 = vld [vmem:[%s7 + $0x80] sm:$0xff]
        %v1798 = vld [vmem:[%s7 + $0x88] sm:$0xff]
        %v1799 = vld [vmem:[#allocation3] sm:$0xfe]
        %v1800 = vld [vmem:[#allocation3 + $0x8] sm:$0xfe]
        %v1801 = vpack.c.bf16 %v1799, %v1799
        %v1802 = vpack.c.bf16 %v1800, %v1800
        %s1803 = scalar_lea.vmem %s7, 144
        %v1804 = vld [vmem:[%s1803] sm:$0xff]
        %v1805 = vld [vmem:[%s1803 + $0x8] sm:$0xff]
        %v1806 = vld [vmem:[%s1803 + $0x10] sm:$0xff]
        %v1807 = vld [vmem:[%s1803 + $0x18] sm:$0xff]
        %v1808 = vld [vmem:[%s1803 + $0x20] sm:$0xff]
        %v1809 = vld [vmem:[%s1803 + $0x28] sm:$0xff]
        %v1810 = vld [vmem:[%s1803 + $0x30] sm:$0xff]
        %v1811 = vld [vmem:[%s1803 + $0x38] sm:$0xff]
        %v1812 = vld [vmem:[%s1803 + $0x40] sm:$0xff]
        %v1813 = vld [vmem:[%s1803 + $0x48] sm:$0xff]
        %v1814 = vld [vmem:[%s1803 + $0x50] sm:$0xff]
        %v1815 = vld [vmem:[%s1803 + $0x58] sm:$0xff]
        %v1816 = vld [vmem:[%s1803 + $0x60] sm:$0xff]
        %v1817 = vld [vmem:[%s1803 + $0x68] sm:$0xff]
        %v1818 = vld [vmem:[%s1803 + $0x70] sm:$0xff]
        %v1819 = vld [vmem:[%s1803 + $0x78] sm:$0xff]
        %v1820 = vld [vmem:[%s1803 + $0x80] sm:$0xff]
        %v1821 = vld [vmem:[%s1803 + $0x88] sm:$0xff]
        %v1823 = vshrl.u32 %v1801, 16
        %v1825 = vshll.u32 %v1801, 16
        %v1827 = vrot.slane %v1825, 1
        %v1828 = vor.u32 %v1823, %v1827
        %v1830 = vshrl.u32 %v1802, 16
        %v1832 = vshll.u32 %v1802, 16
        %v1834 = vrot.slane %v1832, 1
        %v1835 = vor.u32 %v1830, %v1834
        %v1855 = vunpack.c.l.b16 %v1804
        %v1856 = vunpack.c.h.b16 %v1804
        %v1857 = vunpack.c.l.b16 %v1805
        %v1858 = vunpack.c.h.b16 %v1805
        %v1859 = vunpack.c.l.b16 %v1806
        %v1860 = vunpack.c.h.b16 %v1806
        %v1861 = vunpack.c.l.b16 %v1807
        %v1862 = vunpack.c.h.b16 %v1807
        %v1863 = vunpack.c.l.b16 %v1808
        %v1864 = vunpack.c.h.b16 %v1808
        %v1865 = vunpack.c.l.b16 %v1809
        %v1866 = vunpack.c.h.b16 %v1809
        %v1867 = vunpack.c.l.b16 %v1810
        %v1868 = vunpack.c.h.b16 %v1810
        %v1869 = vunpack.c.l.b16 %v1811
        %v1870 = vunpack.c.h.b16 %v1811
        %v1871 = vunpack.c.l.b16 %v1812
        %v1872 = vunpack.c.h.b16 %v1812
        %v1873 = vunpack.c.l.b16 %v1813
        %v1874 = vunpack.c.h.b16 %v1813
        %v1875 = vunpack.c.l.b16 %v1814
        %v1876 = vunpack.c.h.b16 %v1814
        %v1877 = vunpack.c.l.b16 %v1815
        %v1878 = vunpack.c.h.b16 %v1815
        %v1879 = vunpack.c.l.b16 %v1816
        %v1880 = vunpack.c.h.b16 %v1816
        %v1881 = vunpack.c.l.b16 %v1817
        %v1882 = vunpack.c.h.b16 %v1817
        %v1883 = vunpack.c.l.b16 %v1818
        %v1884 = vunpack.c.h.b16 %v1818
        %v1885 = vunpack.c.l.b16 %v1819
        %v1886 = vunpack.c.h.b16 %v1819
        %v1887 = vunpack.c.l.b16 %v1820
        %v1888 = vunpack.c.h.b16 %v1820
        %v1889 = vunpack.c.l.b16 %v1821
        %v1890 = vunpack.c.h.b16 %v1821
        %v1891 = vpack.c.b16 %v1857, %v1855
        %v1892 = vpack.c.b16 %v1858, %v1856
        %v1893 = vpack.c.b16 %v1861, %v1859
        %v1894 = vpack.c.b16 %v1862, %v1860
        %v1895 = vpack.c.b16 %v1865, %v1863
        %v1896 = vpack.c.b16 %v1866, %v1864
        %v1897 = vpack.c.b16 %v1869, %v1867
        %v1898 = vpack.c.b16 %v1870, %v1868
        %v1899 = vpack.c.b16 %v1873, %v1871
        %v1900 = vpack.c.b16 %v1874, %v1872
        %v1901 = vpack.c.b16 %v1877, %v1875
        %v1902 = vpack.c.b16 %v1878, %v1876
        %v1903 = vpack.c.b16 %v1881, %v1879
        %v1904 = vpack.c.b16 %v1882, %v1880
        %v1905 = vpack.c.b16 %v1885, %v1883
        %v1906 = vpack.c.b16 %v1886, %v1884
        %v1907 = vpack.c.b16 %v1889, %v1887
        %v1908 = vpack.c.b16 %v1890, %v1888
        %v1928 = vsel %vm1765, %v1835, 0
        %1930 = vmatprep.subr.bf16.mxu0 %v1892
        %1931 = vmatpush1.bf16.msra.mxu0 %v1891
        %1932 = vmatprep.subr.bf16.mxu0 %v1894
        %1933 = vmatpush1.bf16.msra.mxu0 %v1893
        %1934 = vmatprep.subr.bf16.mxu0 %v1896
        %1935 = vmatpush1.bf16.msra.mxu0 %v1895
        %1936 = vmatprep.subr.bf16.mxu0 %v1898
        %1937 = vmatpush1.bf16.msra.mxu0 %v1897
        %1938 = vmatprep.subr.bf16.mxu0 %v1900
        %1939 = vmatpush1.bf16.msra.mxu0 %v1899
        %1940 = vmatprep.subr.bf16.mxu0 %v1902
        %1941 = vmatpush1.bf16.msra.mxu0 %v1901
        %1942 = vmatprep.subr.bf16.mxu0 %v1904
        %1943 = vmatpush1.bf16.msra.mxu0 %v1903
        %1944 = vmatprep.subr.bf16.mxu0 %v1906
        %1945 = vmatpush1.bf16.msra.mxu0 %v1905
        %1946 = vmatprep.subr.bf16.mxu0 %v1908
        %1947 = vmatpush1.bf16.msra.mxu0 %v1907
        %1948 = vmatprep.subr.bf16.mxu0 0
        %1949 = vmatpush1.bf16.msra.mxu0 0
        %1950 = vmatprep.subr.bf16.mxu0 0
        %1951 = vmatpush1.bf16.msra.mxu0 0
        %1952 = vmatprep.subr.bf16.mxu0 0
        %1953 = vmatpush1.bf16.msra.mxu0 0
        %1954 = vmatprep.subr.bf16.mxu0 0
        %1955 = vmatpush1.bf16.msra.mxu0 0
        %1956 = vmatprep.subr.bf16.mxu0 0
        %1957 = vmatpush1.bf16.msra.mxu0 0
        %1958 = vmatprep.subr.bf16.mxu0 0
        %1959 = vmatpush1.bf16.msra.mxu0 0
        %1960 = vmatprep.subr.bf16.mxu0 0
        %1961 = vmatpush1.bf16.msra.mxu0 0
        %1962 = vmatprep.mubr.bf16.mxu0 %v1928
        %1963 = vmatmul.mubr.bf16.gmra.mrb[0].mxu0 %v1828
        %v1964 = vpop.f32.mrb[0].mxu0
        %v1965 = vadd.f32 0.0, %v1964
        %v1966 = vpop.f32.mrb[0].mxu0
        %v1967 = vadd.f32 0.0, %v1966
        %v1968 = vpop.f32.mrb[0].mxu0
        %v1969 = vpop.f32.mrb[0].mxu0
        %1970 = vdwg.mxu0
        %v1989 = vunpack.c.l.b16 %v1781
        %v1990 = vunpack.c.h.b16 %v1781
        %v1991 = vunpack.c.l.b16 %v1782
        %v1992 = vunpack.c.h.b16 %v1782
        %v1993 = vunpack.c.l.b16 %v1783
        %v1994 = vunpack.c.h.b16 %v1783
        %v1995 = vunpack.c.l.b16 %v1784
        %v1996 = vunpack.c.h.b16 %v1784
        %v1997 = vunpack.c.l.b16 %v1785
        %v1998 = vunpack.c.h.b16 %v1785
        %v1999 = vunpack.c.l.b16 %v1786
        %v2000 = vunpack.c.h.b16 %v1786
        %v2001 = vunpack.c.l.b16 %v1787
        %v2002 = vunpack.c.h.b16 %v1787
        %v2003 = vunpack.c.l.b16 %v1788
        %v2004 = vunpack.c.h.b16 %v1788
        %v2005 = vunpack.c.l.b16 %v1789
        %v2006 = vunpack.c.h.b16 %v1789
        %v2007 = vunpack.c.l.b16 %v1790
        %v2008 = vunpack.c.h.b16 %v1790
        %v2009 = vunpack.c.l.b16 %v1791
        %v2010 = vunpack.c.h.b16 %v1791
        %v2011 = vunpack.c.l.b16 %v1792
        %v2012 = vunpack.c.h.b16 %v1792
        %v2013 = vunpack.c.l.b16 %v1793
        %v2014 = vunpack.c.h.b16 %v1793
        %v2015 = vunpack.c.l.b16 %v1794
        %v2016 = vunpack.c.h.b16 %v1794
        %v2017 = vunpack.c.l.b16 %v1795
        %v2018 = vunpack.c.h.b16 %v1795
        %v2019 = vunpack.c.l.b16 %v1796
        %v2020 = vunpack.c.h.b16 %v1796
        %v2021 = vunpack.c.l.b16 %v1797
        %v2022 = vunpack.c.h.b16 %v1797
        %v2023 = vunpack.c.l.b16 %v1798
        %v2024 = vunpack.c.h.b16 %v1798
        %v2025 = vpack.c.b16 %v1991, %v1989
        %v2026 = vpack.c.b16 %v1992, %v1990
        %v2027 = vpack.c.b16 %v1995, %v1993
        %v2028 = vpack.c.b16 %v1996, %v1994
        %v2029 = vpack.c.b16 %v1999, %v1997
        %v2030 = vpack.c.b16 %v2000, %v1998
        %v2031 = vpack.c.b16 %v2003, %v2001
        %v2032 = vpack.c.b16 %v2004, %v2002
        %v2033 = vpack.c.b16 %v2007, %v2005
        %v2034 = vpack.c.b16 %v2008, %v2006
        %v2035 = vpack.c.b16 %v2011, %v2009
        %v2036 = vpack.c.b16 %v2012, %v2010
        %v2037 = vpack.c.b16 %v2015, %v2013
        %v2038 = vpack.c.b16 %v2016, %v2014
        %v2039 = vpack.c.b16 %v2019, %v2017
        %v2040 = vpack.c.b16 %v2020, %v2018
        %v2041 = vpack.c.b16 %v2023, %v2021
        %v2042 = vpack.c.b16 %v2024, %v2022
        %v2062 = vsel %vm1765, %v1780, 0
        %2064 = vmatprep.subr.bf16.mxu0 %v2026
        %2065 = vmatpush1.bf16.msra.mxu0 %v2025
        %2066 = vmatprep.subr.bf16.mxu0 %v2028
        %2067 = vmatpush1.bf16.msra.mxu0 %v2027
        %2068 = vmatprep.subr.bf16.mxu0 %v2030
        %2069 = vmatpush1.bf16.msra.mxu0 %v2029
        %2070 = vmatprep.subr.bf16.mxu0 %v2032
        %2071 = vmatpush1.bf16.msra.mxu0 %v2031
        %2072 = vmatprep.subr.bf16.mxu0 %v2034
        %2073 = vmatpush1.bf16.msra.mxu0 %v2033
        %2074 = vmatprep.subr.bf16.mxu0 %v2036
        %2075 = vmatpush1.bf16.msra.mxu0 %v2035
        %2076 = vmatprep.subr.bf16.mxu0 %v2038
        %2077 = vmatpush1.bf16.msra.mxu0 %v2037
        %2078 = vmatprep.subr.bf16.mxu0 %v2040
        %2079 = vmatpush1.bf16.msra.mxu0 %v2039
        %2080 = vmatprep.subr.bf16.mxu0 %v2042
        %2081 = vmatpush1.bf16.msra.mxu0 %v2041
        %2082 = vmatprep.subr.bf16.mxu0 0
        %2083 = vmatpush1.bf16.msra.mxu0 0
        %2084 = vmatprep.subr.bf16.mxu0 0
        %2085 = vmatpush1.bf16.msra.mxu0 0
        %2086 = vmatprep.subr.bf16.mxu0 0
        %2087 = vmatpush1.bf16.msra.mxu0 0
        %2088 = vmatprep.subr.bf16.mxu0 0
        %2089 = vmatpush1.bf16.msra.mxu0 0
        %2090 = vmatprep.subr.bf16.mxu0 0
        %2091 = vmatpush1.bf16.msra.mxu0 0
        %2092 = vmatprep.subr.bf16.mxu0 0
        %2093 = vmatpush1.bf16.msra.mxu0 0
        %2094 = vmatprep.subr.bf16.mxu0 0
        %2095 = vmatpush1.bf16.msra.mxu0 0
        %2096 = vmatprep.mubr.bf16.mxu0 %v2062
        %2097 = vmatmul.mubr.bf16.gmra.mrb[0].mxu0 %v1779
        %v2098 = vpop.f32.mrb[0].mxu0
        %v2099 = vadd.f32 %v1965, %v2098
        %v2100 = vpop.f32.mrb[0].mxu0
        %v2101 = vadd.f32 %v1967, %v2100
        %v2102 = vpop.f32.mrb[0].mxu0
        %v2103 = vpop.f32.mrb[0].mxu0
        %2104 = vdwg.mxu0
        %v2105 = vld [vmem:[#allocation3] sm:$0xfc]
        %v2106 = vld [vmem:[#allocation3 + $0x8] sm:$0xfc]
        %v2107 = vld [vmem:[#allocation3 + $0x10] sm:$0x1]
        %v2108 = vld [vmem:[#allocation3 + $0x18] sm:$0x1]
        %v2109 = vpack.c.bf16 %v2107, %v2105
        %v2110 = vpack.c.bf16 %v2108, %v2106
        %s2111 = scalar_lea.vmem %s7, 288
        %v2112 = vld [vmem:[%s2111] sm:$0xff]
        %v2113 = vld [vmem:[%s2111 + $0x8] sm:$0xff]
        %v2114 = vld [vmem:[%s2111 + $0x10] sm:$0xff]
        %v2115 = vld [vmem:[%s2111 + $0x18] sm:$0xff]
        %v2116 = vld [vmem:[%s2111 + $0x20] sm:$0xff]
        %v2117 = vld [vmem:[%s2111 + $0x28] sm:$0xff]
        %v2118 = vld [vmem:[%s2111 + $0x30] sm:$0xff]
        %v2119 = vld [vmem:[%s2111 + $0x38] sm:$0xff]
        %v2120 = vld [vmem:[%s2111 + $0x40] sm:$0xff]
        %v2121 = vld [vmem:[%s2111 + $0x48] sm:$0xff]
        %v2122 = vld [vmem:[%s2111 + $0x50] sm:$0xff]
        %v2123 = vld [vmem:[%s2111 + $0x58] sm:$0xff]
        %v2124 = vld [vmem:[%s2111 + $0x60] sm:$0xff]
        %v2125 = vld [vmem:[%s2111 + $0x68] sm:$0xff]
        %v2126 = vld [vmem:[%s2111 + $0x70] sm:$0xff]
        %v2127 = vld [vmem:[%s2111 + $0x78] sm:$0xff]
        %v2128 = vld [vmem:[%s2111 + $0x80] sm:$0xff]
        %v2129 = vld [vmem:[%s2111 + $0x88] sm:$0xff]
        %v2132 = vrot.slane %v2109, 1
        %v2133 = vrot.slane %v2110, 1
        %v2153 = vunpack.c.l.b16 %v2112
        %v2154 = vunpack.c.h.b16 %v2112
        %v2155 = vunpack.c.l.b16 %v2113
        %v2156 = vunpack.c.h.b16 %v2113
        %v2157 = vunpack.c.l.b16 %v2114
        %v2158 = vunpack.c.h.b16 %v2114
        %v2159 = vunpack.c.l.b16 %v2115
        %v2160 = vunpack.c.h.b16 %v2115
        %v2161 = vunpack.c.l.b16 %v2116
        %v2162 = vunpack.c.h.b16 %v2116
        %v2163 = vunpack.c.l.b16 %v2117
        %v2164 = vunpack.c.h.b16 %v2117
        %v2165 = vunpack.c.l.b16 %v2118
        %v2166 = vunpack.c.h.b16 %v2118
        %v2167 = vunpack.c.l.b16 %v2119
        %v2168 = vunpack.c.h.b16 %v2119
        %v2169 = vunpack.c.l.b16 %v2120
        %v2170 = vunpack.c.h.b16 %v2120
        %v2171 = vunpack.c.l.b16 %v2121
        %v2172 = vunpack.c.h.b16 %v2121
        %v2173 = vunpack.c.l.b16 %v2122
        %v2174 = vunpack.c.h.b16 %v2122
        %v2175 = vunpack.c.l.b16 %v2123
        %v2176 = vunpack.c.h.b16 %v2123
        %v2177 = vunpack.c.l.b16 %v2124
        %v2178 = vunpack.c.h.b16 %v2124
        %v2179 = vunpack.c.l.b16 %v2125
        %v2180 = vunpack.c.h.b16 %v2125
        %v2181 = vunpack.c.l.b16 %v2126
        %v2182 = vunpack.c.h.b16 %v2126
        %v2183 = vunpack.c.l.b16 %v2127
        %v2184 = vunpack.c.h.b16 %v2127
        %v2185 = vunpack.c.l.b16 %v2128
        %v2186 = vunpack.c.h.b16 %v2128
        %v2187 = vunpack.c.l.b16 %v2129
        %v2188 = vunpack.c.h.b16 %v2129
        %v2189 = vpack.c.b16 %v2155, %v2153
        %v2190 = vpack.c.b16 %v2156, %v2154
        %v2191 = vpack.c.b16 %v2159, %v2157
        %v2192 = vpack.c.b16 %v2160, %v2158
        %v2193 = vpack.c.b16 %v2163, %v2161
        %v2194 = vpack.c.b16 %v2164, %v2162
        %v2195 = vpack.c.b16 %v2167, %v2165
        %v2196 = vpack.c.b16 %v2168, %v2166
        %v2197 = vpack.c.b16 %v2171, %v2169
        %v2198 = vpack.c.b16 %v2172, %v2170
        %v2199 = vpack.c.b16 %v2175, %v2173
        %v2200 = vpack.c.b16 %v2176, %v2174
        %v2201 = vpack.c.b16 %v2179, %v2177
        %v2202 = vpack.c.b16 %v2180, %v2178
        %v2203 = vpack.c.b16 %v2183, %v2181
        %v2204 = vpack.c.b16 %v2184, %v2182
        %v2205 = vpack.c.b16 %v2187, %v2185
        %v2206 = vpack.c.b16 %v2188, %v2186
        %v2226 = vsel %vm1765, %v2133, 0
        %2228 = vmatprep.subr.bf16.mxu0 %v2190
        %2229 = vmatpush1.bf16.msra.mxu0 %v2189
        %2230 = vmatprep.subr.bf16.mxu0 %v2192
        %2231 = vmatpush1.bf16.msra.mxu0 %v2191
        %2232 = vmatprep.subr.bf16.mxu0 %v2194
        %2233 = vmatpush1.bf16.msra.mxu0 %v2193
        %2234 = vmatprep.subr.bf16.mxu0 %v2196
        %2235 = vmatpush1.bf16.msra.mxu0 %v2195
        %2236 = vmatprep.subr.bf16.mxu0 %v2198
        %2237 = vmatpush1.bf16.msra.mxu0 %v2197
        %2238 = vmatprep.subr.bf16.mxu0 %v2200
        %2239 = vmatpush1.bf16.msra.mxu0 %v2199
        %2240 = vmatprep.subr.bf16.mxu0 %v2202
        %2241 = vmatpush1.bf16.msra.mxu0 %v2201
        %2242 = vmatprep.subr.bf16.mxu0 %v2204
        %2243 = vmatpush1.bf16.msra.mxu0 %v2203
        %2244 = vmatprep.subr.bf16.mxu0 %v2206
        %2245 = vmatpush1.bf16.msra.mxu0 %v2205
        %2246 = vmatprep.subr.bf16.mxu0 0
        %2247 = vmatpush1.bf16.msra.mxu0 0
        %2248 = vmatprep.subr.bf16.mxu0 0
        %2249 = vmatpush1.bf16.msra.mxu0 0
        %2250 = vmatprep.subr.bf16.mxu0 0
        %2251 = vmatpush1.bf16.msra.mxu0 0
        %2252 = vmatprep.subr.bf16.mxu0 0
        %2253 = vmatpush1.bf16.msra.mxu0 0
        %2254 = vmatprep.subr.bf16.mxu0 0
        %2255 = vmatpush1.bf16.msra.mxu0 0
        %2256 = vmatprep.subr.bf16.mxu0 0
        %2257 = vmatpush1.bf16.msra.mxu0 0
        %2258 = vmatprep.subr.bf16.mxu0 0
        %2259 = vmatpush1.bf16.msra.mxu0 0
        %2260 = vmatprep.mubr.bf16.mxu0 %v2226
        %2261 = vmatmul.mubr.bf16.gmra.mrb[0].mxu0 %v2132
        %v2262 = vpop.f32.mrb[0].mxu0
        %v2263 = vadd.f32 0.0, %v2262
        %v2264 = vpop.f32.mrb[0].mxu0
        %v2265 = vadd.f32 0.0, %v2264
        %v2266 = vpop.f32.mrb[0].mxu0
        %v2267 = vpop.f32.mrb[0].mxu0
        %2268 = vdwg.mxu0
        %v2269 = vadd.f32 %v2099, %v2263
        %v2270 = vadd.f32 %v2101, %v2265
        %v2271 = vld [vmem:[%s8] sm:$0x3]
        %v2273 = vlaneseq
        %v2274 = vshrl.u32 %v2273, 7
        %v2275 = vsub.s32 0, %v2274
        %v2276 = vrot.slane %v2271, %v2275
        %v2277 = vlaneseq
        %v2278 = vshrl.u32 %v2277, 7
        %v2279 = vsub.s32 1, %v2278
        %v2280 = vrot.slane %v2271, %v2279
        %v2283 = vadd.f32 %v2269, %v2276
        %v2284 = vadd.f32 %v2270, %v2280
        %v2285 = vmax.f32 %v2283, 0.0
        %v2286 = vmax.f32 %v2284, 0.0
        %2287 = vst [vmem:[#allocation4] sm:$0xff] 0.0
        %vm2288 = vcmask 719872
        %2289 = vst.msk [vmem:[#allocation4 + $0x8] sm:$0xff] %vm2288, 0.0
        %2290 = vst [vmem:[#allocation4 + $0x10] sm:$0x1] 0.0
        %vm2291 = vcmask 712704
        %2292 = vst.msk [vmem:[#allocation4 + $0x18] sm:$0x1] %vm2291, 0.0
        %v2295 = vrot.slane %v2285, 7
        %v2296 = vrot.slane %v2286, 7
        %2297 = vrot.lane.b32.xlu0 %v2295, 24
        %v2298 = vpop.permute.xlu0 %2297
        %2299 = vrot.lane.b32.xlu0 %v2296, 24
        %v2300 = vpop.permute.xlu0 %2299
        %vm2301 = vcmask 195584
        %v2302 = vsel %vm2301, %v2298, %v2300
        %vm2305 = vcmask 1047745
        %2306 = vst.msk [vmem:[#allocation4] sm:$0xfe] %vm2305, %v2298
        %vm2307 = vcmask 523265
        %2308 = vst.msk [vmem:[#allocation4 + $0x8] sm:$0xfe] %vm2307, %v2302
        %v2309 = vld [vmem:[#allocation4] sm:$0x7f]
        %v2310 = vld [vmem:[#allocation4 + $0x8] sm:$0x7f]
        %v2311 = vpack.c.bf16 %v2309, %v2309
        %v2312 = vpack.c.bf16 %v2310, %v2310
        %v2313 = vld [vmem:[%s9] sm:$0xff]
        %v2314 = vld [vmem:[%s9 + $0x8] sm:$0xff]
        %v2315 = vld [vmem:[%s9 + $0x10] sm:$0xff]
        %v2316 = vld [vmem:[%s9 + $0x18] sm:$0xff]
        %v2317 = vld [vmem:[%s9 + $0x20] sm:$0xff]
        %v2318 = vld [vmem:[%s9 + $0x28] sm:$0xff]
        %v2319 = vld [vmem:[%s9 + $0x30] sm:$0xff]
        %v2320 = vld [vmem:[%s9 + $0x38] sm:$0xff]
        %v2321 = vld [vmem:[%s9 + $0x40] sm:$0xff]
        %v2322 = vld [vmem:[%s9 + $0x48] sm:$0xff]
        %v2323 = vld [vmem:[%s9 + $0x50] sm:$0xff]
        %v2324 = vld [vmem:[%s9 + $0x58] sm:$0xff]
        %v2325 = vld [vmem:[%s9 + $0x60] sm:$0xff]
        %v2326 = vld [vmem:[%s9 + $0x68] sm:$0xff]
        %v2327 = vld [vmem:[%s9 + $0x70] sm:$0xff]
        %v2328 = vld [vmem:[%s9 + $0x78] sm:$0xff]
        %v2329 = vld [vmem:[%s9 + $0x80] sm:$0xff]
        %v2330 = vld [vmem:[%s9 + $0x88] sm:$0xff]
        %v2331 = vld [vmem:[%s9 + $0x90] sm:$0xff]
        %v2332 = vld [vmem:[%s9 + $0x98] sm:$0xff]
        %v2333 = vld [vmem:[%s9 + $0xa0] sm:$0xff]
        %v2334 = vld [vmem:[%s9 + $0xa8] sm:$0xff]
        %v2335 = vld [vmem:[%s9 + $0xb0] sm:$0xff]
        %v2336 = vld [vmem:[%s9 + $0xb8] sm:$0xff]
        %v2337 = vld [vmem:[%s9 + $0xc0] sm:$0xff]
        %v2338 = vld [vmem:[%s9 + $0xc8] sm:$0xff]
        %v2339 = vld [vmem:[%s9 + $0xd0] sm:$0xff]
        %v2340 = vld [vmem:[#allocation4] sm:$0xfe]
        %v2341 = vld [vmem:[#allocation4 + $0x8] sm:$0xfe]
        %v2342 = vpack.c.bf16 %v2340, %v2340
        %v2343 = vpack.c.bf16 %v2341, %v2341
        %s2344 = scalar_lea.vmem %s9, 216
        %v2345 = vld [vmem:[%s2344] sm:$0xff]
        %v2346 = vld [vmem:[%s2344 + $0x8] sm:$0xff]
        %v2347 = vld [vmem:[%s2344 + $0x10] sm:$0xff]
        %v2348 = vld [vmem:[%s2344 + $0x18] sm:$0xff]
        %v2349 = vld [vmem:[%s2344 + $0x20] sm:$0xff]
        %v2350 = vld [vmem:[%s2344 + $0x28] sm:$0xff]
        %v2351 = vld [vmem:[%s2344 + $0x30] sm:$0xff]
        %v2352 = vld [vmem:[%s2344 + $0x38] sm:$0xff]
        %v2353 = vld [vmem:[%s2344 + $0x40] sm:$0xff]
        %v2354 = vld [vmem:[%s2344 + $0x48] sm:$0xff]
        %v2355 = vld [vmem:[%s2344 + $0x50] sm:$0xff]
        %v2356 = vld [vmem:[%s2344 + $0x58] sm:$0xff]
        %v2357 = vld [vmem:[%s2344 + $0x60] sm:$0xff]
        %v2358 = vld [vmem:[%s2344 + $0x68] sm:$0xff]
        %v2359 = vld [vmem:[%s2344 + $0x70] sm:$0xff]
        %v2360 = vld [vmem:[%s2344 + $0x78] sm:$0xff]
        %v2361 = vld [vmem:[%s2344 + $0x80] sm:$0xff]
        %v2362 = vld [vmem:[%s2344 + $0x88] sm:$0xff]
        %v2363 = vld [vmem:[%s2344 + $0x90] sm:$0xff]
        %v2364 = vld [vmem:[%s2344 + $0x98] sm:$0xff]
        %v2365 = vld [vmem:[%s2344 + $0xa0] sm:$0xff]
        %v2366 = vld [vmem:[%s2344 + $0xa8] sm:$0xff]
        %v2367 = vld [vmem:[%s2344 + $0xb0] sm:$0xff]
        %v2368 = vld [vmem:[%s2344 + $0xb8] sm:$0xff]
        %v2369 = vld [vmem:[%s2344 + $0xc0] sm:$0xff]
        %v2370 = vld [vmem:[%s2344 + $0xc8] sm:$0xff]
        %v2371 = vld [vmem:[%s2344 + $0xd0] sm:$0xff]
        %v2373 = vshrl.u32 %v2342, 16
        %v2375 = vshll.u32 %v2342, 16
        %v2377 = vrot.slane %v2375, 1
        %v2378 = vor.u32 %v2373, %v2377
        %v2380 = vshrl.u32 %v2343, 16
        %v2382 = vshll.u32 %v2343, 16
        %v2384 = vrot.slane %v2382, 1
        %v2385 = vor.u32 %v2380, %v2384
        %v2414 = vunpack.c.l.b16 %v2345
        %v2415 = vunpack.c.h.b16 %v2345
        %v2416 = vunpack.c.l.b16 %v2346
        %v2417 = vunpack.c.h.b16 %v2346
        %v2418 = vunpack.c.l.b16 %v2347
        %v2419 = vunpack.c.h.b16 %v2347
        %v2420 = vunpack.c.l.b16 %v2348
        %v2421 = vunpack.c.h.b16 %v2348
        %v2422 = vunpack.c.l.b16 %v2349
        %v2423 = vunpack.c.h.b16 %v2349
        %v2424 = vunpack.c.l.b16 %v2350
        %v2425 = vunpack.c.h.b16 %v2350
        %v2426 = vunpack.c.l.b16 %v2351
        %v2427 = vunpack.c.h.b16 %v2351
        %v2428 = vunpack.c.l.b16 %v2352
        %v2429 = vunpack.c.h.b16 %v2352
        %v2430 = vunpack.c.l.b16 %v2353
        %v2431 = vunpack.c.h.b16 %v2353
        %v2432 = vunpack.c.l.b16 %v2354
        %v2433 = vunpack.c.h.b16 %v2354
        %v2434 = vunpack.c.l.b16 %v2355
        %v2435 = vunpack.c.h.b16 %v2355
        %v2436 = vunpack.c.l.b16 %v2356
        %v2437 = vunpack.c.h.b16 %v2356
        %v2438 = vunpack.c.l.b16 %v2357
        %v2439 = vunpack.c.h.b16 %v2357
        %v2440 = vunpack.c.l.b16 %v2358
        %v2441 = vunpack.c.h.b16 %v2358
        %v2442 = vunpack.c.l.b16 %v2359
        %v2443 = vunpack.c.h.b16 %v2359
        %v2444 = vunpack.c.l.b16 %v2360
        %v2445 = vunpack.c.h.b16 %v2360
        %v2446 = vunpack.c.l.b16 %v2361
        %v2447 = vunpack.c.h.b16 %v2361
        %v2448 = vunpack.c.l.b16 %v2362
        %v2449 = vunpack.c.h.b16 %v2362
        %v2450 = vunpack.c.l.b16 %v2363
        %v2451 = vunpack.c.h.b16 %v2363
        %v2452 = vunpack.c.l.b16 %v2364
        %v2453 = vunpack.c.h.b16 %v2364
        %v2454 = vunpack.c.l.b16 %v2365
        %v2455 = vunpack.c.h.b16 %v2365
        %v2456 = vunpack.c.l.b16 %v2366
        %v2457 = vunpack.c.h.b16 %v2366
        %v2458 = vunpack.c.l.b16 %v2367
        %v2459 = vunpack.c.h.b16 %v2367
        %v2460 = vunpack.c.l.b16 %v2368
        %v2461 = vunpack.c.h.b16 %v2368
        %v2462 = vunpack.c.l.b16 %v2369
        %v2463 = vunpack.c.h.b16 %v2369
        %v2464 = vunpack.c.l.b16 %v2370
        %v2465 = vunpack.c.h.b16 %v2370
        %v2466 = vunpack.c.l.b16 %v2371
        %v2467 = vunpack.c.h.b16 %v2371
        %v2468 = vpack.c.b16 %v2416, %v2414
        %v2469 = vpack.c.b16 %v2417, %v2415
        %v2470 = vpack.c.b16 %v2420, %v2418
        %v2471 = vpack.c.b16 %v2421, %v2419
        %v2472 = vpack.c.b16 %v2424, %v2422
        %v2473 = vpack.c.b16 %v2425, %v2423
        %v2474 = vpack.c.b16 %v2428, %v2426
        %v2475 = vpack.c.b16 %v2429, %v2427
        %v2476 = vpack.c.b16 %v2432, %v2430
        %v2477 = vpack.c.b16 %v2433, %v2431
        %v2478 = vpack.c.b16 %v2436, %v2434
        %v2479 = vpack.c.b16 %v2437, %v2435
        %v2480 = vpack.c.b16 %v2440, %v2438
        %v2481 = vpack.c.b16 %v2441, %v2439
        %v2482 = vpack.c.b16 %v2444, %v2442
        %v2483 = vpack.c.b16 %v2445, %v2443
        %v2484 = vpack.c.b16 %v2448, %v2446
        %v2485 = vpack.c.b16 %v2449, %v2447
        %v2486 = vpack.c.b16 %v2452, %v2450
        %v2487 = vpack.c.b16 %v2453, %v2451
        %v2488 = vpack.c.b16 %v2456, %v2454
        %v2489 = vpack.c.b16 %v2457, %v2455
        %v2490 = vpack.c.b16 %v2460, %v2458
        %v2491 = vpack.c.b16 %v2461, %v2459
        %v2492 = vpack.c.b16 %v2464, %v2462
        %v2493 = vpack.c.b16 %v2465, %v2463
        %v2494 = vpack.c.b16 %v2466, %v2466
        %v2495 = vpack.c.b16 %v2467, %v2467
        %v2523 = vsel %vm2288, %v2385, 0
        %vm2525 = vcmask 1043456
        %v2527 = vsel %vm2525, %v2494, 0
        %v2530 = vsel %vm2525, %v2495, 0
        %2532 = vmatprep.subr.bf16.mxu0 %v2469
        %2533 = vmatpush1.bf16.msra.mxu0 %v2468
        %2534 = vmatprep.subr.bf16.mxu0 %v2471
        %2535 = vmatpush1.bf16.msra.mxu0 %v2470
        %2536 = vmatprep.subr.bf16.mxu0 %v2473
        %2537 = vmatpush1.bf16.msra.mxu0 %v2472
        %2538 = vmatprep.subr.bf16.mxu0 %v2475
        %2539 = vmatpush1.bf16.msra.mxu0 %v2474
        %2540 = vmatprep.subr.bf16.mxu0 %v2477
        %2541 = vmatpush1.bf16.msra.mxu0 %v2476
        %2542 = vmatprep.subr.bf16.mxu0 %v2479
        %2543 = vmatpush1.bf16.msra.mxu0 %v2478
        %2544 = vmatprep.subr.bf16.mxu0 %v2481
        %2545 = vmatpush1.bf16.msra.mxu0 %v2480
        %2546 = vmatprep.subr.bf16.mxu0 %v2483
        %2547 = vmatpush1.bf16.msra.mxu0 %v2482
        %2548 = vmatprep.subr.bf16.mxu0 %v2485
        %2549 = vmatpush1.bf16.msra.mxu0 %v2484
        %2550 = vmatprep.subr.bf16.mxu0 %v2487
        %2551 = vmatpush1.bf16.msra.mxu0 %v2486
        %2552 = vmatprep.subr.bf16.mxu0 %v2489
        %2553 = vmatpush1.bf16.msra.mxu0 %v2488
        %2554 = vmatprep.subr.bf16.mxu0 %v2491
        %2555 = vmatpush1.bf16.msra.mxu0 %v2490
        %2556 = vmatprep.subr.bf16.mxu0 %v2493
        %2557 = vmatpush1.bf16.msra.mxu0 %v2492
        %2558 = vmatprep.subr.bf16.mxu0 %v2530
        %2559 = vmatpush1.bf16.msra.mxu0 %v2527
        %2560 = vmatprep.subr.bf16.mxu0 0
        %2561 = vmatpush1.bf16.msra.mxu0 0
        %2562 = vmatprep.subr.bf16.mxu0 0
        %2563 = vmatpush1.bf16.msra.mxu0 0
        %2564 = vmatprep.mubr.bf16.mxu0 %v2523
        %2565 = vmatmul.mubr.bf16.gmra.mrb[0].mxu0 %v2378
        %v2566 = vpop.f32.mrb[0].mxu0
        %v2567 = vadd.f32 0.0, %v2566
        %v2568 = vpop.f32.mrb[0].mxu0
        %v2569 = vadd.f32 0.0, %v2568
        %v2570 = vpop.f32.mrb[0].mxu0
        %v2571 = vpop.f32.mrb[0].mxu0
        %2572 = vdwg.mxu0
        %v2600 = vunpack.c.l.b16 %v2313
        %v2601 = vunpack.c.h.b16 %v2313
        %v2602 = vunpack.c.l.b16 %v2314
        %v2603 = vunpack.c.h.b16 %v2314
        %v2604 = vunpack.c.l.b16 %v2315
        %v2605 = vunpack.c.h.b16 %v2315
        %v2606 = vunpack.c.l.b16 %v2316
        %v2607 = vunpack.c.h.b16 %v2316
        %v2608 = vunpack.c.l.b16 %v2317
        %v2609 = vunpack.c.h.b16 %v2317
        %v2610 = vunpack.c.l.b16 %v2318
        %v2611 = vunpack.c.h.b16 %v2318
        %v2612 = vunpack.c.l.b16 %v2319
        %v2613 = vunpack.c.h.b16 %v2319
        %v2614 = vunpack.c.l.b16 %v2320
        %v2615 = vunpack.c.h.b16 %v2320
        %v2616 = vunpack.c.l.b16 %v2321
        %v2617 = vunpack.c.h.b16 %v2321
        %v2618 = vunpack.c.l.b16 %v2322
        %v2619 = vunpack.c.h.b16 %v2322
        %v2620 = vunpack.c.l.b16 %v2323
        %v2621 = vunpack.c.h.b16 %v2323
        %v2622 = vunpack.c.l.b16 %v2324
        %v2623 = vunpack.c.h.b16 %v2324
        %v2624 = vunpack.c.l.b16 %v2325
        %v2625 = vunpack.c.h.b16 %v2325
        %v2626 = vunpack.c.l.b16 %v2326
        %v2627 = vunpack.c.h.b16 %v2326
        %v2628 = vunpack.c.l.b16 %v2327
        %v2629 = vunpack.c.h.b16 %v2327
        %v2630 = vunpack.c.l.b16 %v2328
        %v2631 = vunpack.c.h.b16 %v2328
        %v2632 = vunpack.c.l.b16 %v2329
        %v2633 = vunpack.c.h.b16 %v2329
        %v2634 = vunpack.c.l.b16 %v2330
        %v2635 = vunpack.c.h.b16 %v2330
        %v2636 = vunpack.c.l.b16 %v2331
        %v2637 = vunpack.c.h.b16 %v2331
        %v2638 = vunpack.c.l.b16 %v2332
        %v2639 = vunpack.c.h.b16 %v2332
        %v2640 = vunpack.c.l.b16 %v2333
        %v2641 = vunpack.c.h.b16 %v2333
        %v2642 = vunpack.c.l.b16 %v2334
        %v2643 = vunpack.c.h.b16 %v2334
        %v2644 = vunpack.c.l.b16 %v2335
        %v2645 = vunpack.c.h.b16 %v2335
        %v2646 = vunpack.c.l.b16 %v2336
        %v2647 = vunpack.c.h.b16 %v2336
        %v2648 = vunpack.c.l.b16 %v2337
        %v2649 = vunpack.c.h.b16 %v2337
        %v2650 = vunpack.c.l.b16 %v2338
        %v2651 = vunpack.c.h.b16 %v2338
        %v2652 = vunpack.c.l.b16 %v2339
        %v2653 = vunpack.c.h.b16 %v2339
        %v2654 = vpack.c.b16 %v2602, %v2600
        %v2655 = vpack.c.b16 %v2603, %v2601
        %v2656 = vpack.c.b16 %v2606, %v2604
        %v2657 = vpack.c.b16 %v2607, %v2605
        %v2658 = vpack.c.b16 %v2610, %v2608
        %v2659 = vpack.c.b16 %v2611, %v2609
        %v2660 = vpack.c.b16 %v2614, %v2612
        %v2661 = vpack.c.b16 %v2615, %v2613
        %v2662 = vpack.c.b16 %v2618, %v2616
        %v2663 = vpack.c.b16 %v2619, %v2617
        %v2664 = vpack.c.b16 %v2622, %v2620
        %v2665 = vpack.c.b16 %v2623, %v2621
        %v2666 = vpack.c.b16 %v2626, %v2624
        %v2667 = vpack.c.b16 %v2627, %v2625
        %v2668 = vpack.c.b16 %v2630, %v2628
        %v2669 = vpack.c.b16 %v2631, %v2629
        %v2670 = vpack.c.b16 %v2634, %v2632
        %v2671 = vpack.c.b16 %v2635, %v2633
        %v2672 = vpack.c.b16 %v2638, %v2636
        %v2673 = vpack.c.b16 %v2639, %v2637
        %v2674 = vpack.c.b16 %v2642, %v2640
        %v2675 = vpack.c.b16 %v2643, %v2641
        %v2676 = vpack.c.b16 %v2646, %v2644
        %v2677 = vpack.c.b16 %v2647, %v2645
        %v2678 = vpack.c.b16 %v2650, %v2648
        %v2679 = vpack.c.b16 %v2651, %v2649
        %v2680 = vpack.c.b16 %v2652, %v2652
        %v2681 = vpack.c.b16 %v2653, %v2653
        %v2709 = vsel %vm2288, %v2312, 0
        %v2712 = vsel %vm2525, %v2680, 0
        %v2715 = vsel %vm2525, %v2681, 0
        %2717 = vmatprep.subr.bf16.mxu0 %v2655
        %2718 = vmatpush1.bf16.msra.mxu0 %v2654
        %2719 = vmatprep.subr.bf16.mxu0 %v2657
        %2720 = vmatpush1.bf16.msra.mxu0 %v2656
        %2721 = vmatprep.subr.bf16.mxu0 %v2659
        %2722 = vmatpush1.bf16.msra.mxu0 %v2658
        %2723 = vmatprep.subr.bf16.mxu0 %v2661
        %2724 = vmatpush1.bf16.msra.mxu0 %v2660
        %2725 = vmatprep.subr.bf16.mxu0 %v2663
        %2726 = vmatpush1.bf16.msra.mxu0 %v2662
        %2727 = vmatprep.subr.bf16.mxu0 %v2665
        %2728 = vmatpush1.bf16.msra.mxu0 %v2664
        %2729 = vmatprep.subr.bf16.mxu0 %v2667
        %2730 = vmatpush1.bf16.msra.mxu0 %v2666
        %2731 = vmatprep.subr.bf16.mxu0 %v2669
        %2732 = vmatpush1.bf16.msra.mxu0 %v2668
        %2733 = vmatprep.subr.bf16.mxu0 %v2671
        %2734 = vmatpush1.bf16.msra.mxu0 %v2670
        %2735 = vmatprep.subr.bf16.mxu0 %v2673
        %2736 = vmatpush1.bf16.msra.mxu0 %v2672
        %2737 = vmatprep.subr.bf16.mxu0 %v2675
        %2738 = vmatpush1.bf16.msra.mxu0 %v2674
        %2739 = vmatprep.subr.bf16.mxu0 %v2677
        %2740 = vmatpush1.bf16.msra.mxu0 %v2676
        %2741 = vmatprep.subr.bf16.mxu0 %v2679
        %2742 = vmatpush1.bf16.msra.mxu0 %v2678
        %2743 = vmatprep.subr.bf16.mxu0 %v2715
        %2744 = vmatpush1.bf16.msra.mxu0 %v2712
        %2745 = vmatprep.subr.bf16.mxu0 0
        %2746 = vmatpush1.bf16.msra.mxu0 0
        %2747 = vmatprep.subr.bf16.mxu0 0
        %2748 = vmatpush1.bf16.msra.mxu0 0
        %2749 = vmatprep.mubr.bf16.mxu0 %v2709
        %2750 = vmatmul.mubr.bf16.gmra.mrb[0].mxu0 %v2311
        %v2751 = vpop.f32.mrb[0].mxu0
        %v2752 = vadd.f32 %v2567, %v2751
        %v2753 = vpop.f32.mrb[0].mxu0
        %v2754 = vadd.f32 %v2569, %v2753
        %v2755 = vpop.f32.mrb[0].mxu0
        %v2756 = vpop.f32.mrb[0].mxu0
        %2757 = vdwg.mxu0
        %v2758 = vld [vmem:[#allocation4] sm:$0xfc]
        %v2759 = vld [vmem:[#allocation4 + $0x8] sm:$0xfc]
        %v2760 = vld [vmem:[#allocation4 + $0x10] sm:$0x1]
        %v2761 = vld [vmem:[#allocation4 + $0x18] sm:$0x1]
        %v2762 = vpack.c.bf16 %v2760, %v2758
        %v2763 = vpack.c.bf16 %v2761, %v2759
        %s2764 = scalar_lea.vmem %s9, 432
        %v2765 = vld [vmem:[%s2764] sm:$0xff]
        %v2766 = vld [vmem:[%s2764 + $0x8] sm:$0xff]
        %v2767 = vld [vmem:[%s2764 + $0x10] sm:$0xff]
        %v2768 = vld [vmem:[%s2764 + $0x18] sm:$0xff]
        %v2769 = vld [vmem:[%s2764 + $0x20] sm:$0xff]
        %v2770 = vld [vmem:[%s2764 + $0x28] sm:$0xff]
        %v2771 = vld [vmem:[%s2764 + $0x30] sm:$0xff]
        %v2772 = vld [vmem:[%s2764 + $0x38] sm:$0xff]
        %v2773 = vld [vmem:[%s2764 + $0x40] sm:$0xff]
        %v2774 = vld [vmem:[%s2764 + $0x48] sm:$0xff]
        %v2775 = vld [vmem:[%s2764 + $0x50] sm:$0xff]
        %v2776 = vld [vmem:[%s2764 + $0x58] sm:$0xff]
        %v2777 = vld [vmem:[%s2764 + $0x60] sm:$0xff]
        %v2778 = vld [vmem:[%s2764 + $0x68] sm:$0xff]
        %v2779 = vld [vmem:[%s2764 + $0x70] sm:$0xff]
        %v2780 = vld [vmem:[%s2764 + $0x78] sm:$0xff]
        %v2781 = vld [vmem:[%s2764 + $0x80] sm:$0xff]
        %v2782 = vld [vmem:[%s2764 + $0x88] sm:$0xff]
        %v2783 = vld [vmem:[%s2764 + $0x90] sm:$0xff]
        %v2784 = vld [vmem:[%s2764 + $0x98] sm:$0xff]
        %v2785 = vld [vmem:[%s2764 + $0xa0] sm:$0xff]
        %v2786 = vld [vmem:[%s2764 + $0xa8] sm:$0xff]
        %v2787 = vld [vmem:[%s2764 + $0xb0] sm:$0xff]
        %v2788 = vld [vmem:[%s2764 + $0xb8] sm:$0xff]
        %v2789 = vld [vmem:[%s2764 + $0xc0] sm:$0xff]
        %v2790 = vld [vmem:[%s2764 + $0xc8] sm:$0xff]
        %v2791 = vld [vmem:[%s2764 + $0xd0] sm:$0xff]
        %v2794 = vrot.slane %v2762, 1
        %v2795 = vrot.slane %v2763, 1
        %v2824 = vunpack.c.l.b16 %v2765
        %v2825 = vunpack.c.h.b16 %v2765
        %v2826 = vunpack.c.l.b16 %v2766
        %v2827 = vunpack.c.h.b16 %v2766
        %v2828 = vunpack.c.l.b16 %v2767
        %v2829 = vunpack.c.h.b16 %v2767
        %v2830 = vunpack.c.l.b16 %v2768
        %v2831 = vunpack.c.h.b16 %v2768
        %v2832 = vunpack.c.l.b16 %v2769
        %v2833 = vunpack.c.h.b16 %v2769
        %v2834 = vunpack.c.l.b16 %v2770
        %v2835 = vunpack.c.h.b16 %v2770
        %v2836 = vunpack.c.l.b16 %v2771
        %v2837 = vunpack.c.h.b16 %v2771
        %v2838 = vunpack.c.l.b16 %v2772
        %v2839 = vunpack.c.h.b16 %v2772
        %v2840 = vunpack.c.l.b16 %v2773
        %v2841 = vunpack.c.h.b16 %v2773
        %v2842 = vunpack.c.l.b16 %v2774
        %v2843 = vunpack.c.h.b16 %v2774
        %v2844 = vunpack.c.l.b16 %v2775
        %v2845 = vunpack.c.h.b16 %v2775
        %v2846 = vunpack.c.l.b16 %v2776
        %v2847 = vunpack.c.h.b16 %v2776
        %v2848 = vunpack.c.l.b16 %v2777
        %v2849 = vunpack.c.h.b16 %v2777
        %v2850 = vunpack.c.l.b16 %v2778
        %v2851 = vunpack.c.h.b16 %v2778
        %v2852 = vunpack.c.l.b16 %v2779
        %v2853 = vunpack.c.h.b16 %v2779
        %v2854 = vunpack.c.l.b16 %v2780
        %v2855 = vunpack.c.h.b16 %v2780
        %v2856 = vunpack.c.l.b16 %v2781
        %v2857 = vunpack.c.h.b16 %v2781
        %v2858 = vunpack.c.l.b16 %v2782
        %v2859 = vunpack.c.h.b16 %v2782
        %v2860 = vunpack.c.l.b16 %v2783
        %v2861 = vunpack.c.h.b16 %v2783
        %v2862 = vunpack.c.l.b16 %v2784
        %v2863 = vunpack.c.h.b16 %v2784
        %v2864 = vunpack.c.l.b16 %v2785
        %v2865 = vunpack.c.h.b16 %v2785
        %v2866 = vunpack.c.l.b16 %v2786
        %v2867 = vunpack.c.h.b16 %v2786
        %v2868 = vunpack.c.l.b16 %v2787
        %v2869 = vunpack.c.h.b16 %v2787
        %v2870 = vunpack.c.l.b16 %v2788
        %v2871 = vunpack.c.h.b16 %v2788
        %v2872 = vunpack.c.l.b16 %v2789
        %v2873 = vunpack.c.h.b16 %v2789
        %v2874 = vunpack.c.l.b16 %v2790
        %v2875 = vunpack.c.h.b16 %v2790
        %v2876 = vunpack.c.l.b16 %v2791
        %v2877 = vunpack.c.h.b16 %v2791
        %v2878 = vpack.c.b16 %v2826, %v2824
        %v2879 = vpack.c.b16 %v2827, %v2825
        %v2880 = vpack.c.b16 %v2830, %v2828
        %v2881 = vpack.c.b16 %v2831, %v2829
        %v2882 = vpack.c.b16 %v2834, %v2832
        %v2883 = vpack.c.b16 %v2835, %v2833
        %v2884 = vpack.c.b16 %v2838, %v2836
        %v2885 = vpack.c.b16 %v2839, %v2837
        %v2886 = vpack.c.b16 %v2842, %v2840
        %v2887 = vpack.c.b16 %v2843, %v2841
        %v2888 = vpack.c.b16 %v2846, %v2844
        %v2889 = vpack.c.b16 %v2847, %v2845
        %v2890 = vpack.c.b16 %v2850, %v2848
        %v2891 = vpack.c.b16 %v2851, %v2849
        %v2892 = vpack.c.b16 %v2854, %v2852
        %v2893 = vpack.c.b16 %v2855, %v2853
        %v2894 = vpack.c.b16 %v2858, %v2856
        %v2895 = vpack.c.b16 %v2859, %v2857
        %v2896 = vpack.c.b16 %v2862, %v2860
        %v2897 = vpack.c.b16 %v2863, %v2861
        %v2898 = vpack.c.b16 %v2866, %v2864
        %v2899 = vpack.c.b16 %v2867, %v2865
        %v2900 = vpack.c.b16 %v2870, %v2868
        %v2901 = vpack.c.b16 %v2871, %v2869
        %v2902 = vpack.c.b16 %v2874, %v2872
        %v2903 = vpack.c.b16 %v2875, %v2873
        %v2904 = vpack.c.b16 %v2876, %v2876
        %v2905 = vpack.c.b16 %v2877, %v2877
        %v2933 = vsel %vm2288, %v2795, 0
        %v2936 = vsel %vm2525, %v2904, 0
        %v2939 = vsel %vm2525, %v2905, 0
        %2941 = vmatprep.subr.bf16.mxu0 %v2879
        %2942 = vmatpush1.bf16.msra.mxu0 %v2878
        %2943 = vmatprep.subr.bf16.mxu0 %v2881
        %2944 = vmatpush1.bf16.msra.mxu0 %v2880
        %2945 = vmatprep.subr.bf16.mxu0 %v2883
        %2946 = vmatpush1.bf16.msra.mxu0 %v2882
        %2947 = vmatprep.subr.bf16.mxu0 %v2885
        %2948 = vmatpush1.bf16.msra.mxu0 %v2884
        %2949 = vmatprep.subr.bf16.mxu0 %v2887
        %2950 = vmatpush1.bf16.msra.mxu0 %v2886
        %2951 = vmatprep.subr.bf16.mxu0 %v2889
        %2952 = vmatpush1.bf16.msra.mxu0 %v2888
        %2953 = vmatprep.subr.bf16.mxu0 %v2891
        %2954 = vmatpush1.bf16.msra.mxu0 %v2890
        %2955 = vmatprep.subr.bf16.mxu0 %v2893
        %2956 = vmatpush1.bf16.msra.mxu0 %v2892
        %2957 = vmatprep.subr.bf16.mxu0 %v2895
        %2958 = vmatpush1.bf16.msra.mxu0 %v2894
        %2959 = vmatprep.subr.bf16.mxu0 %v2897
        %2960 = vmatpush1.bf16.msra.mxu0 %v2896
        %2961 = vmatprep.subr.bf16.mxu0 %v2899
        %2962 = vmatpush1.bf16.msra.mxu0 %v2898
        %2963 = vmatprep.subr.bf16.mxu0 %v2901
        %2964 = vmatpush1.bf16.msra.mxu0 %v2900
        %2965 = vmatprep.subr.bf16.mxu0 %v2903
        %2966 = vmatpush1.bf16.msra.mxu0 %v2902
        %2967 = vmatprep.subr.bf16.mxu0 %v2939
        %2968 = vmatpush1.bf16.msra.mxu0 %v2936
        %2969 = vmatprep.subr.bf16.mxu0 0
        %2970 = vmatpush1.bf16.msra.mxu0 0
        %2971 = vmatprep.subr.bf16.mxu0 0
        %2972 = vmatpush1.bf16.msra.mxu0 0
        %2973 = vmatprep.mubr.bf16.mxu0 %v2933
        %2974 = vmatmul.mubr.bf16.gmra.mrb[0].mxu0 %v2794
        %v2975 = vpop.f32.mrb[0].mxu0
        %v2976 = vadd.f32 0.0, %v2975
        %v2977 = vpop.f32.mrb[0].mxu0
        %v2978 = vadd.f32 0.0, %v2977
        %v2979 = vpop.f32.mrb[0].mxu0
        %v2980 = vpop.f32.mrb[0].mxu0
        %2981 = vdwg.mxu0
        %v2982 = vadd.f32 %v2752, %v2976
        %v2983 = vadd.f32 %v2754, %v2978
        %v2984 = vld [vmem:[%s10] sm:$0x3]
        %v2986 = vlaneseq
        %v2987 = vshrl.u32 %v2986, 7
        %v2988 = vsub.s32 0, %v2987
        %v2989 = vrot.slane %v2984, %v2988
        %v2990 = vlaneseq
        %v2991 = vshrl.u32 %v2990, 7
        %v2992 = vsub.s32 1, %v2991
        %v2993 = vrot.slane %v2984, %v2992
        %v2996 = vadd.f32 %v2982, %v2989
        %v2997 = vadd.f32 %v2983, %v2993
        %v2998 = vmax.f32 %v2996, 0.0
        %v2999 = vmax.f32 %v2997, 0.0
        %vm3000 = vcmask 588800
        %3001 = vst.msk [vmem:[#allocation5] sm:$0xff] %vm3000, 0.0
        %vm3002 = vcmask 581632
        %3003 = vst.msk [vmem:[#allocation5 + $0x8] sm:$0x1] %vm3002, 0.0
        %3005 = vrot.lane.b32.xlu0 %v1087, 8
        %v3006 = vpop.permute.xlu0 %3005
        %vm3008 = vcmask 522304
        %3009 = vst.msk [vmem:[#allocation5 + $0x1] sm:$0x7f] %vm3008, %v3006
        %v3010 = vld [vmem:[#allocation5] sm:$0x7f]
        %v3011 = vadd.f32 %v3010, 0.0
        %3013 = vrot.lane.b32.xlu0 %v3010, 120
        %v3014 = vpop.permute.xlu0 %3013
        %v3016 = vadd.f32 %v3011, %v3014
        %3017 = vrot.lane.b32.xlu0 %v3010, 112
        %v3018 = vpop.permute.xlu0 %3017
        %v3020 = vadd.f32 %v3016, %v3018
        %v3021 = vld [vmem:[#allocation5 + $0x1] sm:$0x7f]
        %v3022 = vadd.f32 %v3020, %v3021
        %3024 = vrot.lane.b32.xlu0 %v3021, 120
        %v3025 = vpop.permute.xlu0 %3024
        %v3027 = vadd.f32 %v3022, %v3025
        %3028 = vrot.lane.b32.xlu0 %v3021, 112
        %v3029 = vpop.permute.xlu0 %3028
        %v3031 = vadd.f32 %v3027, %v3029
        %v3032 = vld [vmem:[#allocation5 + $0x2] sm:$0x7f]
        %v3033 = vadd.f32 %v3031, %v3032
        %3035 = vrot.lane.b32.xlu0 %v3032, 120
        %v3036 = vpop.permute.xlu0 %3035
        %v3038 = vadd.f32 %v3033, %v3036
        %3039 = vrot.lane.b32.xlu0 %v3032, 112
        %v3040 = vpop.permute.xlu0 %3039
        %v3042 = vadd.f32 %v3038, %v3040
        %v3043 = vmul.f32 %v3042, 0.11111111
        %v3044 = vld [vmem:[%s11] sm:$0x1]
        %v3046 = vlaneseq
        %v3047 = vshrl.u32 %v3046, 7
        %v3048 = vsub.s32 0, %v3047
        %v3049 = vrot.slane %v3044, %v3048
        %v3051 = vadd.f32 %v3043, %v3049
        %v3052 = vmax.f32 %v3051, 0.0
        %v3053 = vld [vmem:[%s12] sm:$0xff]
        %v3054 = vld [vmem:[%s12 + $0x8] sm:$0xff]
        %v3055 = vld [vmem:[%s12 + $0x10] sm:$0xff]
        %v3056 = vld [vmem:[%s12 + $0x18] sm:$0xff]
        %v3057 = vld [vmem:[%s12 + $0x20] sm:$0xff]
        %v3058 = vld [vmem:[%s12 + $0x28] sm:$0xff]
        %v3059 = vld [vmem:[%s12 + $0x30] sm:$0xff]
        %v3060 = vld [vmem:[%s12 + $0x38] sm:$0xff]
        %v3061 = vld [vmem:[%s12 + $0x40] sm:$0xff]
        %v3062 = vld [vmem:[%s12 + $0x48] sm:$0xff]
        %v3063 = vld [vmem:[%s12 + $0x50] sm:$0xff]
        %v3064 = vld [vmem:[%s12 + $0x58] sm:$0xff]
        %v3065 = vld [vmem:[%s12 + $0x60] sm:$0xff]
        %v3066 = vld [vmem:[%s12 + $0x68] sm:$0xff]
        %v3067 = vld [vmem:[%s13] sm:$0xff]
        %v3068 = vld [vmem:[%s13 + $0x8] sm:$0xff]
        %v3069 = vld [vmem:[%s13 + $0x10] sm:$0xff]
        %v3070 = vld [vmem:[%s13 + $0x18] sm:$0xff]
        %v3071 = vld [vmem:[%s13 + $0x20] sm:$0xff]
        %v3072 = vld [vmem:[%s13 + $0x28] sm:$0xff]
        %v3073 = vld [vmem:[%s13 + $0x30] sm:$0xff]
        %v3074 = vld [vmem:[%s13 + $0x38] sm:$0xff]
        %v3075 = vld [vmem:[%s13 + $0x40] sm:$0xff]
        %v3076 = vld [vmem:[%s13 + $0x48] sm:$0xff]
        %v3077 = vld [vmem:[%s13 + $0x50] sm:$0xff]
        %v3078 = vld [vmem:[%s13 + $0x58] sm:$0xff]
        %v3079 = vld [vmem:[%s13 + $0x60] sm:$0xff]
        %v3080 = vld [vmem:[%s13 + $0x68] sm:$0xff]
        %v3082 = vsel %vm1005, %v1763, 0
        %3084 = vmatprep.subr.mxu0 0.0
        %3085 = vmatpush1.msra.mxu0 %v3067
        %3086 = vmatprep.subr.mxu0 0.0
        %3087 = vmatpush1.msra.mxu0 %v3068
        %3088 = vmatprep.subr.mxu0 0.0
        %3089 = vmatpush1.msra.mxu0 %v3069
        %3090 = vmatprep.subr.mxu0 0.0
        %3091 = vmatpush1.msra.mxu0 %v3070
        %3092 = vmatprep.subr.mxu0 0.0
        %3093 = vmatpush1.msra.mxu0 %v3071
        %3094 = vmatprep.subr.mxu0 0.0
        %3095 = vmatpush1.msra.mxu0 %v3072
        %3096 = vmatprep.subr.mxu0 0.0
        %3097 = vmatpush1.msra.mxu0 %v3073
        %3098 = vmatprep.subr.mxu0 0.0
        %3099 = vmatpush1.msra.mxu0 %v3074
        %3100 = vmatprep.subr.mxu0 0.0
        %3101 = vmatpush1.msra.mxu0 %v3075
        %3102 = vmatprep.subr.mxu0 0.0
        %3103 = vmatpush1.msra.mxu0 %v3076
        %3104 = vmatprep.subr.mxu0 0.0
        %3105 = vmatpush1.msra.mxu0 %v3077
        %3106 = vmatprep.subr.mxu0 0.0
        %3107 = vmatpush1.msra.mxu0 %v3078
        %3108 = vmatprep.subr.mxu0 0.0
        %3109 = vmatpush1.msra.mxu0 %v3079
        %3110 = vmatprep.subr.mxu0 0.0
        %3111 = vmatpush1.msra.mxu0 %v3080
        %3112 = vmatprep.subr.mxu0 0.0
        %3113 = vmatpush1.msra.mxu0 0.0
        %3114 = vmatprep.subr.mxu0 0.0
        %3115 = vmatpush1.msra.mxu0 0.0
        %3116 = vmatprep.subr.mxu0 0.0
        %3117 = vmatpush1.msra.mxu0 0.0
        %3118 = vmatprep.subr.mxu0 0.0
        %3119 = vmatpush1.msra.mxu0 0.0
        %3120 = vmatprep.subr.mxu0 0.0
        %3121 = vmatpush1.msra.mxu0 0.0
        %3122 = vmatprep.subr.mxu0 0.0
        %3123 = vmatpush1.msra.mxu0 0.0
        %3124 = vmatprep.subr.mxu0 0.0
        %3125 = vmatpush1.msra.mxu0 0.0
        %3126 = vmatprep.subr.mxu0 0.0
        %3127 = vmatpush1.msra.mxu0 0.0
        %3128 = vmatprep.subr.mxu0 0.0
        %3129 = vmatpush1.msra.mxu0 0.0
        %3130 = vmatprep.subr.mxu0 0.0
        %3131 = vmatpush1.msra.mxu0 0.0
        %3132 = vmatprep.subr.mxu0 0.0
        %3133 = vmatpush1.msra.mxu0 0.0
        %3134 = vmatprep.subr.mxu0 0.0
        %3135 = vmatpush1.msra.mxu0 0.0
        %3136 = vmatprep.subr.mxu0 0.0
        %3137 = vmatpush1.msra.mxu0 0.0
        %3138 = vmatprep.subr.mxu0 0.0
        %3139 = vmatpush1.msra.mxu0 0.0
        %3140 = vmatprep.subr.mxu0 0.0
        %3141 = vmatpush1.msra.mxu0 0.0
        %3142 = vmatprep.subr.mxu0 0.0
        %3143 = vmatpush1.msra.mxu0 0.0
        %3144 = vmatprep.subr.mxu0 0.0
        %3145 = vmatpush1.msra.mxu0 0.0
        %3146 = vmatprep.subr.mxu0 0.0
        %3147 = vmatpush1.msra.mxu0 0.0
        %3148 = vmatprep.mubr.f32.mxu0 0.0
        %3149 = vmatmul.mubr.f32.gmra.mrb[0].mxu0 %v3082
        %v3150 = vpop.f32.mrb[0].mxu0
        %v3151 = vadd.f32 0.0, %v3150
        %v3152 = vpop.f32.mrb[0].mxu0
        %3153 = vdwg.mxu0
        %v3155 = vsel %vm1005, %v1091, 0
        %3157 = vmatprep.subr.mxu0 0.0
        %3158 = vmatpush1.msra.mxu0 %v3053
        %3159 = vmatprep.subr.mxu0 0.0
        %3160 = vmatpush1.msra.mxu0 %v3054
        %3161 = vmatprep.subr.mxu0 0.0
        %3162 = vmatpush1.msra.mxu0 %v3055
        %3163 = vmatprep.subr.mxu0 0.0
        %3164 = vmatpush1.msra.mxu0 %v3056
        %3165 = vmatprep.subr.mxu0 0.0
        %3166 = vmatpush1.msra.mxu0 %v3057
        %3167 = vmatprep.subr.mxu0 0.0
        %3168 = vmatpush1.msra.mxu0 %v3058
        %3169 = vmatprep.subr.mxu0 0.0
        %3170 = vmatpush1.msra.mxu0 %v3059
        %3171 = vmatprep.subr.mxu0 0.0
        %3172 = vmatpush1.msra.mxu0 %v3060
        %3173 = vmatprep.subr.mxu0 0.0
        %3174 = vmatpush1.msra.mxu0 %v3061
        %3175 = vmatprep.subr.mxu0 0.0
        %3176 = vmatpush1.msra.mxu0 %v3062
        %3177 = vmatprep.subr.mxu0 0.0
        %3178 = vmatpush1.msra.mxu0 %v3063
        %3179 = vmatprep.subr.mxu0 0.0
        %3180 = vmatpush1.msra.mxu0 %v3064
        %3181 = vmatprep.subr.mxu0 0.0
        %3182 = vmatpush1.msra.mxu0 %v3065
        %3183 = vmatprep.subr.mxu0 0.0
        %3184 = vmatpush1.msra.mxu0 %v3066
        %3185 = vmatprep.subr.mxu0 0.0
        %3186 = vmatpush1.msra.mxu0 0.0
        %3187 = vmatprep.subr.mxu0 0.0
        %3188 = vmatpush1.msra.mxu0 0.0
        %3189 = vmatprep.subr.mxu0 0.0
        %3190 = vmatpush1.msra.mxu0 0.0
        %3191 = vmatprep.subr.mxu0 0.0
        %3192 = vmatpush1.msra.mxu0 0.0
        %3193 = vmatprep.subr.mxu0 0.0
        %3194 = vmatpush1.msra.mxu0 0.0
        %3195 = vmatprep.subr.mxu0 0.0
        %3196 = vmatpush1.msra.mxu0 0.0
        %3197 = vmatprep.subr.mxu0 0.0
        %3198 = vmatpush1.msra.mxu0 0.0
        %3199 = vmatprep.subr.mxu0 0.0
        %3200 = vmatpush1.msra.mxu0 0.0
        %3201 = vmatprep.subr.mxu0 0.0
        %3202 = vmatpush1.msra.mxu0 0.0
        %3203 = vmatprep.subr.mxu0 0.0
        %3204 = vmatpush1.msra.mxu0 0.0
        %3205 = vmatprep.subr.mxu0 0.0
        %3206 = vmatpush1.msra.mxu0 0.0
        %3207 = vmatprep.subr.mxu0 0.0
        %3208 = vmatpush1.msra.mxu0 0.0
        %3209 = vmatprep.subr.mxu0 0.0
        %3210 = vmatpush1.msra.mxu0 0.0
        %3211 = vmatprep.subr.mxu0 0.0
        %3212 = vmatpush1.msra.mxu0 0.0
        %3213 = vmatprep.subr.mxu0 0.0
        %3214 = vmatpush1.msra.mxu0 0.0
        %3215 = vmatprep.subr.mxu0 0.0
        %3216 = vmatpush1.msra.mxu0 0.0
        %3217 = vmatprep.subr.mxu0 0.0
        %3218 = vmatpush1.msra.mxu0 0.0
        %3219 = vmatprep.subr.mxu0 0.0
        %3220 = vmatpush1.msra.mxu0 0.0
        %3221 = vmatprep.mubr.f32.mxu0 0.0
        %3222 = vmatmul.mubr.f32.gmra.mrb[0].mxu0 %v3155
        %v3223 = vpop.f32.mrb[0].mxu0
        %v3224 = vadd.f32 %v3151, %v3223
        %v3225 = vpop.f32.mrb[0].mxu0
        %3226 = vdwg.mxu0
        %v3227 = vld [vmem:[%s14] sm:$0xff]
        %v3228 = vld [vmem:[%s14 + $0x8] sm:$0xff]
        %v3229 = vld [vmem:[%s14 + $0x10] sm:$0xff]
        %v3230 = vld [vmem:[%s14 + $0x18] sm:$0xff]
        %v3231 = vld [vmem:[%s14 + $0x20] sm:$0xff]
        %v3232 = vld [vmem:[%s14 + $0x28] sm:$0xff]
        %v3233 = vld [vmem:[%s14 + $0x30] sm:$0xff]
        %v3234 = vld [vmem:[%s14 + $0x38] sm:$0xff]
        %v3235 = vld [vmem:[%s14 + $0x40] sm:$0xff]
        %v3236 = vld [vmem:[%s14 + $0x48] sm:$0xff]
        %v3237 = vld [vmem:[%s14 + $0x50] sm:$0xff]
        %v3238 = vld [vmem:[%s14 + $0x58] sm:$0xff]
        %v3239 = vld [vmem:[%s14 + $0x60] sm:$0xff]
        %v3240 = vld [vmem:[%s14 + $0x68] sm:$0xff]
        %v3241 = vld [vmem:[%s14 + $0x70] sm:$0xff]
        %v3242 = vld [vmem:[%s14 + $0x78] sm:$0xff]
        %v3243 = vld [vmem:[%s14 + $0x80] sm:$0xff]
        %v3244 = vld [vmem:[%s14 + $0x88] sm:$0xff]
        %v3245 = vld [vmem:[%s14 + $0x90] sm:$0xff]
        %v3246 = vld [vmem:[%s14 + $0x98] sm:$0xff]
        %v3247 = vld [vmem:[%s14 + $0xa0] sm:$0xff]
        %vm3248 = vcmask 326656
        %v3250 = vsel %vm3248, %v2999, 0
        %3252 = vmatprep.subr.mxu0 0.0
        %3253 = vmatpush1.msra.mxu0 %v3227
        %3254 = vmatprep.subr.mxu0 0.0
        %3255 = vmatpush1.msra.mxu0 %v3228
        %3256 = vmatprep.subr.mxu0 0.0
        %3257 = vmatpush1.msra.mxu0 %v3229
        %3258 = vmatprep.subr.mxu0 0.0
        %3259 = vmatpush1.msra.mxu0 %v3230
        %3260 = vmatprep.subr.mxu0 0.0
        %3261 = vmatpush1.msra.mxu0 %v3231
        %3262 = vmatprep.subr.mxu0 0.0
        %3263 = vmatpush1.msra.mxu0 %v3232
        %3264 = vmatprep.subr.mxu0 0.0
        %3265 = vmatpush1.msra.mxu0 %v3233
        %3266 = vmatprep.subr.mxu0 0.0
        %3267 = vmatpush1.msra.mxu0 %v3234
        %3268 = vmatprep.subr.mxu0 0.0
        %3269 = vmatpush1.msra.mxu0 %v3235
        %3270 = vmatprep.subr.mxu0 0.0
        %3271 = vmatpush1.msra.mxu0 %v3236
        %3272 = vmatprep.subr.mxu0 0.0
        %3273 = vmatpush1.msra.mxu0 %v3237
        %3274 = vmatprep.subr.mxu0 0.0
        %3275 = vmatpush1.msra.mxu0 %v3238
        %3276 = vmatprep.subr.mxu0 0.0
        %3277 = vmatpush1.msra.mxu0 %v3239
        %3278 = vmatprep.subr.mxu0 0.0
        %3279 = vmatpush1.msra.mxu0 %v3240
        %3280 = vmatprep.subr.mxu0 0.0
        %3281 = vmatpush1.msra.mxu0 %v3241
        %3282 = vmatprep.subr.mxu0 0.0
        %3283 = vmatpush1.msra.mxu0 %v3242
        %3284 = vmatprep.subr.mxu0 0.0
        %3285 = vmatpush1.msra.mxu0 %v3243
        %3286 = vmatprep.subr.mxu0 0.0
        %3287 = vmatpush1.msra.mxu0 %v3244
        %3288 = vmatprep.subr.mxu0 0.0
        %3289 = vmatpush1.msra.mxu0 %v3245
        %3290 = vmatprep.subr.mxu0 0.0
        %3291 = vmatpush1.msra.mxu0 %v3246
        %3292 = vmatprep.subr.mxu0 0.0
        %3293 = vmatpush1.msra.mxu0 %v3247
        %3294 = vmatprep.subr.mxu0 0.0
        %3295 = vmatpush1.msra.mxu0 0.0
        %3296 = vmatprep.subr.mxu0 0.0
        %3297 = vmatpush1.msra.mxu0 0.0
        %3298 = vmatprep.subr.mxu0 0.0
        %3299 = vmatpush1.msra.mxu0 0.0
        %3300 = vmatprep.subr.mxu0 0.0
        %3301 = vmatpush1.msra.mxu0 0.0
        %3302 = vmatprep.subr.mxu0 0.0
        %3303 = vmatpush1.msra.mxu0 0.0
        %3304 = vmatprep.subr.mxu0 0.0
        %3305 = vmatpush1.msra.mxu0 0.0
        %3306 = vmatprep.subr.mxu0 0.0
        %3307 = vmatpush1.msra.mxu0 0.0
        %3308 = vmatprep.subr.mxu0 0.0
        %3309 = vmatpush1.msra.mxu0 0.0
        %3310 = vmatprep.subr.mxu0 0.0
        %3311 = vmatpush1.msra.mxu0 0.0
        %3312 = vmatprep.subr.mxu0 0.0
        %3313 = vmatpush1.msra.mxu0 0.0
        %3314 = vmatprep.subr.mxu0 0.0
        %3315 = vmatpush1.msra.mxu0 0.0
        %3316 = vmatprep.mubr.f32.mxu0 %v3250
        %3317 = vmatmul.mubr.f32.gmra.mrb[0].mxu0 %v2998
        %v3318 = vpop.f32.mrb[0].mxu0
        %v3319 = vadd.f32 0.0, %v3318
        %v3320 = vpop.f32.mrb[0].mxu0
        %3321 = vdwg.mxu0
        %v3322 = vadd.f32 %v3224, %v3319
        %v3323 = vld [vmem:[#allocation6] sm:$0xff]
        %v3324 = vld [vmem:[#allocation6 + $0x8] sm:$0xff]
        %v3325 = vld [vmem:[#allocation6 + $0x10] sm:$0xff]
        %v3326 = vld [vmem:[#allocation6 + $0x18] sm:$0xff]
        %v3327 = vld [vmem:[#allocation6 + $0x20] sm:$0xff]
        %v3328 = vld [vmem:[#allocation6 + $0x28] sm:$0xff]
        %v3329 = vld [vmem:[#allocation6 + $0x30] sm:$0xff]
        %vm3330 = vcmask 457728
        %v3332 = vsel %vm3330, %v3052, 0
        %3334 = vmatprep.subr.mxu0 0.0
        %3335 = vmatpush1.msra.mxu0 %v3323
        %3336 = vmatprep.subr.mxu0 0.0
        %3337 = vmatpush1.msra.mxu0 %v3324
        %3338 = vmatprep.subr.mxu0 0.0
        %3339 = vmatpush1.msra.mxu0 %v3325
        %3340 = vmatprep.subr.mxu0 0.0
        %3341 = vmatpush1.msra.mxu0 %v3326
        %3342 = vmatprep.subr.mxu0 0.0
        %3343 = vmatpush1.msra.mxu0 %v3327
        %3344 = vmatprep.subr.mxu0 0.0
        %3345 = vmatpush1.msra.mxu0 %v3328
        %3346 = vmatprep.subr.mxu0 0.0
        %3347 = vmatpush1.msra.mxu0 %v3329
        %3348 = vmatprep.subr.mxu0 0.0
        %3349 = vmatpush1.msra.mxu0 0.0
        %3350 = vmatprep.subr.mxu0 0.0
        %3351 = vmatpush1.msra.mxu0 0.0
        %3352 = vmatprep.subr.mxu0 0.0
        %3353 = vmatpush1.msra.mxu0 0.0
        %3354 = vmatprep.subr.mxu0 0.0
        %3355 = vmatpush1.msra.mxu0 0.0
        %3356 = vmatprep.subr.mxu0 0.0
        %3357 = vmatpush1.msra.mxu0 0.0
        %3358 = vmatprep.subr.mxu0 0.0
        %3359 = vmatpush1.msra.mxu0 0.0
        %3360 = vmatprep.subr.mxu0 0.0
        %3361 = vmatpush1.msra.mxu0 0.0
        %3362 = vmatprep.subr.mxu0 0.0
        %3363 = vmatpush1.msra.mxu0 0.0
        %3364 = vmatprep.subr.mxu0 0.0
        %3365 = vmatpush1.msra.mxu0 0.0
        %3366 = vmatprep.subr.mxu0 0.0
        %3367 = vmatpush1.msra.mxu0 0.0
        %3368 = vmatprep.subr.mxu0 0.0
        %3369 = vmatpush1.msra.mxu0 0.0
        %3370 = vmatprep.subr.mxu0 0.0
        %3371 = vmatpush1.msra.mxu0 0.0
        %3372 = vmatprep.subr.mxu0 0.0
        %3373 = vmatpush1.msra.mxu0 0.0
        %3374 = vmatprep.subr.mxu0 0.0
        %3375 = vmatpush1.msra.mxu0 0.0
        %3376 = vmatprep.subr.mxu0 0.0
        %3377 = vmatpush1.msra.mxu0 0.0
        %3378 = vmatprep.subr.mxu0 0.0
        %3379 = vmatpush1.msra.mxu0 0.0
        %3380 = vmatprep.subr.mxu0 0.0
        %3381 = vmatpush1.msra.mxu0 0.0
        %3382 = vmatprep.subr.mxu0 0.0
        %3383 = vmatpush1.msra.mxu0 0.0
        %3384 = vmatprep.subr.mxu0 0.0
        %3385 = vmatpush1.msra.mxu0 0.0
        %3386 = vmatprep.subr.mxu0 0.0
        %3387 = vmatpush1.msra.mxu0 0.0
        %3388 = vmatprep.subr.mxu0 0.0
        %3389 = vmatpush1.msra.mxu0 0.0
        %3390 = vmatprep.subr.mxu0 0.0
        %3391 = vmatpush1.msra.mxu0 0.0
        %3392 = vmatprep.subr.mxu0 0.0
        %3393 = vmatpush1.msra.mxu0 0.0
        %3394 = vmatprep.subr.mxu0 0.0
        %3395 = vmatpush1.msra.mxu0 0.0
        %3396 = vmatprep.subr.mxu0 0.0
        %3397 = vmatpush1.msra.mxu0 0.0
        %3398 = vmatprep.mubr.f32.mxu0 0.0
        %3399 = vmatmul.mubr.f32.gmra.mrb[0].mxu0 %v3332
        %v3400 = vpop.f32.mrb[0].mxu0
        %v3401 = vadd.f32 0.0, %v3400
        %v3402 = vpop.f32.mrb[0].mxu0
        %3403 = vdwg.mxu0
        %v3404 = vadd.f32 %v3322, %v3401
        %vm3405 = vcmask 1046528
        %v3406 = vsel %vm3405, %v3404, 0.0
        %v3407 = vrot.slane %v3406, 4
        %v3408 = vadd.f32 %v3406, %v3407
        %v3409 = vrot.slane %v3408, 2
        %v3410 = vadd.f32 %v3408, %v3409
        %v3411 = vrot.slane %v3410, 1
        %v3412 = vadd.f32 %v3410, %v3411
        %v3413 = vld [vmem:[%s16] sm:$0x1]
        %v3414 = vadd.f32 %v3412, %v3413
        %v3415 = vlaneseq
        %v3416 = vshrl.u32 %v3415, 7
        %v3417 = vsub.s32 0, %v3416
        %v3418 = vrot.slane %v3414, %v3417
        %3419 = vst [vmem:[%s561] sm:$0xff] %v3418
        %p3420 = scmp.lt.s32.totalorder %s29, 1
        %s3421 = scalar_select %p3420, %s29, 1
        %s3422 = smul.addr %s3421, 8
        %s3423 = scalar_lea.vmem %s17, %s3422
        // Predicated region
        $region93: #{inception_forward.1} parent=87 // pred_check
          %p3424 = pneg %p409
        $region94: #{inception_forward.1} parent=87 // pred_check_branch
          %3426 = sbr.rel (%p3424) target = $region96
        $region95: #{inception_forward.1} parent=87 // pred_region
          _
        $region96: #{inception_forward.1} parent=87 // pred_fallthru
          _
      $region88: #{inception_forward.1} parent=5 // pred_fallthru
        _
      %p3427 = scmp.le.s32.totalorder 2, %s24
      // Predicated region
      $region97: #{inception_forward.1} parent=5 // pred_check
        %p3428 = pneg %p3427
      $region98: #{inception_forward.1} parent=5 // pred_check_branch
        %3430 = sbr.rel (%p3428) target = $region100
      $region99: #{inception_forward.1} parent=5 // pred_region
        %s3431 = ssub.s32 %s24, 2
        // Predicated region
        $region101: #{inception_forward.1} parent=99 // pred_check
          %p3432 = pneg %p415
        $region102: #{inception_forward.1} parent=99 // pred_check_branch
          %3434 = sbr.rel (%p3432) target = $region104
        $region103: #{inception_forward.1} parent=99 // pred_region
          %p3435 = scmp.lt.s32.totalorder %s30, 1
          %s3436 = scalar_select %p3435, %s30, 1
          %s3437 = smul.addr %s3436, 8
          %s3438 = scalar_lea.vmem %s17, %s3437
        $region104: #{inception_forward.1} parent=99 // pred_fallthru
          _
      $region100: #{inception_forward.1} parent=5 // pred_fallthru
        _
    $region6: #{inception_forward.1} parent=1 // loop_footer
      %s28 = sadd.s32 1, %s24
    $region7: #{inception_forward.1} parent=1 // loop_footer_branch
      %23 = sbr.rel target = $region3
    $region8: #{inception_forward.1} parent=1 // loop_exit
      _
    %3439 = vsyncpa [#allocation7], 1
    %s3440 = scalar_lea.sflag [#allocation7], 1
    %3441 = vsyncpa %s3440, 1

</llo_original>
